<compile_context>
chip_gen: v7x
topology: tpu7x:2x2x1
jax: 0.10.0
libtpu: 0.0.40
codegen_flags: <defaults>
</compile_context>

<pallas_src>
import math
import numpy as np
import jax
import jax.numpy as jnp
from jax.experimental import pallas as pl
from jax.experimental.pallas import tpu as pltpu

EPS = 1e-5            # torch.nn.LayerNorm default eps
MASK_VALUE = -1e30    # finite "minus infinity" for the additive attention mask


# ----------------------------------------------------------------------------
# Shared math helpers (used both inside the kernel and by the f32 reference)
# ----------------------------------------------------------------------------
def _layernorm(x, g, b):
    mu = jnp.mean(x, axis=-1, keepdims=True)
    var = jnp.mean((x - mu) ** 2, axis=-1, keepdims=True)
    return (x - mu) * jax.lax.rsqrt(var + EPS) * g + b


def _gelu(h, exact):
    if exact:
        # exact erf-based GELU (torch.nn.GELU default)
        return 0.5 * h * (1.0 + jax.lax.erf(h * (1.0 / math.sqrt(2.0))))
    # TODO(synk): tanh-approx GELU fallback, used only when Mosaic has no erf lowering.
    c = math.sqrt(2.0 / math.pi)
    return 0.5 * h * (1.0 + jnp.tanh(c * (h + 0.044715 * h * h * h)))


# ----------------------------------------------------------------------------
# Fused GPT kernel (both branches via grid=(2,), all layers unrolled inside)
# ----------------------------------------------------------------------------
def make_gpt_kernel(n_head, n_layer, exact_gelu):
    def kernel(x_ref, pos_ref, bias_ref,
               ln1g_ref, ln1b_ref, wq_ref, bq_ref, wk_ref, bk_ref, wv_ref, bv_ref,
               wp_ref, bp_ref, ln2g_ref, ln2b_ref, w1_ref, b1_ref, w2_ref, b2_ref,
               lnfg_ref, lnfb_ref, o_ref):
        x = x_ref[...] + pos_ref[...]        # (N, C) f32 ; embd dropout = identity
        bias = bias_ref[...]                 # (N, N) block-diag banded-causal mask
        N, C = x.shape
        hd = C // n_head
        scale = 1.0 / math.sqrt(hd)

        for l in range(n_layer):             # static unroll over layers
            # ---- attention branch: x = x + proj(softmax(qk^T*scale + mask) v) ----
            xn = _layernorm(x, ln1g_ref[l], ln1b_ref[l])
            xnb = xn.astype(jnp.bfloat16)
            q = jnp.dot(xnb, wq_ref[l], preferred_element_type=jnp.float32) + bq_ref[l]
            k = jnp.dot(xnb, wk_ref[l], preferred_element_type=jnp.float32) + bk_ref[l]
            v = jnp.dot(xnb, wv_ref[l], preferred_element_type=jnp.float32) + bv_ref[l]
            kT = k.T                                             # (C, N) f32, once/layer

            y = None
            for h in range(n_head):                              # static unroll over heads
                hs, he = h * hd, (h + 1) * hd
                qh = q[:, hs:he].astype(jnp.bfloat16)            # (N, hd)
                khT = kT[hs:he, :].astype(jnp.bfloat16)          # (hd, N)
                vh = v[:, hs:he].astype(jnp.bfloat16)            # (N, hd)
                att = jnp.dot(qh, khT,
                              preferred_element_type=jnp.float32) * scale + bias
                att = att - jnp.max(att, axis=-1, keepdims=True)
                p = jnp.exp(att)
                p = p * pl.reciprocal(jnp.sum(p, axis=-1, keepdims=True), approx=True)
                oh = jnp.dot(p.astype(jnp.bfloat16), vh,
                             preferred_element_type=jnp.float32)  # (N, hd)
                ph = jnp.dot(oh.astype(jnp.bfloat16), wp_ref[l * n_head + h],
                             preferred_element_type=jnp.float32)  # (N, C)
                y = ph if y is None else y + ph
            x = x + y + bp_ref[l]            # attn/resid dropout = identity

            # ---- MLP branch: x = x + W2 gelu(W1 ln2(x) + b1) + b2 ----
            xn2 = _layernorm(x, ln2g_ref[l], ln2b_ref[l])
            h1 = jnp.dot(xn2.astype(jnp.bfloat16), w1_ref[l],
                         preferred_element_type=jnp.float32) + b1_ref[l]
            h1 = _gelu(h1, exact_gelu)
            h2 = jnp.dot(h1.astype(jnp.bfloat16), w2_ref[l],
                         preferred_element_type=jnp.float32) + b2_ref[l]
            x = x + h2

        o_ref[...] = _layernorm(x, lnfg_ref[0], lnfb_ref[0])     # ln_f

    return kernel


# ----------------------------------------------------------------------------
# Host-side preparation
# ----------------------------------------------------------------------------
def _blockdiag_band_bias(B, T, band_width):
    """(B*T, B*T) additive mask: 0 where attention allowed (same batch element,
    causal, within the band), MASK_VALUE elsewhere (incl. cross-batch)."""
    i = np.arange(T)
    allowed = (i[None, :] <= i[:, None]) & (i[None, :] >= i[:, None] - band_width)
    tt = np.where(allowed, 0.0, MASK_VALUE).astype(np.float32)
    full = np.full((B * T, B * T), MASK_VALUE, np.float32)
    for b in range(B):
        s = slice(b * T, (b + 1) * T)
        full[s, s] = tt
    return jnp.asarray(full)


def _shared_spec(shape):
    nd = len(shape)

    def imap(br):
        return (0,) * nd

    return pl.BlockSpec(tuple(shape), imap)


def _branch_spec(shape):
    nd = len(shape) - 1

    def imap(br):
        return (br,) + (0,) * nd

    return pl.BlockSpec((None,) + tuple(shape[1:]), imap)


def _prepare_kernel_inputs(x, pos_table, p_phase, p_tool, n_head, band_width):
    B, T, C = x.shape
    N = B * T
    L = p_phase['wq'].shape[0]
    hd = C // n_head

    x2 = x.reshape(N, C)
    pos2 = jnp.tile(pos_table[:T], (B, 1))                    # (N, C)
    bias = jnp.stack([_blockdiag_band_bias(B, T, band_width[0]),
                      _blockdiag_band_bias(B, T, band_width[1])], axis=0)

    def stack2(name, dtype=None, transform=None):
        a, b = p_phase[name], p_tool[name]
        if transform is not None:
            a, b = transform(a), transform(b)
        s = jnp.stack([a, b], axis=0)                         # leading branch dim = 2
        return s.astype(dtype) if dtype is not None else s

    # per-head row-split of the output projection: (L, C, C) -> (L*H, hd, C)
    split_heads = lambda w: w.reshape(L * n_head, hd, C)

    stacked = [
        stack2('ln1_g'), stack2('ln1_b'),
        stack2('wq', jnp.bfloat16), stack2('bq'),
        stack2('wk', jnp.bfloat16), stack2('bk'),
        stack2('wv', jnp.bfloat16), stack2('bv'),
        stack2('wp', jnp.bfloat16, split_heads), stack2('bp'),
        stack2('ln2_g'), stack2('ln2_b'),
        stack2('w1', jnp.bfloat16), stack2('b1'),
        stack2('w2', jnp.bfloat16), stack2('b2'),
    ]
    return x2, pos2, bias, stacked


def gpt_forward(x, pos_table, p_phase, p_tool, lnf_g, lnf_b,
                n_head, band_width, exact_gelu=True):
    B, T, C = x.shape
    N = B * T
    L = p_phase['wq'].shape[0]
    x2, pos2, bias, stacked = _prepare_kernel_inputs(
        x, pos_table, p_phase, p_tool, n_head, band_width)

    kernel = make_gpt_kernel(n_head, L, exact_gelu)

    in_specs = [_shared_spec((N, C)),              # x (same for both branches)
                _shared_spec((N, C)),              # pos (pre-tiled over batch)
                _branch_spec(bias.shape)]          # per-branch mask
    in_specs += [_branch_spec(a.shape) for a in stacked]
    in_specs += [_shared_spec(tuple(lnf_g.shape)), _shared_spec(tuple(lnf_b.shape))]

    out = pl.pallas_call(
        kernel,
        out_shape=jax.ShapeDtypeStruct((2, N, C), jnp.float32),
        grid=(2,),                                  # branch 0 = phase, 1 = tool
        in_specs=in_specs,
        out_specs=pl.BlockSpec((None, N, C), lambda br: (br, 0, 0)),
        compiler_params=pltpu.CompilerParams(dimension_semantics=("parallel",)),
    )(x2, pos2, bias, *stacked, lnf_g, lnf_b)

    return out[0].reshape(B, T, C), out[1].reshape(B, T, C)


# ----------------------------------------------------------------------------
# Narrow capability probe: does Mosaic lower lax.erf?
# ----------------------------------------------------------------------------
def _erf_lowers_on_tpu():
    def probe(x_ref, o_ref):
        o_ref[...] = jax.lax.erf(x_ref[...])

    try:
        xp = jnp.linspace(-2.0, 2.0, 8 * 128, dtype=jnp.float32).reshape(8, 128)
        out = pl.pallas_call(
            probe, out_shape=jax.ShapeDtypeStruct((8, 128), jnp.float32))(xp)
        jax.block_until_ready(out)
        return True
    except Exception:
        return False


# ----------------------------------------------------------------------------
# Deterministic parameter init (mirrors module __init__ / _init_weights shapes)
# ----------------------------------------------------------------------------
def sinusoidal_table(n_pos, dim):
    position_enc = np.array(
        [[pos / np.power(10000, 2 * (j // 2) / dim) for j in range(dim)]
         for pos in range(n_pos)])
    out = np.zeros((n_pos, dim), dtype=np.float32)
    out[:, 0::2] = np.sin(position_enc[:, 0::2])
    out[:, 1::2] = np.cos(position_enc[:, 1::2])
    return jnp.asarray(out)


def init_branch_params(key, C, L):
    ks = jax.random.split(key, 6 * L)

    def lin(k, din, dout):
        # nn.Linear weights stored pre-transposed as (in, out): y = x @ W + b
        return (0.02 * jax.random.normal(k, (din, dout), jnp.float32),
                jnp.zeros((dout,), jnp.float32))

    names = (('wq', 'bq', C, C), ('wk', 'bk', C, C), ('wv', 'bv', C, C),
             ('wp', 'bp', C, C), ('w1', 'b1', C, 2 * C), ('w2', 'b2', 2 * C, C))
    cols = {n: [] for nb in names for n in nb[:2]}
    for l in range(L):
        for j, (wn, bn, din, dout) in enumerate(names):
            w, b = lin(ks[6 * l + j], din, dout)
            cols[wn].append(w)
            cols[bn].append(b)
    p = {n: jnp.stack(v, axis=0) for n, v in cols.items()}       # stacked over layers
    p['ln1_g'] = jnp.ones((L, C), jnp.float32)
    p['ln1_b'] = jnp.zeros((L, C), jnp.float32)
    p['ln2_g'] = jnp.ones((L, C), jnp.float32)
    p['ln2_b'] = jnp.zeros((L, C), jnp.float32)
    return p


# ----------------------------------------------------------------------------
# Pure-JAX f32 reference (mirrors the PyTorch forward) for a sanity check
# ----------------------------------------------------------------------------
def reference_forward(x, pos_table, p_phase, p_tool, lnf_g, lnf_b,
                      n_head, band_width, exact_gelu):
    B, T, C = x.shape
    hd = C // n_head
    x0 = x + pos_table[:T][None]

    def branch(p, bw):
        i = np.arange(T)
        allowed = jnp.asarray((i[None, :] <= i[:, None]) & (i[None, :] >= i[:, None] - bw))
        L = p['wq'].shape[0]
        xc = x0
        for l in range(L):
            xn = _layernorm(xc, p['ln1_g'][l], p['ln1_b'][l])
            q = xn @ p['wq'][l] + p['bq'][l]
            k = xn @ p['wk'][l] + p['bk'][l]
            v = xn @ p['wv'][l] + p['bv'][l]
            q = q.reshape(B, T, n_head, hd).transpose(0, 2, 1, 3)
            k = k.reshape(B, T, n_head, hd).transpose(0, 2, 1, 3)
            v = v.reshape(B, T, n_head, hd).transpose(0, 2, 1, 3)
            att = (q @ jnp.swapaxes(k, -1, -2)) * (1.0 / math.sqrt(hd))
            att = jnp.where(allowed[None, None], att, -jnp.inf)
            att = jax.nn.softmax(att, axis=-1)
            y = (att @ v).transpose(0, 2, 1, 3).reshape(B, T, C)
            xc = xc + y @ p['wp'][l] + p['bp'][l]
            xn2 = _layernorm(xc, p['ln2_g'][l], p['ln2_b'][l])
            h1 = _gelu(xn2 @ p['w1'][l] + p['b1'][l], exact_gelu)
            xc = xc + h1 @ p['w2'][l] + p['b2'][l]
        return _layernorm(xc, lnf_g[0], lnf_b[0])

    return branch(p_phase, band_width[0]), branch(p_tool, band_width[1])


# ----------------------------------------------------------------------------
if __name__ == "__main__":
    B, T, C, H, L = 2, 16, 32, 4, 2            # batch, seq, n_embd, n_head, n_layer
    band_width = (999, 9)                      # module defaults: [1000-1, 10-1]

    key = jax.random.PRNGKey(0)
    kx, kp, kt = jax.random.split(key, 3)
    x = jax.random.normal(kx, (B, T, C), jnp.float32)

    p_phase = init_branch_params(kp, C, L)
    p_tool = init_branch_params(kt, C, L)
    lnf_g = jnp.ones((1, C), jnp.float32)
    lnf_b = jnp.zeros((1, C), jnp.float32)
    pos_table = sinusoidal_table(128, C)

    exact_gelu = _erf_lowers_on_tpu()          # narrow probe; no blanket try/except

    x_phase, x_tool = gpt_forward(x, pos_table, p_phase, p_tool, lnf_g, lnf_b,
                                  n_head=H, band_width=band_width,
                                  exact_gelu=exact_gelu)
    jax.block_until_ready(x_phase)
    jax.block_until_ready(x_tool)

    r_phase, r_tool = reference_forward(x, pos_table, p_phase, p_tool, lnf_g, lnf_b,
                                        n_head=H, band_width=band_width,
                                        exact_gelu=exact_gelu)
    err = max(float(jnp.max(jnp.abs(x_phase - r_phase))),
              float(jnp.max(jnp.abs(x_tool - r_tool))))

    assert x_phase.shape == (B, T, C) and x_tool.shape == (B, T, C)
    assert bool(jnp.all(jnp.isfinite(x_phase))) and bool(jnp.all(jnp.isfinite(x_tool)))
    assert err < 5e-2, f"max abs diff vs f32 reference = {err}"
    print("KERNEL_OK")
</pallas_src>

<mosaic_0001>
module attributes {stable_mosaic.version = 11 : i64} {
  func.func @probe(%arg0: memref<8x128xf32, #tpu.memory_space<vmem>>, %arg1: memref<8x128xf32, #tpu.memory_space<vmem>>) attributes {dimension_semantics = [], scalar_prefetch = 0 : i64, scratch_operands = 0 : i64, tpu.core_type = #tpu.core_type<tc>} {
    %c0 = arith.constant 0 : index
    %c0_0 = arith.constant 0 : index
    %0 = vector.load %arg0[%c0, %c0_0] : memref<8x128xf32, #tpu.memory_space<vmem>>, vector<8x128xf32>
    %1 = math.erf %0 : vector<8x128xf32>
    %c0_1 = arith.constant 0 : index
    %c0_2 = arith.constant 0 : index
    %2 = vector.load %arg1[%c0_1, %c0_2] : memref<8x128xf32, #tpu.memory_space<vmem>>, vector<8x128xf32>
    tpu.vector_store %arg1[%c0_1, %c0_2], %1 {strides = array<i32>} : memref<8x128xf32, #tpu.memory_space<vmem>>, vector<8x128xf32>,
    return
  }
}

module attributes {stable_mosaic.version = 11 : i64} {
  func.func @kernel(%arg0: i32, %arg1: memref<32x32xf32, #tpu.memory_space<vmem>>, %arg2: memref<32x32xf32, #tpu.memory_space<vmem>>, %arg3: memref<1x32x32xf32, #tpu.memory_space<vmem>>, %arg4: memref<1x2x32xf32, #tpu.memory_space<vmem>>, %arg5: memref<1x2x32xf32, #tpu.memory_space<vmem>>, %arg6: memref<1x2x32x32xbf16, #tpu.memory_space<vmem>>, %arg7: memref<1x2x32xf32, #tpu.memory_space<vmem>>, %arg8: memref<1x2x32x32xbf16, #tpu.memory_space<vmem>>, %arg9: memref<1x2x32xf32, #tpu.memory_space<vmem>>, %arg10: memref<1x2x32x32xbf16, #tpu.memory_space<vmem>>, %arg11: memref<1x2x32xf32, #tpu.memory_space<vmem>>, %arg12: memref<1x8x8x32xbf16, #tpu.memory_space<vmem>>, %arg13: memref<1x2x32xf32, #tpu.memory_space<vmem>>, %arg14: memref<1x2x32xf32, #tpu.memory_space<vmem>>, %arg15: memref<1x2x32xf32, #tpu.memory_space<vmem>>, %arg16: memref<1x2x32x64xbf16, #tpu.memory_space<vmem>>, %arg17: memref<1x2x64xf32, #tpu.memory_space<vmem>>, %arg18: memref<1x2x64x32xbf16, #tpu.memory_space<vmem>>, %arg19: memref<1x2x32xf32, #tpu.memory_space<vmem>>, %arg20: memref<1x32xf32, #tpu.memory_space<vmem>>, %arg21: memref<1x32xf32, #tpu.memory_space<vmem>>, %arg22: memref<1x32x32xf32, #tpu.memory_space<vmem>>) attributes {dimension_semantics = [#tpu.dimension_semantics<parallel>], iteration_bounds = array<i64: 2>, scalar_prefetch = 0 : i64, scratch_operands = 0 : i64, tpu.core_type = #tpu.core_type<tc>, window_params = [{pipeline_mode = #tpu.pipeline_mode<synchronous>, transform_indices = @transform_0, window_bounds = array<i64: 32, 32>}, {pipeline_mode = #tpu.pipeline_mode<synchronous>, transform_indices = @transform_1, window_bounds = array<i64: 32, 32>}, {transform_indices = @transform_2, window_bounds = array<i64: 1, 32, 32>}, {transform_indices = @transform_3, window_bounds = array<i64: 1, 2, 32>}, {transform_indices = @transform_4, window_bounds = array<i64: 1, 2, 32>}, {transform_indices = @transform_5, window_bounds = array<i64: 1, 2, 32, 32>}, {transform_indices = @transform_6, window_bounds = array<i64: 1, 2, 32>}, {transform_indices = @transform_7, window_bounds = array<i64: 1, 2, 32, 32>}, {transform_indices = @transform_8, window_bounds = array<i64: 1, 2, 32>}, {transform_indices = @transform_9, window_bounds = array<i64: 1, 2, 32, 32>}, {transform_indices = @transform_10, window_bounds = array<i64: 1, 2, 32>}, {transform_indices = @transform_11, window_bounds = array<i64: 1, 8, 8, 32>}, {transform_indices = @transform_12, window_bounds = array<i64: 1, 2, 32>}, {transform_indices = @transform_13, window_bounds = array<i64: 1, 2, 32>}, {transform_indices = @transform_14, window_bounds = array<i64: 1, 2, 32>}, {transform_indices = @transform_15, window_bounds = array<i64: 1, 2, 32, 64>}, {transform_indices = @transform_16, window_bounds = array<i64: 1, 2, 64>}, {transform_indices = @transform_17, window_bounds = array<i64: 1, 2, 64, 32>}, {transform_indices = @transform_18, window_bounds = array<i64: 1, 2, 32>}, {pipeline_mode = #tpu.pipeline_mode<synchronous>, transform_indices = @transform_19, window_bounds = array<i64: 1, 32>}, {pipeline_mode = #tpu.pipeline_mode<synchronous>, transform_indices = @transform_20, window_bounds = array<i64: 1, 32>}, {transform_indices = @transform_21, window_bounds = array<i64: 1, 32, 32>}]} {
    %c0 = arith.constant 0 : index
    %c0_0 = arith.constant 0 : index
    %0 = vector.load %arg1[%c0, %c0_0] : memref<32x32xf32, #tpu.memory_space<vmem>>, vector<32x32xf32>
    %c0_1 = arith.constant 0 : index
    %c0_2 = arith.constant 0 : index
    %1 = vector.load %arg2[%c0_1, %c0_2] : memref<32x32xf32, #tpu.memory_space<vmem>>, vector<32x32xf32>
    %2 = arith.addf %0, %1 : vector<32x32xf32>
    %c0_3 = arith.constant 0 : index
    %c0_4 = arith.constant 0 : index
    %c0_5 = arith.constant 0 : index
    %3 = vector.load %arg3[%c0_3, %c0_4, %c0_5] : memref<1x32x32xf32, #tpu.memory_space<vmem>>, vector<1x32x32xf32>
    %4 = vector.shape_cast %3 : vector<1x32x32xf32> to vector<32x32xf32>
    %c0_6 = arith.constant 0 : index
    %c0_7 = arith.constant 0 : index
    %c0_8 = arith.constant 0 : index
    %5 = vector.load %arg4[%c0_6, %c0_7, %c0_8] : memref<1x2x32xf32, #tpu.memory_space<vmem>>, vector<1x1x32xf32>
    %6 = vector.shape_cast %5 : vector<1x1x32xf32> to vector<32xf32>
    %c0_9 = arith.constant 0 : index
    %c0_10 = arith.constant 0 : index
    %c0_11 = arith.constant 0 : index
    %7 = vector.load %arg5[%c0_9, %c0_10, %c0_11] : memref<1x2x32xf32, #tpu.memory_space<vmem>>, vector<1x1x32xf32>
    %8 = vector.shape_cast %7 : vector<1x1x32xf32> to vector<32xf32>
    %cst = arith.constant dense<0.000000e+00> : vector<32xf32>
    %9 = vector.multi_reduction <add>, %2, %cst [1] : vector<32x32xf32> to vector<32xf32>
    %10 = vector.shape_cast %9 : vector<32xf32> to vector<32x1xf32>
    %cst_12 = arith.constant 3.200000e+01 : f32
    %11 = vector.broadcast %cst_12 : f32 to vector<32x1xf32>
    %12 = arith.divf %10, %11 : vector<32x1xf32>
    %13 = vector.broadcast %12 : vector<32x1xf32> to vector<32x32xf32>
    %14 = arith.subf %2, %13 : vector<32x32xf32>
    %15 = arith.mulf %14, %14 : vector<32x32xf32>
    %cst_13 = arith.constant dense<0.000000e+00> : vector<32xf32>
    %16 = vector.multi_reduction <add>, %15, %cst_13 [1] : vector<32x32xf32> to vector<32xf32>
    %17 = vector.shape_cast %16 : vector<32xf32> to vector<32x1xf32>
    %cst_14 = arith.constant 3.200000e+01 : f32
    %18 = vector.broadcast %cst_14 : f32 to vector<32x1xf32>
    %19 = arith.divf %17, %18 : vector<32x1xf32>
    %20 = vector.broadcast %12 : vector<32x1xf32> to vector<32x32xf32>
    %21 = arith.subf %2, %20 : vector<32x32xf32>
    %cst_15 = arith.constant 9.99999974E-6 : f32
    %22 = vector.broadcast %cst_15 : f32 to vector<32x1xf32>
    %23 = arith.addf %19, %22 : vector<32x1xf32>
    %24 = math.rsqrt %23 : vector<32x1xf32>
    %25 = vector.broadcast %24 : vector<32x1xf32> to vector<32x32xf32>
    %26 = arith.mulf %21, %25 : vector<32x32xf32>
    %27 = vector.shape_cast %6 : vector<32xf32> to vector<1x32xf32>
    %28 = vector.broadcast %27 : vector<1x32xf32> to vector<32x32xf32>
    %29 = arith.mulf %26, %28 : vector<32x32xf32>
    %30 = vector.shape_cast %8 : vector<32xf32> to vector<1x32xf32>
    %31 = vector.broadcast %30 : vector<1x32xf32> to vector<32x32xf32>
    %32 = arith.addf %29, %31 : vector<32x32xf32>
    %33 = arith.truncf %32 : vector<32x32xf32> to vector<32x32xbf16>
    %c0_16 = arith.constant 0 : index
    %c0_17 = arith.constant 0 : index
    %c0_18 = arith.constant 0 : index
    %c0_19 = arith.constant 0 : index
    %34 = vector.load %arg6[%c0_16, %c0_17, %c0_18, %c0_19] : memref<1x2x32x32xbf16, #tpu.memory_space<vmem>>, vector<1x1x32x32xbf16>
    %35 = vector.shape_cast %34 : vector<1x1x32x32xbf16> to vector<32x32xbf16>
    %cst_20 = arith.constant dense<0.000000e+00> : vector<32x32xf32>
    %36 = tpu.matmul %33, %35, %cst_20 {dimension_numbers = #tpu.dot_dimension_numbers<[1], [0], [0], [1], [0, 0, 1, 1], [], []>} : vector<32x32xbf16>, vector<32x32xbf16>, vector<32x32xf32> -> vector<32x32xf32>
    %c0_21 = arith.constant 0 : index
    %c0_22 = arith.constant 0 : index
    %c0_23 = arith.constant 0 : index
    %37 = vector.load %arg7[%c0_21, %c0_22, %c0_23] : memref<1x2x32xf32, #tpu.memory_space<vmem>>, vector<1x1x32xf32>
    %38 = vector.shape_cast %37 : vector<1x1x32xf32> to vector<32xf32>
    %39 = vector.shape_cast %38 : vector<32xf32> to vector<1x32xf32>
    %40 = vector.broadcast %39 : vector<1x32xf32> to vector<32x32xf32>
    %41 = arith.addf %36, %40 : vector<32x32xf32>
    %c0_24 = arith.constant 0 : index
    %c0_25 = arith.constant 0 : index
    %c0_26 = arith.constant 0 : index
    %c0_27 = arith.constant 0 : index
    %42 = vector.load %arg8[%c0_24, %c0_25, %c0_26, %c0_27] : memref<1x2x32x32xbf16, #tpu.memory_space<vmem>>, vector<1x1x32x32xbf16>
    %43 = vector.shape_cast %42 : vector<1x1x32x32xbf16> to vector<32x32xbf16>
    %cst_28 = arith.constant dense<0.000000e+00> : vector<32x32xf32>
    %44 = tpu.matmul %33, %43, %cst_28 {dimension_numbers = #tpu.dot_dimension_numbers<[1], [0], [0], [1], [0, 0, 1, 1], [], []>} : vector<32x32xbf16>, vector<32x32xbf16>, vector<32x32xf32> -> vector<32x32xf32>
    %c0_29 = arith.constant 0 : index
    %c0_30 = arith.constant 0 : index
    %c0_31 = arith.constant 0 : index
    %45 = vector.load %arg9[%c0_29, %c0_30, %c0_31] : memref<1x2x32xf32, #tpu.memory_space<vmem>>, vector<1x1x32xf32>
    %46 = vector.shape_cast %45 : vector<1x1x32xf32> to vector<32xf32>
    %47 = vector.shape_cast %46 : vector<32xf32> to vector<1x32xf32>
    %48 = vector.broadcast %47 : vector<1x32xf32> to vector<32x32xf32>
    %49 = arith.addf %44, %48 : vector<32x32xf32>
    %c0_32 = arith.constant 0 : index
    %c0_33 = arith.constant 0 : index
    %c0_34 = arith.constant 0 : index
    %c0_35 = arith.constant 0 : index
    %50 = vector.load %arg10[%c0_32, %c0_33, %c0_34, %c0_35] : memref<1x2x32x32xbf16, #tpu.memory_space<vmem>>, vector<1x1x32x32xbf16>
    %51 = vector.shape_cast %50 : vector<1x1x32x32xbf16> to vector<32x32xbf16>
    %cst_36 = arith.constant dense<0.000000e+00> : vector<32x32xf32>
    %52 = tpu.matmul %33, %51, %cst_36 {dimension_numbers = #tpu.dot_dimension_numbers<[1], [0], [0], [1], [0, 0, 1, 1], [], []>} : vector<32x32xbf16>, vector<32x32xbf16>, vector<32x32xf32> -> vector<32x32xf32>
    %c0_37 = arith.constant 0 : index
    %c0_38 = arith.constant 0 : index
    %c0_39 = arith.constant 0 : index
    %53 = vector.load %arg11[%c0_37, %c0_38, %c0_39] : memref<1x2x32xf32, #tpu.memory_space<vmem>>, vector<1x1x32xf32>
    %54 = vector.shape_cast %53 : vector<1x1x32xf32> to vector<32xf32>
    %55 = vector.shape_cast %54 : vector<32xf32> to vector<1x32xf32>
    %56 = vector.broadcast %55 : vector<1x32xf32> to vector<32x32xf32>
    %57 = arith.addf %52, %56 : vector<32x32xf32>
    %58 = tpu.transpose %49, [1, 0] : vector<32x32xf32> -> vector<32x32xf32>
    %59 = vector.extract_strided_slice %41 {offsets = [0, 0], sizes = [32, 8], strides = [1, 1]} : vector<32x32xf32> to vector<32x8xf32>
    %60 = arith.truncf %59 : vector<32x8xf32> to vector<32x8xbf16>
    %61 = vector.extract_strided_slice %58 {offsets = [0, 0], sizes = [8, 32], strides = [1, 1]} : vector<32x32xf32> to vector<8x32xf32>
    %62 = arith.truncf %61 : vector<8x32xf32> to vector<8x32xbf16>
    %63 = vector.extract_strided_slice %57 {offsets = [0, 0], sizes = [32, 8], strides = [1, 1]} : vector<32x32xf32> to vector<32x8xf32>
    %64 = arith.truncf %63 : vector<32x8xf32> to vector<32x8xbf16>
    %cst_40 = arith.constant dense<0.000000e+00> : vector<32x32xf32>
    %65 = tpu.matmul %60, %62, %cst_40 {dimension_numbers = #tpu.dot_dimension_numbers<[1], [0], [0], [1], [0, 0, 1, 1], [], []>} : vector<32x8xbf16>, vector<8x32xbf16>, vector<32x32xf32> -> vector<32x32xf32>
    %cst_41 = arith.constant 0.353553385 : f32
    %66 = vector.broadcast %cst_41 : f32 to vector<32x32xf32>
    %67 = arith.mulf %65, %66 : vector<32x32xf32>
    %68 = arith.addf %67, %4 : vector<32x32xf32>
    %cst_42 = arith.constant dense<0xFF800000> : vector<32xf32>
    %69 = vector.multi_reduction <maximumf>, %68, %cst_42 [1] : vector<32x32xf32> to vector<32xf32>
    %70 = vector.shape_cast %69 : vector<32xf32> to vector<32x1xf32>
    %71 = vector.broadcast %70 : vector<32x1xf32> to vector<32x32xf32>
    %72 = arith.subf %68, %71 : vector<32x32xf32>
    %73 = math.exp %72 : vector<32x32xf32>
    %cst_43 = arith.constant dense<0.000000e+00> : vector<32xf32>
    %74 = vector.multi_reduction <add>, %73, %cst_43 [1] : vector<32x32xf32> to vector<32xf32>
    %75 = vector.shape_cast %74 : vector<32xf32> to vector<32x1xf32>
    %76 = tpu.reciprocal %75 {approx = true} : vector<32x1xf32> -> vector<32x1xf32>
    %77 = vector.broadcast %76 : vector<32x1xf32> to vector<32x32xf32>
    %78 = arith.mulf %73, %77 : vector<32x32xf32>
    %79 = arith.truncf %78 : vector<32x32xf32> to vector<32x32xbf16>
    %cst_44 = arith.constant dense<0.000000e+00> : vector<32x8xf32>
    %80 = tpu.matmul %79, %64, %cst_44 {dimension_numbers = #tpu.dot_dimension_numbers<[1], [0], [0], [1], [0, 0, 1, 1], [], []>} : vector<32x32xbf16>, vector<32x8xbf16>, vector<32x8xf32> -> vector<32x8xf32>
    %81 = arith.truncf %80 : vector<32x8xf32> to vector<32x8xbf16>
    %c0_45 = arith.constant 0 : index
    %c0_46 = arith.constant 0 : index
    %c0_47 = arith.constant 0 : index
    %c0_48 = arith.constant 0 : index
    %82 = vector.load %arg12[%c0_45, %c0_46, %c0_47, %c0_48] : memref<1x8x8x32xbf16, #tpu.memory_space<vmem>>, vector<1x1x8x32xbf16>
    %83 = vector.shape_cast %82 : vector<1x1x8x32xbf16> to vector<8x32xbf16>
    %cst_49 = arith.constant dense<0.000000e+00> : vector<32x32xf32>
    %84 = tpu.matmul %81, %83, %cst_49 {dimension_numbers = #tpu.dot_dimension_numbers<[1], [0], [0], [1], [0, 0, 1, 1], [], []>} : vector<32x8xbf16>, vector<8x32xbf16>, vector<32x32xf32> -> vector<32x32xf32>
    %85 = vector.extract_strided_slice %41 {offsets = [0, 8], sizes = [32, 8], strides = [1, 1]} : vector<32x32xf32> to vector<32x8xf32>
    %86 = arith.truncf %85 : vector<32x8xf32> to vector<32x8xbf16>
    %87 = vector.extract_strided_slice %58 {offsets = [8, 0], sizes = [8, 32], strides = [1, 1]} : vector<32x32xf32> to vector<8x32xf32>
    %88 = arith.truncf %87 : vector<8x32xf32> to vector<8x32xbf16>
    %89 = vector.extract_strided_slice %57 {offsets = [0, 8], sizes = [32, 8], strides = [1, 1]} : vector<32x32xf32> to vector<32x8xf32>
    %90 = arith.truncf %89 : vector<32x8xf32> to vector<32x8xbf16>
    %cst_50 = arith.constant dense<0.000000e+00> : vector<32x32xf32>
    %91 = tpu.matmul %86, %88, %cst_50 {dimension_numbers = #tpu.dot_dimension_numbers<[1], [0], [0], [1], [0, 0, 1, 1], [], []>} : vector<32x8xbf16>, vector<8x32xbf16>, vector<32x32xf32> -> vector<32x32xf32>
    %cst_51 = arith.constant 0.353553385 : f32
    %92 = vector.broadcast %cst_51 : f32 to vector<32x32xf32>
    %93 = arith.mulf %91, %92 : vector<32x32xf32>
    %94 = arith.addf %93, %4 : vector<32x32xf32>
    %cst_52 = arith.constant dense<0xFF800000> : vector<32xf32>
    %95 = vector.multi_reduction <maximumf>, %94, %cst_52 [1] : vector<32x32xf32> to vector<32xf32>
    %96 = vector.shape_cast %95 : vector<32xf32> to vector<32x1xf32>
    %97 = vector.broadcast %96 : vector<32x1xf32> to vector<32x32xf32>
    %98 = arith.subf %94, %97 : vector<32x32xf32>
    %99 = math.exp %98 : vector<32x32xf32>
    %cst_53 = arith.constant dense<0.000000e+00> : vector<32xf32>
    %100 = vector.multi_reduction <add>, %99, %cst_53 [1] : vector<32x32xf32> to vector<32xf32>
    %101 = vector.shape_cast %100 : vector<32xf32> to vector<32x1xf32>
    %102 = tpu.reciprocal %101 {approx = true} : vector<32x1xf32> -> vector<32x1xf32>
    %103 = vector.broadcast %102 : vector<32x1xf32> to vector<32x32xf32>
    %104 = arith.mulf %99, %103 : vector<32x32xf32>
    %105 = arith.truncf %104 : vector<32x32xf32> to vector<32x32xbf16>
    %cst_54 = arith.constant dense<0.000000e+00> : vector<32x8xf32>
    %106 = tpu.matmul %105, %90, %cst_54 {dimension_numbers = #tpu.dot_dimension_numbers<[1], [0], [0], [1], [0, 0, 1, 1], [], []>} : vector<32x32xbf16>, vector<32x8xbf16>, vector<32x8xf32> -> vector<32x8xf32>
    %107 = arith.truncf %106 : vector<32x8xf32> to vector<32x8xbf16>
    %c0_55 = arith.constant 0 : index
    %c1 = arith.constant 1 : index
    %c0_56 = arith.constant 0 : index
    %c0_57 = arith.constant 0 : index
    %108 = vector.load %arg12[%c0_55, %c1, %c0_56, %c0_57] : memref<1x8x8x32xbf16, #tpu.memory_space<vmem>>, vector<1x1x8x32xbf16>
    %109 = vector.shape_cast %108 : vector<1x1x8x32xbf16> to vector<8x32xbf16>
    %cst_58 = arith.constant dense<0.000000e+00> : vector<32x32xf32>
    %110 = tpu.matmul %107, %109, %cst_58 {dimension_numbers = #tpu.dot_dimension_numbers<[1], [0], [0], [1], [0, 0, 1, 1], [], []>} : vector<32x8xbf16>, vector<8x32xbf16>, vector<32x32xf32> -> vector<32x32xf32>
    %111 = arith.addf %84, %110 : vector<32x32xf32>
    %112 = vector.extract_strided_slice %41 {offsets = [0, 16], sizes = [32, 8], strides = [1, 1]} : vector<32x32xf32> to vector<32x8xf32>
    %113 = arith.truncf %112 : vector<32x8xf32> to vector<32x8xbf16>
    %114 = vector.extract_strided_slice %58 {offsets = [16, 0], sizes = [8, 32], strides = [1, 1]} : vector<32x32xf32> to vector<8x32xf32>
    %115 = arith.truncf %114 : vector<8x32xf32> to vector<8x32xbf16>
    %116 = vector.extract_strided_slice %57 {offsets = [0, 16], sizes = [32, 8], strides = [1, 1]} : vector<32x32xf32> to vector<32x8xf32>
    %117 = arith.truncf %116 : vector<32x8xf32> to vector<32x8xbf16>
    %cst_59 = arith.constant dense<0.000000e+00> : vector<32x32xf32>
    %118 = tpu.matmul %113, %115, %cst_59 {dimension_numbers = #tpu.dot_dimension_numbers<[1], [0], [0], [1], [0, 0, 1, 1], [], []>} : vector<32x8xbf16>, vector<8x32xbf16>, vector<32x32xf32> -> vector<32x32xf32>
    %cst_60 = arith.constant 0.353553385 : f32
    %119 = vector.broadcast %cst_60 : f32 to vector<32x32xf32>
    %120 = arith.mulf %118, %119 : vector<32x32xf32>
    %121 = arith.addf %120, %4 : vector<32x32xf32>
    %cst_61 = arith.constant dense<0xFF800000> : vector<32xf32>
    %122 = vector.multi_reduction <maximumf>, %121, %cst_61 [1] : vector<32x32xf32> to vector<32xf32>
    %123 = vector.shape_cast %122 : vector<32xf32> to vector<32x1xf32>
    %124 = vector.broadcast %123 : vector<32x1xf32> to vector<32x32xf32>
    %125 = arith.subf %121, %124 : vector<32x32xf32>
    %126 = math.exp %125 : vector<32x32xf32>
    %cst_62 = arith.constant dense<0.000000e+00> : vector<32xf32>
    %127 = vector.multi_reduction <add>, %126, %cst_62 [1] : vector<32x32xf32> to vector<32xf32>
    %128 = vector.shape_cast %127 : vector<32xf32> to vector<32x1xf32>
    %129 = tpu.reciprocal %128 {approx = true} : vector<32x1xf32> -> vector<32x1xf32>
    %130 = vector.broadcast %129 : vector<32x1xf32> to vector<32x32xf32>
    %131 = arith.mulf %126, %130 : vector<32x32xf32>
    %132 = arith.truncf %131 : vector<32x32xf32> to vector<32x32xbf16>
    %cst_63 = arith.constant dense<0.000000e+00> : vector<32x8xf32>
    %133 = tpu.matmul %132, %117, %cst_63 {dimension_numbers = #tpu.dot_dimension_numbers<[1], [0], [0], [1], [0, 0, 1, 1], [], []>} : vector<32x32xbf16>, vector<32x8xbf16>, vector<32x8xf32> -> vector<32x8xf32>
    %134 = arith.truncf %133 : vector<32x8xf32> to vector<32x8xbf16>
    %c0_64 = arith.constant 0 : index
    %c2 = arith.constant 2 : index
    %c0_65 = arith.constant 0 : index
    %c0_66 = arith.constant 0 : index
    %135 = vector.load %arg12[%c0_64, %c2, %c0_65, %c0_66] : memref<1x8x8x32xbf16, #tpu.memory_space<vmem>>, vector<1x1x8x32xbf16>
    %136 = vector.shape_cast %135 : vector<1x1x8x32xbf16> to vector<8x32xbf16>
    %cst_67 = arith.constant dense<0.000000e+00> : vector<32x32xf32>
    %137 = tpu.matmul %134, %136, %cst_67 {dimension_numbers = #tpu.dot_dimension_numbers<[1], [0], [0], [1], [0, 0, 1, 1], [], []>} : vector<32x8xbf16>, vector<8x32xbf16>, vector<32x32xf32> -> vector<32x32xf32>
    %138 = arith.addf %111, %137 : vector<32x32xf32>
    %139 = vector.extract_strided_slice %41 {offsets = [0, 24], sizes = [32, 8], strides = [1, 1]} : vector<32x32xf32> to vector<32x8xf32>
    %140 = arith.truncf %139 : vector<32x8xf32> to vector<32x8xbf16>
    %141 = vector.extract_strided_slice %58 {offsets = [24, 0], sizes = [8, 32], strides = [1, 1]} : vector<32x32xf32> to vector<8x32xf32>
    %142 = arith.truncf %141 : vector<8x32xf32> to vector<8x32xbf16>
    %143 = vector.extract_strided_slice %57 {offsets = [0, 24], sizes = [32, 8], strides = [1, 1]} : vector<32x32xf32> to vector<32x8xf32>
    %144 = arith.truncf %143 : vector<32x8xf32> to vector<32x8xbf16>
    %cst_68 = arith.constant dense<0.000000e+00> : vector<32x32xf32>
    %145 = tpu.matmul %140, %142, %cst_68 {dimension_numbers = #tpu.dot_dimension_numbers<[1], [0], [0], [1], [0, 0, 1, 1], [], []>} : vector<32x8xbf16>, vector<8x32xbf16>, vector<32x32xf32> -> vector<32x32xf32>
    %cst_69 = arith.constant 0.353553385 : f32
    %146 = vector.broadcast %cst_69 : f32 to vector<32x32xf32>
    %147 = arith.mulf %145, %146 : vector<32x32xf32>
    %148 = arith.addf %147, %4 : vector<32x32xf32>
    %cst_70 = arith.constant dense<0xFF800000> : vector<32xf32>
    %149 = vector.multi_reduction <maximumf>, %148, %cst_70 [1] : vector<32x32xf32> to vector<32xf32>
    %150 = vector.shape_cast %149 : vector<32xf32> to vector<32x1xf32>
    %151 = vector.broadcast %150 : vector<32x1xf32> to vector<32x32xf32>
    %152 = arith.subf %148, %151 : vector<32x32xf32>
    %153 = math.exp %152 : vector<32x32xf32>
    %cst_71 = arith.constant dense<0.000000e+00> : vector<32xf32>
    %154 = vector.multi_reduction <add>, %153, %cst_71 [1] : vector<32x32xf32> to vector<32xf32>
    %155 = vector.shape_cast %154 : vector<32xf32> to vector<32x1xf32>
    %156 = tpu.reciprocal %155 {approx = true} : vector<32x1xf32> -> vector<32x1xf32>
    %157 = vector.broadcast %156 : vector<32x1xf32> to vector<32x32xf32>
    %158 = arith.mulf %153, %157 : vector<32x32xf32>
    %159 = arith.truncf %158 : vector<32x32xf32> to vector<32x32xbf16>
    %cst_72 = arith.constant dense<0.000000e+00> : vector<32x8xf32>
    %160 = tpu.matmul %159, %144, %cst_72 {dimension_numbers = #tpu.dot_dimension_numbers<[1], [0], [0], [1], [0, 0, 1, 1], [], []>} : vector<32x32xbf16>, vector<32x8xbf16>, vector<32x8xf32> -> vector<32x8xf32>
    %161 = arith.truncf %160 : vector<32x8xf32> to vector<32x8xbf16>
    %c0_73 = arith.constant 0 : index
    %c3 = arith.constant 3 : index
    %c0_74 = arith.constant 0 : index
    %c0_75 = arith.constant 0 : index
    %162 = vector.load %arg12[%c0_73, %c3, %c0_74, %c0_75] : memref<1x8x8x32xbf16, #tpu.memory_space<vmem>>, vector<1x1x8x32xbf16>
    %163 = vector.shape_cast %162 : vector<1x1x8x32xbf16> to vector<8x32xbf16>
    %cst_76 = arith.constant dense<0.000000e+00> : vector<32x32xf32>
    %164 = tpu.matmul %161, %163, %cst_76 {dimension_numbers = #tpu.dot_dimension_numbers<[1], [0], [0], [1], [0, 0, 1, 1], [], []>} : vector<32x8xbf16>, vector<8x32xbf16>, vector<32x32xf32> -> vector<32x32xf32>
    %165 = arith.addf %138, %164 : vector<32x32xf32>
    %166 = arith.addf %2, %165 : vector<32x32xf32>
    %c0_77 = arith.constant 0 : index
    %c0_78 = arith.constant 0 : index
    %c0_79 = arith.constant 0 : index
    %167 = vector.load %arg13[%c0_77, %c0_78, %c0_79] : memref<1x2x32xf32, #tpu.memory_space<vmem>>, vector<1x1x32xf32>
    %168 = vector.shape_cast %167 : vector<1x1x32xf32> to vector<32xf32>
    %169 = vector.shape_cast %168 : vector<32xf32> to vector<1x32xf32>
    %170 = vector.broadcast %169 : vector<1x32xf32> to vector<32x32xf32>
    %171 = arith.addf %166, %170 : vector<32x32xf32>
    %c0_80 = arith.constant 0 : index
    %c0_81 = arith.constant 0 : index
    %c0_82 = arith.constant 0 : index
    %172 = vector.load %arg14[%c0_80, %c0_81, %c0_82] : memref<1x2x32xf32, #tpu.memory_space<vmem>>, vector<1x1x32xf32>
    %173 = vector.shape_cast %172 : vector<1x1x32xf32> to vector<32xf32>
    %c0_83 = arith.constant 0 : index
    %c0_84 = arith.constant 0 : index
    %c0_85 = arith.constant 0 : index
    %174 = vector.load %arg15[%c0_83, %c0_84, %c0_85] : memref<1x2x32xf32, #tpu.memory_space<vmem>>, vector<1x1x32xf32>
    %175 = vector.shape_cast %174 : vector<1x1x32xf32> to vector<32xf32>
    %cst_86 = arith.constant dense<0.000000e+00> : vector<32xf32>
    %176 = vector.multi_reduction <add>, %171, %cst_86 [1] : vector<32x32xf32> to vector<32xf32>
    %177 = vector.shape_cast %176 : vector<32xf32> to vector<32x1xf32>
    %cst_87 = arith.constant 3.200000e+01 : f32
    %178 = vector.broadcast %cst_87 : f32 to vector<32x1xf32>
    %179 = arith.divf %177, %178 : vector<32x1xf32>
    %180 = vector.broadcast %179 : vector<32x1xf32> to vector<32x32xf32>
    %181 = arith.subf %171, %180 : vector<32x32xf32>
    %182 = arith.mulf %181, %181 : vector<32x32xf32>
    %cst_88 = arith.constant dense<0.000000e+00> : vector<32xf32>
    %183 = vector.multi_reduction <add>, %182, %cst_88 [1] : vector<32x32xf32> to vector<32xf32>
    %184 = vector.shape_cast %183 : vector<32xf32> to vector<32x1xf32>
    %cst_89 = arith.constant 3.200000e+01 : f32
    %185 = vector.broadcast %cst_89 : f32 to vector<32x1xf32>
    %186 = arith.divf %184, %185 : vector<32x1xf32>
    %187 = vector.broadcast %179 : vector<32x1xf32> to vector<32x32xf32>
    %188 = arith.subf %171, %187 : vector<32x32xf32>
    %cst_90 = arith.constant 9.99999974E-6 : f32
    %189 = vector.broadcast %cst_90 : f32 to vector<32x1xf32>
    %190 = arith.addf %186, %189 : vector<32x1xf32>
    %191 = math.rsqrt %190 : vector<32x1xf32>
    %192 = vector.broadcast %191 : vector<32x1xf32> to vector<32x32xf32>
    %193 = arith.mulf %188, %192 : vector<32x32xf32>
    %194 = vector.shape_cast %173 : vector<32xf32> to vector<1x32xf32>
    %195 = vector.broadcast %194 : vector<1x32xf32> to vector<32x32xf32>
    %196 = arith.mulf %193, %195 : vector<32x32xf32>
    %197 = vector.shape_cast %175 : vector<32xf32> to vector<1x32xf32>
    %198 = vector.broadcast %197 : vector<1x32xf32> to vector<32x32xf32>
    %199 = arith.addf %196, %198 : vector<32x32xf32>
    %200 = arith.truncf %199 : vector<32x32xf32> to vector<32x32xbf16>
    %c0_91 = arith.constant 0 : index
    %c0_92 = arith.constant 0 : index
    %c0_93 = arith.constant 0 : index
    %c0_94 = arith.constant 0 : index
    %201 = vector.load %arg16[%c0_91, %c0_92, %c0_93, %c0_94] : memref<1x2x32x64xbf16, #tpu.memory_space<vmem>>, vector<1x1x32x64xbf16>
    %202 = vector.shape_cast %201 : vector<1x1x32x64xbf16> to vector<32x64xbf16>
    %cst_95 = arith.constant dense<0.000000e+00> : vector<32x64xf32>
    %203 = tpu.matmul %200, %202, %cst_95 {dimension_numbers = #tpu.dot_dimension_numbers<[1], [0], [0], [1], [0, 0, 1, 1], [], []>} : vector<32x32xbf16>, vector<32x64xbf16>, vector<32x64xf32> -> vector<32x64xf32>
    %c0_96 = arith.constant 0 : index
    %c0_97 = arith.constant 0 : index
    %c0_98 = arith.constant 0 : index
    %204 = vector.load %arg17[%c0_96, %c0_97, %c0_98] : memref<1x2x64xf32, #tpu.memory_space<vmem>>, vector<1x1x64xf32>
    %205 = vector.shape_cast %204 : vector<1x1x64xf32> to vector<64xf32>
    %206 = vector.shape_cast %205 : vector<64xf32> to vector<1x64xf32>
    %207 = vector.broadcast %206 : vector<1x64xf32> to vector<32x64xf32>
    %208 = arith.addf %203, %207 : vector<32x64xf32>
    %cst_99 = arith.constant 5.000000e-01 : f32
    %209 = vector.broadcast %cst_99 : f32 to vector<32x64xf32>
    %210 = arith.mulf %209, %208 : vector<32x64xf32>
    %cst_100 = arith.constant 4.471500e-02 : f32
    %211 = vector.broadcast %cst_100 : f32 to vector<32x64xf32>
    %212 = arith.mulf %211, %208 : vector<32x64xf32>
    %213 = arith.mulf %212, %208 : vector<32x64xf32>
    %214 = arith.mulf %213, %208 : vector<32x64xf32>
    %215 = arith.addf %208, %214 : vector<32x64xf32>
    %cst_101 = arith.constant 0.797884583 : f32
    %216 = vector.broadcast %cst_101 : f32 to vector<32x64xf32>
    %217 = arith.mulf %216, %215 : vector<32x64xf32>
    %218 = math.tanh %217 : vector<32x64xf32>
    %cst_102 = arith.constant 1.000000e+00 : f32
    %219 = vector.broadcast %cst_102 : f32 to vector<32x64xf32>
    %220 = arith.addf %219, %218 : vector<32x64xf32>
    %221 = arith.mulf %210, %220 : vector<32x64xf32>
    %222 = arith.truncf %221 : vector<32x64xf32> to vector<32x64xbf16>
    %c0_103 = arith.constant 0 : index
    %c0_104 = arith.constant 0 : index
    %c0_105 = arith.constant 0 : index
    %c0_106 = arith.constant 0 : index
    %223 = vector.load %arg18[%c0_103, %c0_104, %c0_105, %c0_106] : memref<1x2x64x32xbf16, #tpu.memory_space<vmem>>, vector<1x1x64x32xbf16>
    %224 = vector.shape_cast %223 : vector<1x1x64x32xbf16> to vector<64x32xbf16>
    %cst_107 = arith.constant dense<0.000000e+00> : vector<32x32xf32>
    %225 = tpu.matmul %222, %224, %cst_107 {dimension_numbers = #tpu.dot_dimension_numbers<[1], [0], [0], [1], [0, 0, 1, 1], [], []>} : vector<32x64xbf16>, vector<64x32xbf16>, vector<32x32xf32> -> vector<32x32xf32>
    %c0_108 = arith.constant 0 : index
    %c0_109 = arith.constant 0 : index
    %c0_110 = arith.constant 0 : index
    %226 = vector.load %arg19[%c0_108, %c0_109, %c0_110] : memref<1x2x32xf32, #tpu.memory_space<vmem>>, vector<1x1x32xf32>
    %227 = vector.shape_cast %226 : vector<1x1x32xf32> to vector<32xf32>
    %228 = vector.shape_cast %227 : vector<32xf32> to vector<1x32xf32>
    %229 = vector.broadcast %228 : vector<1x32xf32> to vector<32x32xf32>
    %230 = arith.addf %225, %229 : vector<32x32xf32>
    %231 = arith.addf %171, %230 : vector<32x32xf32>
    %c0_111 = arith.constant 0 : index
    %c1_112 = arith.constant 1 : index
    %c0_113 = arith.constant 0 : index
    %232 = vector.load %arg4[%c0_111, %c1_112, %c0_113] : memref<1x2x32xf32, #tpu.memory_space<vmem>>, vector<1x1x32xf32>
    %233 = vector.shape_cast %232 : vector<1x1x32xf32> to vector<32xf32>
    %c0_114 = arith.constant 0 : index
    %c1_115 = arith.constant 1 : index
    %c0_116 = arith.constant 0 : index
    %234 = vector.load %arg5[%c0_114, %c1_115, %c0_116] : memref<1x2x32xf32, #tpu.memory_space<vmem>>, vector<1x1x32xf32>
    %235 = vector.shape_cast %234 : vector<1x1x32xf32> to vector<32xf32>
    %cst_117 = arith.constant dense<0.000000e+00> : vector<32xf32>
    %236 = vector.multi_reduction <add>, %231, %cst_117 [1] : vector<32x32xf32> to vector<32xf32>
    %237 = vector.shape_cast %236 : vector<32xf32> to vector<32x1xf32>
    %cst_118 = arith.constant 3.200000e+01 : f32
    %238 = vector.broadcast %cst_118 : f32 to vector<32x1xf32>
    %239 = arith.divf %237, %238 : vector<32x1xf32>
    %240 = vector.broadcast %239 : vector<32x1xf32> to vector<32x32xf32>
    %241 = arith.subf %231, %240 : vector<32x32xf32>
    %242 = arith.mulf %241, %241 : vector<32x32xf32>
    %cst_119 = arith.constant dense<0.000000e+00> : vector<32xf32>
    %243 = vector.multi_reduction <add>, %242, %cst_119 [1] : vector<32x32xf32> to vector<32xf32>
    %244 = vector.shape_cast %243 : vector<32xf32> to vector<32x1xf32>
    %cst_120 = arith.constant 3.200000e+01 : f32
    %245 = vector.broadcast %cst_120 : f32 to vector<32x1xf32>
    %246 = arith.divf %244, %245 : vector<32x1xf32>
    %247 = vector.broadcast %239 : vector<32x1xf32> to vector<32x32xf32>
    %248 = arith.subf %231, %247 : vector<32x32xf32>
    %cst_121 = arith.constant 9.99999974E-6 : f32
    %249 = vector.broadcast %cst_121 : f32 to vector<32x1xf32>
    %250 = arith.addf %246, %249 : vector<32x1xf32>
    %251 = math.rsqrt %250 : vector<32x1xf32>
    %252 = vector.broadcast %251 : vector<32x1xf32> to vector<32x32xf32>
    %253 = arith.mulf %248, %252 : vector<32x32xf32>
    %254 = vector.shape_cast %233 : vector<32xf32> to vector<1x32xf32>
    %255 = vector.broadcast %254 : vector<1x32xf32> to vector<32x32xf32>
    %256 = arith.mulf %253, %255 : vector<32x32xf32>
    %257 = vector.shape_cast %235 : vector<32xf32> to vector<1x32xf32>
    %258 = vector.broadcast %257 : vector<1x32xf32> to vector<32x32xf32>
    %259 = arith.addf %256, %258 : vector<32x32xf32>
    %260 = arith.truncf %259 : vector<32x32xf32> to vector<32x32xbf16>
    %c0_122 = arith.constant 0 : index
    %c1_123 = arith.constant 1 : index
    %c0_124 = arith.constant 0 : index
    %c0_125 = arith.constant 0 : index
    %261 = vector.load %arg6[%c0_122, %c1_123, %c0_124, %c0_125] : memref<1x2x32x32xbf16, #tpu.memory_space<vmem>>, vector<1x1x32x32xbf16>
    %262 = vector.shape_cast %261 : vector<1x1x32x32xbf16> to vector<32x32xbf16>
    %cst_126 = arith.constant dense<0.000000e+00> : vector<32x32xf32>
    %263 = tpu.matmul %260, %262, %cst_126 {dimension_numbers = #tpu.dot_dimension_numbers<[1], [0], [0], [1], [0, 0, 1, 1], [], []>} : vector<32x32xbf16>, vector<32x32xbf16>, vector<32x32xf32> -> vector<32x32xf32>
    %c0_127 = arith.constant 0 : index
    %c1_128 = arith.constant 1 : index
    %c0_129 = arith.constant 0 : index
    %264 = vector.load %arg7[%c0_127, %c1_128, %c0_129] : memref<1x2x32xf32, #tpu.memory_space<vmem>>, vector<1x1x32xf32>
    %265 = vector.shape_cast %264 : vector<1x1x32xf32> to vector<32xf32>
    %266 = vector.shape_cast %265 : vector<32xf32> to vector<1x32xf32>
    %267 = vector.broadcast %266 : vector<1x32xf32> to vector<32x32xf32>
    %268 = arith.addf %263, %267 : vector<32x32xf32>
    %c0_130 = arith.constant 0 : index
    %c1_131 = arith.constant 1 : index
    %c0_132 = arith.constant 0 : index
    %c0_133 = arith.constant 0 : index
    %269 = vector.load %arg8[%c0_130, %c1_131, %c0_132, %c0_133] : memref<1x2x32x32xbf16, #tpu.memory_space<vmem>>, vector<1x1x32x32xbf16>
    %270 = vector.shape_cast %269 : vector<1x1x32x32xbf16> to vector<32x32xbf16>
    %cst_134 = arith.constant dense<0.000000e+00> : vector<32x32xf32>
    %271 = tpu.matmul %260, %270, %cst_134 {dimension_numbers = #tpu.dot_dimension_numbers<[1], [0], [0], [1], [0, 0, 1, 1], [], []>} : vector<32x32xbf16>, vector<32x32xbf16>, vector<32x32xf32> -> vector<32x32xf32>
    %c0_135 = arith.constant 0 : index
    %c1_136 = arith.constant 1 : index
    %c0_137 = arith.constant 0 : index
    %272 = vector.load %arg9[%c0_135, %c1_136, %c0_137] : memref<1x2x32xf32, #tpu.memory_space<vmem>>, vector<1x1x32xf32>
    %273 = vector.shape_cast %272 : vector<1x1x32xf32> to vector<32xf32>
    %274 = vector.shape_cast %273 : vector<32xf32> to vector<1x32xf32>
    %275 = vector.broadcast %274 : vector<1x32xf32> to vector<32x32xf32>
    %276 = arith.addf %271, %275 : vector<32x32xf32>
    %c0_138 = arith.constant 0 : index
    %c1_139 = arith.constant 1 : index
    %c0_140 = arith.constant 0 : index
    %c0_141 = arith.constant 0 : index
    %277 = vector.load %arg10[%c0_138, %c1_139, %c0_140, %c0_141] : memref<1x2x32x32xbf16, #tpu.memory_space<vmem>>, vector<1x1x32x32xbf16>
    %278 = vector.shape_cast %277 : vector<1x1x32x32xbf16> to vector<32x32xbf16>
    %cst_142 = arith.constant dense<0.000000e+00> : vector<32x32xf32>
    %279 = tpu.matmul %260, %278, %cst_142 {dimension_numbers = #tpu.dot_dimension_numbers<[1], [0], [0], [1], [0, 0, 1, 1], [], []>} : vector<32x32xbf16>, vector<32x32xbf16>, vector<32x32xf32> -> vector<32x32xf32>
    %c0_143 = arith.constant 0 : index
    %c1_144 = arith.constant 1 : index
    %c0_145 = arith.constant 0 : index
    %280 = vector.load %arg11[%c0_143, %c1_144, %c0_145] : memref<1x2x32xf32, #tpu.memory_space<vmem>>, vector<1x1x32xf32>
    %281 = vector.shape_cast %280 : vector<1x1x32xf32> to vector<32xf32>
    %282 = vector.shape_cast %281 : vector<32xf32> to vector<1x32xf32>
    %283 = vector.broadcast %282 : vector<1x32xf32> to vector<32x32xf32>
    %284 = arith.addf %279, %283 : vector<32x32xf32>
    %285 = tpu.transpose %276, [1, 0] : vector<32x32xf32> -> vector<32x32xf32>
    %286 = vector.extract_strided_slice %268 {offsets = [0, 0], sizes = [32, 8], strides = [1, 1]} : vector<32x32xf32> to vector<32x8xf32>
    %287 = arith.truncf %286 : vector<32x8xf32> to vector<32x8xbf16>
    %288 = vector.extract_strided_slice %285 {offsets = [0, 0], sizes = [8, 32], strides = [1, 1]} : vector<32x32xf32> to vector<8x32xf32>
    %289 = arith.truncf %288 : vector<8x32xf32> to vector<8x32xbf16>
    %290 = vector.extract_strided_slice %284 {offsets = [0, 0], sizes = [32, 8], strides = [1, 1]} : vector<32x32xf32> to vector<32x8xf32>
    %291 = arith.truncf %290 : vector<32x8xf32> to vector<32x8xbf16>
    %cst_146 = arith.constant dense<0.000000e+00> : vector<32x32xf32>
    %292 = tpu.matmul %287, %289, %cst_146 {dimension_numbers = #tpu.dot_dimension_numbers<[1], [0], [0], [1], [0, 0, 1, 1], [], []>} : vector<32x8xbf16>, vector<8x32xbf16>, vector<32x32xf32> -> vector<32x32xf32>
    %cst_147 = arith.constant 0.353553385 : f32
    %293 = vector.broadcast %cst_147 : f32 to vector<32x32xf32>
    %294 = arith.mulf %292, %293 : vector<32x32xf32>
    %295 = arith.addf %294, %4 : vector<32x32xf32>
    %cst_148 = arith.constant dense<0xFF800000> : vector<32xf32>
    %296 = vector.multi_reduction <maximumf>, %295, %cst_148 [1] : vector<32x32xf32> to vector<32xf32>
    %297 = vector.shape_cast %296 : vector<32xf32> to vector<32x1xf32>
    %298 = vector.broadcast %297 : vector<32x1xf32> to vector<32x32xf32>
    %299 = arith.subf %295, %298 : vector<32x32xf32>
    %300 = math.exp %299 : vector<32x32xf32>
    %cst_149 = arith.constant dense<0.000000e+00> : vector<32xf32>
    %301 = vector.multi_reduction <add>, %300, %cst_149 [1] : vector<32x32xf32> to vector<32xf32>
    %302 = vector.shape_cast %301 : vector<32xf32> to vector<32x1xf32>
    %303 = tpu.reciprocal %302 {approx = true} : vector<32x1xf32> -> vector<32x1xf32>
    %304 = vector.broadcast %303 : vector<32x1xf32> to vector<32x32xf32>
    %305 = arith.mulf %300, %304 : vector<32x32xf32>
    %306 = arith.truncf %305 : vector<32x32xf32> to vector<32x32xbf16>
    %cst_150 = arith.constant dense<0.000000e+00> : vector<32x8xf32>
    %307 = tpu.matmul %306, %291, %cst_150 {dimension_numbers = #tpu.dot_dimension_numbers<[1], [0], [0], [1], [0, 0, 1, 1], [], []>} : vector<32x32xbf16>, vector<32x8xbf16>, vector<32x8xf32> -> vector<32x8xf32>
    %308 = arith.truncf %307 : vector<32x8xf32> to vector<32x8xbf16>
    %c0_151 = arith.constant 0 : index
    %c4 = arith.constant 4 : index
    %c0_152 = arith.constant 0 : index
    %c0_153 = arith.constant 0 : index
    %309 = vector.load %arg12[%c0_151, %c4, %c0_152, %c0_153] : memref<1x8x8x32xbf16, #tpu.memory_space<vmem>>, vector<1x1x8x32xbf16>
    %310 = vector.shape_cast %309 : vector<1x1x8x32xbf16> to vector<8x32xbf16>
    %cst_154 = arith.constant dense<0.000000e+00> : vector<32x32xf32>
    %311 = tpu.matmul %308, %310, %cst_154 {dimension_numbers = #tpu.dot_dimension_numbers<[1], [0], [0], [1], [0, 0, 1, 1], [], []>} : vector<32x8xbf16>, vector<8x32xbf16>, vector<32x32xf32> -> vector<32x32xf32>
    %312 = vector.extract_strided_slice %268 {offsets = [0, 8], sizes = [32, 8], strides = [1, 1]} : vector<32x32xf32> to vector<32x8xf32>
    %313 = arith.truncf %312 : vector<32x8xf32> to vector<32x8xbf16>
    %314 = vector.extract_strided_slice %285 {offsets = [8, 0], sizes = [8, 32], strides = [1, 1]} : vector<32x32xf32> to vector<8x32xf32>
    %315 = arith.truncf %314 : vector<8x32xf32> to vector<8x32xbf16>
    %316 = vector.extract_strided_slice %284 {offsets = [0, 8], sizes = [32, 8], strides = [1, 1]} : vector<32x32xf32> to vector<32x8xf32>
    %317 = arith.truncf %316 : vector<32x8xf32> to vector<32x8xbf16>
    %cst_155 = arith.constant dense<0.000000e+00> : vector<32x32xf32>
    %318 = tpu.matmul %313, %315, %cst_155 {dimension_numbers = #tpu.dot_dimension_numbers<[1], [0], [0], [1], [0, 0, 1, 1], [], []>} : vector<32x8xbf16>, vector<8x32xbf16>, vector<32x32xf32> -> vector<32x32xf32>
    %cst_156 = arith.constant 0.353553385 : f32
    %319 = vector.broadcast %cst_156 : f32 to vector<32x32xf32>
    %320 = arith.mulf %318, %319 : vector<32x32xf32>
    %321 = arith.addf %320, %4 : vector<32x32xf32>
    %cst_157 = arith.constant dense<0xFF800000> : vector<32xf32>
    %322 = vector.multi_reduction <maximumf>, %321, %cst_157 [1] : vector<32x32xf32> to vector<32xf32>
    %323 = vector.shape_cast %322 : vector<32xf32> to vector<32x1xf32>
    %324 = vector.broadcast %323 : vector<32x1xf32> to vector<32x32xf32>
    %325 = arith.subf %321, %324 : vector<32x32xf32>
    %326 = math.exp %325 : vector<32x32xf32>
    %cst_158 = arith.constant dense<0.000000e+00> : vector<32xf32>
    %327 = vector.multi_reduction <add>, %326, %cst_158 [1] : vector<32x32xf32> to vector<32xf32>
    %328 = vector.shape_cast %327 : vector<32xf32> to vector<32x1xf32>
    %329 = tpu.reciprocal %328 {approx = true} : vector<32x1xf32> -> vector<32x1xf32>
    %330 = vector.broadcast %329 : vector<32x1xf32> to vector<32x32xf32>
    %331 = arith.mulf %326, %330 : vector<32x32xf32>
    %332 = arith.truncf %331 : vector<32x32xf32> to vector<32x32xbf16>
    %cst_159 = arith.constant dense<0.000000e+00> : vector<32x8xf32>
    %333 = tpu.matmul %332, %317, %cst_159 {dimension_numbers = #tpu.dot_dimension_numbers<[1], [0], [0], [1], [0, 0, 1, 1], [], []>} : vector<32x32xbf16>, vector<32x8xbf16>, vector<32x8xf32> -> vector<32x8xf32>
    %334 = arith.truncf %333 : vector<32x8xf32> to vector<32x8xbf16>
    %c0_160 = arith.constant 0 : index
    %c5 = arith.constant 5 : index
    %c0_161 = arith.constant 0 : index
    %c0_162 = arith.constant 0 : index
    %335 = vector.load %arg12[%c0_160, %c5, %c0_161, %c0_162] : memref<1x8x8x32xbf16, #tpu.memory_space<vmem>>, vector<1x1x8x32xbf16>
    %336 = vector.shape_cast %335 : vector<1x1x8x32xbf16> to vector<8x32xbf16>
    %cst_163 = arith.constant dense<0.000000e+00> : vector<32x32xf32>
    %337 = tpu.matmul %334, %336, %cst_163 {dimension_numbers = #tpu.dot_dimension_numbers<[1], [0], [0], [1], [0, 0, 1, 1], [], []>} : vector<32x8xbf16>, vector<8x32xbf16>, vector<32x32xf32> -> vector<32x32xf32>
    %338 = arith.addf %311, %337 : vector<32x32xf32>
    %339 = vector.extract_strided_slice %268 {offsets = [0, 16], sizes = [32, 8], strides = [1, 1]} : vector<32x32xf32> to vector<32x8xf32>
    %340 = arith.truncf %339 : vector<32x8xf32> to vector<32x8xbf16>
    %341 = vector.extract_strided_slice %285 {offsets = [16, 0], sizes = [8, 32], strides = [1, 1]} : vector<32x32xf32> to vector<8x32xf32>
    %342 = arith.truncf %341 : vector<8x32xf32> to vector<8x32xbf16>
    %343 = vector.extract_strided_slice %284 {offsets = [0, 16], sizes = [32, 8], strides = [1, 1]} : vector<32x32xf32> to vector<32x8xf32>
    %344 = arith.truncf %343 : vector<32x8xf32> to vector<32x8xbf16>
    %cst_164 = arith.constant dense<0.000000e+00> : vector<32x32xf32>
    %345 = tpu.matmul %340, %342, %cst_164 {dimension_numbers = #tpu.dot_dimension_numbers<[1], [0], [0], [1], [0, 0, 1, 1], [], []>} : vector<32x8xbf16>, vector<8x32xbf16>, vector<32x32xf32> -> vector<32x32xf32>
    %cst_165 = arith.constant 0.353553385 : f32
    %346 = vector.broadcast %cst_165 : f32 to vector<32x32xf32>
    %347 = arith.mulf %345, %346 : vector<32x32xf32>
    %348 = arith.addf %347, %4 : vector<32x32xf32>
    %cst_166 = arith.constant dense<0xFF800000> : vector<32xf32>
    %349 = vector.multi_reduction <maximumf>, %348, %cst_166 [1] : vector<32x32xf32> to vector<32xf32>
    %350 = vector.shape_cast %349 : vector<32xf32> to vector<32x1xf32>
    %351 = vector.broadcast %350 : vector<32x1xf32> to vector<32x32xf32>
    %352 = arith.subf %348, %351 : vector<32x32xf32>
    %353 = math.exp %352 : vector<32x32xf32>
    %cst_167 = arith.constant dense<0.000000e+00> : vector<32xf32>
    %354 = vector.multi_reduction <add>, %353, %cst_167 [1] : vector<32x32xf32> to vector<32xf32>
    %355 = vector.shape_cast %354 : vector<32xf32> to vector<32x1xf32>
    %356 = tpu.reciprocal %355 {approx = true} : vector<32x1xf32> -> vector<32x1xf32>
    %357 = vector.broadcast %356 : vector<32x1xf32> to vector<32x32xf32>
    %358 = arith.mulf %353, %357 : vector<32x32xf32>
    %359 = arith.truncf %358 : vector<32x32xf32> to vector<32x32xbf16>
    %cst_168 = arith.constant dense<0.000000e+00> : vector<32x8xf32>
    %360 = tpu.matmul %359, %344, %cst_168 {dimension_numbers = #tpu.dot_dimension_numbers<[1], [0], [0], [1], [0, 0, 1, 1], [], []>} : vector<32x32xbf16>, vector<32x8xbf16>, vector<32x8xf32> -> vector<32x8xf32>
    %361 = arith.truncf %360 : vector<32x8xf32> to vector<32x8xbf16>
    %c0_169 = arith.constant 0 : index
    %c6 = arith.constant 6 : index
    %c0_170 = arith.constant 0 : index
    %c0_171 = arith.constant 0 : index
    %362 = vector.load %arg12[%c0_169, %c6, %c0_170, %c0_171] : memref<1x8x8x32xbf16, #tpu.memory_space<vmem>>, vector<1x1x8x32xbf16>
    %363 = vector.shape_cast %362 : vector<1x1x8x32xbf16> to vector<8x32xbf16>
    %cst_172 = arith.constant dense<0.000000e+00> : vector<32x32xf32>
    %364 = tpu.matmul %361, %363, %cst_172 {dimension_numbers = #tpu.dot_dimension_numbers<[1], [0], [0], [1], [0, 0, 1, 1], [], []>} : vector<32x8xbf16>, vector<8x32xbf16>, vector<32x32xf32> -> vector<32x32xf32>
    %365 = arith.addf %338, %364 : vector<32x32xf32>
    %366 = vector.extract_strided_slice %268 {offsets = [0, 24], sizes = [32, 8], strides = [1, 1]} : vector<32x32xf32> to vector<32x8xf32>
    %367 = arith.truncf %366 : vector<32x8xf32> to vector<32x8xbf16>
    %368 = vector.extract_strided_slice %285 {offsets = [24, 0], sizes = [8, 32], strides = [1, 1]} : vector<32x32xf32> to vector<8x32xf32>
    %369 = arith.truncf %368 : vector<8x32xf32> to vector<8x32xbf16>
    %370 = vector.extract_strided_slice %284 {offsets = [0, 24], sizes = [32, 8], strides = [1, 1]} : vector<32x32xf32> to vector<32x8xf32>
    %371 = arith.truncf %370 : vector<32x8xf32> to vector<32x8xbf16>
    %cst_173 = arith.constant dense<0.000000e+00> : vector<32x32xf32>
    %372 = tpu.matmul %367, %369, %cst_173 {dimension_numbers = #tpu.dot_dimension_numbers<[1], [0], [0], [1], [0, 0, 1, 1], [], []>} : vector<32x8xbf16>, vector<8x32xbf16>, vector<32x32xf32> -> vector<32x32xf32>
    %cst_174 = arith.constant 0.353553385 : f32
    %373 = vector.broadcast %cst_174 : f32 to vector<32x32xf32>
    %374 = arith.mulf %372, %373 : vector<32x32xf32>
    %375 = arith.addf %374, %4 : vector<32x32xf32>
    %cst_175 = arith.constant dense<0xFF800000> : vector<32xf32>
    %376 = vector.multi_reduction <maximumf>, %375, %cst_175 [1] : vector<32x32xf32> to vector<32xf32>
    %377 = vector.shape_cast %376 : vector<32xf32> to vector<32x1xf32>
    %378 = vector.broadcast %377 : vector<32x1xf32> to vector<32x32xf32>
    %379 = arith.subf %375, %378 : vector<32x32xf32>
    %380 = math.exp %379 : vector<32x32xf32>
    %cst_176 = arith.constant dense<0.000000e+00> : vector<32xf32>
    %381 = vector.multi_reduction <add>, %380, %cst_176 [1] : vector<32x32xf32> to vector<32xf32>
    %382 = vector.shape_cast %381 : vector<32xf32> to vector<32x1xf32>
    %383 = tpu.reciprocal %382 {approx = true} : vector<32x1xf32> -> vector<32x1xf32>
    %384 = vector.broadcast %383 : vector<32x1xf32> to vector<32x32xf32>
    %385 = arith.mulf %380, %384 : vector<32x32xf32>
    %386 = arith.truncf %385 : vector<32x32xf32> to vector<32x32xbf16>
    %cst_177 = arith.constant dense<0.000000e+00> : vector<32x8xf32>
    %387 = tpu.matmul %386, %371, %cst_177 {dimension_numbers = #tpu.dot_dimension_numbers<[1], [0], [0], [1], [0, 0, 1, 1], [], []>} : vector<32x32xbf16>, vector<32x8xbf16>, vector<32x8xf32> -> vector<32x8xf32>
    %388 = arith.truncf %387 : vector<32x8xf32> to vector<32x8xbf16>
    %c0_178 = arith.constant 0 : index
    %c7 = arith.constant 7 : index
    %c0_179 = arith.constant 0 : index
    %c0_180 = arith.constant 0 : index
    %389 = vector.load %arg12[%c0_178, %c7, %c0_179, %c0_180] : memref<1x8x8x32xbf16, #tpu.memory_space<vmem>>, vector<1x1x8x32xbf16>
    %390 = vector.shape_cast %389 : vector<1x1x8x32xbf16> to vector<8x32xbf16>
    %cst_181 = arith.constant dense<0.000000e+00> : vector<32x32xf32>
    %391 = tpu.matmul %388, %390, %cst_181 {dimension_numbers = #tpu.dot_dimension_numbers<[1], [0], [0], [1], [0, 0, 1, 1], [], []>} : vector<32x8xbf16>, vector<8x32xbf16>, vector<32x32xf32> -> vector<32x32xf32>
    %392 = arith.addf %365, %391 : vector<32x32xf32>
    %393 = arith.addf %231, %392 : vector<32x32xf32>
    %c0_182 = arith.constant 0 : index
    %c1_183 = arith.constant 1 : index
    %c0_184 = arith.constant 0 : index
    %394 = vector.load %arg13[%c0_182, %c1_183, %c0_184] : memref<1x2x32xf32, #tpu.memory_space<vmem>>, vector<1x1x32xf32>
    %395 = vector.shape_cast %394 : vector<1x1x32xf32> to vector<32xf32>
    %396 = vector.shape_cast %395 : vector<32xf32> to vector<1x32xf32>
    %397 = vector.broadcast %396 : vector<1x32xf32> to vector<32x32xf32>
    %398 = arith.addf %393, %397 : vector<32x32xf32>
    %c0_185 = arith.constant 0 : index
    %c1_186 = arith.constant 1 : index
    %c0_187 = arith.constant 0 : index
    %399 = vector.load %arg14[%c0_185, %c1_186, %c0_187] : memref<1x2x32xf32, #tpu.memory_space<vmem>>, vector<1x1x32xf32>
    %400 = vector.shape_cast %399 : vector<1x1x32xf32> to vector<32xf32>
    %c0_188 = arith.constant 0 : index
    %c1_189 = arith.constant 1 : index
    %c0_190 = arith.constant 0 : index
    %401 = vector.load %arg15[%c0_188, %c1_189, %c0_190] : memref<1x2x32xf32, #tpu.memory_space<vmem>>, vector<1x1x32xf32>
    %402 = vector.shape_cast %401 : vector<1x1x32xf32> to vector<32xf32>
    %cst_191 = arith.constant dense<0.000000e+00> : vector<32xf32>
    %403 = vector.multi_reduction <add>, %398, %cst_191 [1] : vector<32x32xf32> to vector<32xf32>
    %404 = vector.shape_cast %403 : vector<32xf32> to vector<32x1xf32>
    %cst_192 = arith.constant 3.200000e+01 : f32
    %405 = vector.broadcast %cst_192 : f32 to vector<32x1xf32>
    %406 = arith.divf %404, %405 : vector<32x1xf32>
    %407 = vector.broadcast %406 : vector<32x1xf32> to vector<32x32xf32>
    %408 = arith.subf %398, %407 : vector<32x32xf32>
    %409 = arith.mulf %408, %408 : vector<32x32xf32>
    %cst_193 = arith.constant dense<0.000000e+00> : vector<32xf32>
    %410 = vector.multi_reduction <add>, %409, %cst_193 [1] : vector<32x32xf32> to vector<32xf32>
    %411 = vector.shape_cast %410 : vector<32xf32> to vector<32x1xf32>
    %cst_194 = arith.constant 3.200000e+01 : f32
    %412 = vector.broadcast %cst_194 : f32 to vector<32x1xf32>
    %413 = arith.divf %411, %412 : vector<32x1xf32>
    %414 = vector.broadcast %406 : vector<32x1xf32> to vector<32x32xf32>
    %415 = arith.subf %398, %414 : vector<32x32xf32>
    %cst_195 = arith.constant 9.99999974E-6 : f32
    %416 = vector.broadcast %cst_195 : f32 to vector<32x1xf32>
    %417 = arith.addf %413, %416 : vector<32x1xf32>
    %418 = math.rsqrt %417 : vector<32x1xf32>
    %419 = vector.broadcast %418 : vector<32x1xf32> to vector<32x32xf32>
    %420 = arith.mulf %415, %419 : vector<32x32xf32>
    %421 = vector.shape_cast %400 : vector<32xf32> to vector<1x32xf32>
    %422 = vector.broadcast %421 : vector<1x32xf32> to vector<32x32xf32>
    %423 = arith.mulf %420, %422 : vector<32x32xf32>
    %424 = vector.shape_cast %402 : vector<32xf32> to vector<1x32xf32>
    %425 = vector.broadcast %424 : vector<1x32xf32> to vector<32x32xf32>
    %426 = arith.addf %423, %425 : vector<32x32xf32>
    %427 = arith.truncf %426 : vector<32x32xf32> to vector<32x32xbf16>
    %c0_196 = arith.constant 0 : index
    %c1_197 = arith.constant 1 : index
    %c0_198 = arith.constant 0 : index
    %c0_199 = arith.constant 0 : index
    %428 = vector.load %arg16[%c0_196, %c1_197, %c0_198, %c0_199] : memref<1x2x32x64xbf16, #tpu.memory_space<vmem>>, vector<1x1x32x64xbf16>
    %429 = vector.shape_cast %428 : vector<1x1x32x64xbf16> to vector<32x64xbf16>
    %cst_200 = arith.constant dense<0.000000e+00> : vector<32x64xf32>
    %430 = tpu.matmul %427, %429, %cst_200 {dimension_numbers = #tpu.dot_dimension_numbers<[1], [0], [0], [1], [0, 0, 1, 1], [], []>} : vector<32x32xbf16>, vector<32x64xbf16>, vector<32x64xf32> -> vector<32x64xf32>
    %c0_201 = arith.constant 0 : index
    %c1_202 = arith.constant 1 : index
    %c0_203 = arith.constant 0 : index
    %431 = vector.load %arg17[%c0_201, %c1_202, %c0_203] : memref<1x2x64xf32, #tpu.memory_space<vmem>>, vector<1x1x64xf32>
    %432 = vector.shape_cast %431 : vector<1x1x64xf32> to vector<64xf32>
    %433 = vector.shape_cast %432 : vector<64xf32> to vector<1x64xf32>
    %434 = vector.broadcast %433 : vector<1x64xf32> to vector<32x64xf32>
    %435 = arith.addf %430, %434 : vector<32x64xf32>
    %cst_204 = arith.constant 5.000000e-01 : f32
    %436 = vector.broadcast %cst_204 : f32 to vector<32x64xf32>
    %437 = arith.mulf %436, %435 : vector<32x64xf32>
    %cst_205 = arith.constant 4.471500e-02 : f32
    %438 = vector.broadcast %cst_205 : f32 to vector<32x64xf32>
    %439 = arith.mulf %438, %435 : vector<32x64xf32>
    %440 = arith.mulf %439, %435 : vector<32x64xf32>
    %441 = arith.mulf %440, %435 : vector<32x64xf32>
    %442 = arith.addf %435, %441 : vector<32x64xf32>
    %cst_206 = arith.constant 0.797884583 : f32
    %443 = vector.broadcast %cst_206 : f32 to vector<32x64xf32>
    %444 = arith.mulf %443, %442 : vector<32x64xf32>
    %445 = math.tanh %444 : vector<32x64xf32>
    %cst_207 = arith.constant 1.000000e+00 : f32
    %446 = vector.broadcast %cst_207 : f32 to vector<32x64xf32>
    %447 = arith.addf %446, %445 : vector<32x64xf32>
    %448 = arith.mulf %437, %447 : vector<32x64xf32>
    %449 = arith.truncf %448 : vector<32x64xf32> to vector<32x64xbf16>
    %c0_208 = arith.constant 0 : index
    %c1_209 = arith.constant 1 : index
    %c0_210 = arith.constant 0 : index
    %c0_211 = arith.constant 0 : index
    %450 = vector.load %arg18[%c0_208, %c1_209, %c0_210, %c0_211] : memref<1x2x64x32xbf16, #tpu.memory_space<vmem>>, vector<1x1x64x32xbf16>
    %451 = vector.shape_cast %450 : vector<1x1x64x32xbf16> to vector<64x32xbf16>
    %cst_212 = arith.constant dense<0.000000e+00> : vector<32x32xf32>
    %452 = tpu.matmul %449, %451, %cst_212 {dimension_numbers = #tpu.dot_dimension_numbers<[1], [0], [0], [1], [0, 0, 1, 1], [], []>} : vector<32x64xbf16>, vector<64x32xbf16>, vector<32x32xf32> -> vector<32x32xf32>
    %c0_213 = arith.constant 0 : index
    %c1_214 = arith.constant 1 : index
    %c0_215 = arith.constant 0 : index
    %453 = vector.load %arg19[%c0_213, %c1_214, %c0_215] : memref<1x2x32xf32, #tpu.memory_space<vmem>>, vector<1x1x32xf32>
    %454 = vector.shape_cast %453 : vector<1x1x32xf32> to vector<32xf32>
    %455 = vector.shape_cast %454 : vector<32xf32> to vector<1x32xf32>
    %456 = vector.broadcast %455 : vector<1x32xf32> to vector<32x32xf32>
    %457 = arith.addf %452, %456 : vector<32x32xf32>
    %458 = arith.addf %398, %457 : vector<32x32xf32>
    %c0_216 = arith.constant 0 : index
    %c0_217 = arith.constant 0 : index
    %459 = vector.load %arg20[%c0_216, %c0_217] : memref<1x32xf32, #tpu.memory_space<vmem>>, vector<1x32xf32>
    %460 = vector.shape_cast %459 : vector<1x32xf32> to vector<32xf32>
    %c0_218 = arith.constant 0 : index
    %c0_219 = arith.constant 0 : index
    %461 = vector.load %arg21[%c0_218, %c0_219] : memref<1x32xf32, #tpu.memory_space<vmem>>, vector<1x32xf32>
    %462 = vector.shape_cast %461 : vector<1x32xf32> to vector<32xf32>
    %cst_220 = arith.constant dense<0.000000e+00> : vector<32xf32>
    %463 = vector.multi_reduction <add>, %458, %cst_220 [1] : vector<32x32xf32> to vector<32xf32>
    %464 = vector.shape_cast %463 : vector<32xf32> to vector<32x1xf32>
    %cst_221 = arith.constant 3.200000e+01 : f32
    %465 = vector.broadcast %cst_221 : f32 to vector<32x1xf32>
    %466 = arith.divf %464, %465 : vector<32x1xf32>
    %467 = vector.broadcast %466 : vector<32x1xf32> to vector<32x32xf32>
    %468 = arith.subf %458, %467 : vector<32x32xf32>
    %469 = arith.mulf %468, %468 : vector<32x32xf32>
    %cst_222 = arith.constant dense<0.000000e+00> : vector<32xf32>
    %470 = vector.multi_reduction <add>, %469, %cst_222 [1] : vector<32x32xf32> to vector<32xf32>
    %471 = vector.shape_cast %470 : vector<32xf32> to vector<32x1xf32>
    %cst_223 = arith.constant 3.200000e+01 : f32
    %472 = vector.broadcast %cst_223 : f32 to vector<32x1xf32>
    %473 = arith.divf %471, %472 : vector<32x1xf32>
    %474 = vector.broadcast %466 : vector<32x1xf32> to vector<32x32xf32>
    %475 = arith.subf %458, %474 : vector<32x32xf32>
    %cst_224 = arith.constant 9.99999974E-6 : f32
    %476 = vector.broadcast %cst_224 : f32 to vector<32x1xf32>
    %477 = arith.addf %473, %476 : vector<32x1xf32>
    %478 = math.rsqrt %477 : vector<32x1xf32>
    %479 = vector.broadcast %478 : vector<32x1xf32> to vector<32x32xf32>
    %480 = arith.mulf %475, %479 : vector<32x32xf32>
    %481 = vector.shape_cast %460 : vector<32xf32> to vector<1x32xf32>
    %482 = vector.broadcast %481 : vector<1x32xf32> to vector<32x32xf32>
    %483 = arith.mulf %480, %482 : vector<32x32xf32>
    %484 = vector.shape_cast %462 : vector<32xf32> to vector<1x32xf32>
    %485 = vector.broadcast %484 : vector<1x32xf32> to vector<32x32xf32>
    %486 = arith.addf %483, %485 : vector<32x32xf32>
    %c0_225 = arith.constant 0 : index
    %c0_226 = arith.constant 0 : index
    %c0_227 = arith.constant 0 : index
    %487 = vector.load %arg22[%c0_225, %c0_226, %c0_227] : memref<1x32x32xf32, #tpu.memory_space<vmem>>, vector<1x32x32xf32>
    %488 = vector.shape_cast %487 : vector<1x32x32xf32> to vector<32x32xf32>
    %489 = vector.shape_cast %486 : vector<32x32xf32> to vector<1x32x32xf32>
    tpu.vector_store %arg22[%c0_225, %c0_226, %c0_227], %489 {strides = array<i32>} : memref<1x32x32xf32, #tpu.memory_space<vmem>>, vector<1x32x32xf32>,
    return
  }
  func.func @transform_0(%arg0: i32) -> (i32, i32) {
    %c0_i32 = arith.constant 0 : i32
    %c0_i32_0 = arith.constant 0 : i32
    %c0_i32_1 = arith.constant 0 : i32
    return %c0_i32, %c0_i32_0 : i32, i32
  }
  func.func @transform_1(%arg0: i32) -> (i32, i32) {
    %c0_i32 = arith.constant 0 : i32
    %c0_i32_0 = arith.constant 0 : i32
    %c0_i32_1 = arith.constant 0 : i32
    return %c0_i32, %c0_i32_0 : i32, i32
  }
  func.func @transform_2(%arg0: i32) -> (i32, i32, i32) {
    %c0_i32 = arith.constant 0 : i32
    %c0_i32_0 = arith.constant 0 : i32
    %c0_i32_1 = arith.constant 0 : i32
    return %arg0, %c0_i32, %c0_i32_0 : i32, i32, i32
  }
  func.func @transform_3(%arg0: i32) -> (i32, i32, i32) {
    %c0_i32 = arith.constant 0 : i32
    %c0_i32_0 = arith.constant 0 : i32
    %c0_i32_1 = arith.constant 0 : i32
    return %arg0, %c0_i32, %c0_i32_0 : i32, i32, i32
  }
  func.func @transform_4(%arg0: i32) -> (i32, i32, i32) {
    %c0_i32 = arith.constant 0 : i32
    %c0_i32_0 = arith.constant 0 : i32
    %c0_i32_1 = arith.constant 0 : i32
    return %arg0, %c0_i32, %c0_i32_0 : i32, i32, i32
  }
  func.func @transform_5(%arg0: i32) -> (i32, i32, i32, i32) {
    %c0_i32 = arith.constant 0 : i32
    %c0_i32_0 = arith.constant 0 : i32
    %c0_i32_1 = arith.constant 0 : i32
    %c0_i32_2 = arith.constant 0 : i32
    return %arg0, %c0_i32, %c0_i32_0, %c0_i32_1 : i32, i32, i32, i32
  }
  func.func @transform_6(%arg0: i32) -> (i32, i32, i32) {
    %c0_i32 = arith.constant 0 : i32
    %c0_i32_0 = arith.constant 0 : i32
    %c0_i32_1 = arith.constant 0 : i32
    return %arg0, %c0_i32, %c0_i32_0 : i32, i32, i32
  }
  func.func @transform_7(%arg0: i32) -> (i32, i32, i32, i32) {
    %c0_i32 = arith.constant 0 : i32
    %c0_i32_0 = arith.constant 0 : i32
    %c0_i32_1 = arith.constant 0 : i32
    %c0_i32_2 = arith.constant 0 : i32
    return %arg0, %c0_i32, %c0_i32_0, %c0_i32_1 : i32, i32, i32, i32
  }
  func.func @transform_8(%arg0: i32) -> (i32, i32, i32) {
    %c0_i32 = arith.constant 0 : i32
    %c0_i32_0 = arith.constant 0 : i32
    %c0_i32_1 = arith.constant 0 : i32
    return %arg0, %c0_i32, %c0_i32_0 : i32, i32, i32
  }
  func.func @transform_9(%arg0: i32) -> (i32, i32, i32, i32) {
    %c0_i32 = arith.constant 0 : i32
    %c0_i32_0 = arith.constant 0 : i32
    %c0_i32_1 = arith.constant 0 : i32
    %c0_i32_2 = arith.constant 0 : i32
    return %arg0, %c0_i32, %c0_i32_0, %c0_i32_1 : i32, i32, i32, i32
  }
  func.func @transform_10(%arg0: i32) -> (i32, i32, i32) {
    %c0_i32 = arith.constant 0 : i32
    %c0_i32_0 = arith.constant 0 : i32
    %c0_i32_1 = arith.constant 0 : i32
    return %arg0, %c0_i32, %c0_i32_0 : i32, i32, i32
  }
  func.func @transform_11(%arg0: i32) -> (i32, i32, i32, i32) {
    %c0_i32 = arith.constant 0 : i32
    %c0_i32_0 = arith.constant 0 : i32
    %c0_i32_1 = arith.constant 0 : i32
    %c0_i32_2 = arith.constant 0 : i32
    return %arg0, %c0_i32, %c0_i32_0, %c0_i32_1 : i32, i32, i32, i32
  }
  func.func @transform_12(%arg0: i32) -> (i32, i32, i32) {
    %c0_i32 = arith.constant 0 : i32
    %c0_i32_0 = arith.constant 0 : i32
    %c0_i32_1 = arith.constant 0 : i32
    return %arg0, %c0_i32, %c0_i32_0 : i32, i32, i32
  }
  func.func @transform_13(%arg0: i32) -> (i32, i32, i32) {
    %c0_i32 = arith.constant 0 : i32
    %c0_i32_0 = arith.constant 0 : i32
    %c0_i32_1 = arith.constant 0 : i32
    return %arg0, %c0_i32, %c0_i32_0 : i32, i32, i32
  }
  func.func @transform_14(%arg0: i32) -> (i32, i32, i32) {
    %c0_i32 = arith.constant 0 : i32
    %c0_i32_0 = arith.constant 0 : i32
    %c0_i32_1 = arith.constant 0 : i32
    return %arg0, %c0_i32, %c0_i32_0 : i32, i32, i32
  }
  func.func @transform_15(%arg0: i32) -> (i32, i32, i32, i32) {
    %c0_i32 = arith.constant 0 : i32
    %c0_i32_0 = arith.constant 0 : i32
    %c0_i32_1 = arith.constant 0 : i32
    %c0_i32_2 = arith.constant 0 : i32
    return %arg0, %c0_i32, %c0_i32_0, %c0_i32_1 : i32, i32, i32, i32
  }
  func.func @transform_16(%arg0: i32) -> (i32, i32, i32) {
    %c0_i32 = arith.constant 0 : i32
    %c0_i32_0 = arith.constant 0 : i32
    %c0_i32_1 = arith.constant 0 : i32
    return %arg0, %c0_i32, %c0_i32_0 : i32, i32, i32
  }
  func.func @transform_17(%arg0: i32) -> (i32, i32, i32, i32) {
    %c0_i32 = arith.constant 0 : i32
    %c0_i32_0 = arith.constant 0 : i32
    %c0_i32_1 = arith.constant 0 : i32
    %c0_i32_2 = arith.constant 0 : i32
    return %arg0, %c0_i32, %c0_i32_0, %c0_i32_1 : i32, i32, i32, i32
  }
  func.func @transform_18(%arg0: i32) -> (i32, i32, i32) {
    %c0_i32 = arith.constant 0 : i32
    %c0_i32_0 = arith.constant 0 : i32
    %c0_i32_1 = arith.constant 0 : i32
    return %arg0, %c0_i32, %c0_i32_0 : i32, i32, i32
  }
  func.func @transform_19(%arg0: i32) -> (i32, i32) {
    %c0_i32 = arith.constant 0 : i32
    %c0_i32_0 = arith.constant 0 : i32
    %c0_i32_1 = arith.constant 0 : i32
    return %c0_i32, %c0_i32_0 : i32, i32
  }
  func.func @transform_20(%arg0: i32) -> (i32, i32) {
    %c0_i32 = arith.constant 0 : i32
    %c0_i32_0 = arith.constant 0 : i32
    %c0_i32_1 = arith.constant 0 : i32
    return %c0_i32, %c0_i32_0 : i32, i32
  }
  func.func @transform_21(%arg0: i32) -> (i32, i32, i32) {
    %c0_i32 = arith.constant 0 : i32
    %c0_i32_0 = arith.constant 0 : i32
    %c0_i32_1 = arith.constant 0 : i32
    return %arg0, %c0_i32, %c0_i32_0 : i32, i32, i32
  }
}

</mosaic_0001>

<llo_original>
// kernel: tpu_custom_call.1
$region0: #{tpu_custom_call.1}
  #allocation0 [shape = 'u32[]', space=smem, size = 0x4, offset = 0x4, fixed_abs, tag = 'smem constant byte address 0x4 - core index']
  #allocation1 [shape = 'u32[144,128]{1,0:T(1,128)}', space=vmem, size = 0x12000, scoped, tag = 'internal scratch']
  %s0 = inlined_call_operand.hbm [shape: f32[8,128], index: 0, kind: input, shape index: {}]
  %s1 = inlined_call_operand.hbm [shape: f32[8,128], index: 1, kind: output, shape index: {}]
  %s2 = sld [smem:[#allocation0]]
  $region18: #{tpu_custom_call.1} parent=0
    _
  %s4 = ssub.s32 1, %s2
  %s5 = scalar_select 0, %s4, %s2
  $region1: #{tpu_custom_call.1} parent=0
    #allocation2 [shape = 'u8[4096]{0}', space=vmem, size = 0x1000, scoped, tag = 'input window, operand 0, single buffered']
    #allocation3 [shape = 's32[1]{0}', space=sflag, size = 0x4, scoped, tag = 'scoped memory for tpu_custom_call.1']
    #allocation4 [shape = 's32[1]{0}', space=sflag, size = 0x4, scoped, tag = 'scoped memory for tpu_custom_call.1']
    #allocation5 [shape = 'u8[4096]{0}', space=vmem, size = 0x1000, scoped, tag = 'output window, operand 0, single buffered']
    %6 = vsyncpa [#allocation3], 0
    %7 = vsyncpa [#allocation4], 0
    // Predicated region
    $region2: #{tpu_custom_call.1} parent=1 // pred_check
      _
    $region3: #{tpu_custom_call.1} parent=1 // pred_check_branch
      %9 = sbr.rel (0) target = $region5
    $region4: #{tpu_custom_call.1} parent=1 // pred_region
      %s11 = ssub.s32 128, 128
      %12 = vsyncadd [#allocation3], %s11
      %s14 = sshll.u32 [#allocation2], 4
      %s15 = int_to_ptr.vmem [resolvable:$true] %s14
      %17 = dma.hbm_to_vmem [thread:$0]  %s0, 128, %s15, [#allocation3]
    $region5: #{tpu_custom_call.1} parent=1 // pred_fallthru
      _
    // Predicated region
    $region6: #{tpu_custom_call.1} parent=1 // pred_check
      _
    $region7: #{tpu_custom_call.1} parent=1 // pred_check_branch
      %19 = sbr.rel (0) target = $region9
    $region8: #{tpu_custom_call.1} parent=1 // pred_region
      %20 = dma.done [#allocation3], 128
    $region9: #{tpu_custom_call.1} parent=1 // pred_fallthru
      _
    %v21 = vld [vmem:[#allocation2] sm:$0xff]
    %v22 = verf.f32.pop %v21
    %23 = vst [vmem:[#allocation5] sm:$0xff] %v22
    // Predicated region
    $region10: #{tpu_custom_call.1} parent=1 // pred_check
      _
    $region11: #{tpu_custom_call.1} parent=1 // pred_check_branch
      %25 = sbr.rel (0) target = $region13
    $region12: #{tpu_custom_call.1} parent=1 // pred_region
      %s27 = ssub.s32 128, 128
      %28 = vsyncadd [#allocation4], %s27
      %s30 = sshll.u32 [#allocation5], 4
      %s31 = int_to_ptr.vmem [resolvable:$true] %s30
      %33 = dma.vmem_to_hbm [thread:$0]  %s31, 128, %s1, [#allocation4]
    $region13: #{tpu_custom_call.1} parent=1 // pred_fallthru
      _
    // Predicated region
    $region14: #{tpu_custom_call.1} parent=1 // pred_check
      _
    $region15: #{tpu_custom_call.1} parent=1 // pred_check_branch
      %35 = sbr.rel (0) target = $region17
    $region16: #{tpu_custom_call.1} parent=1 // pred_region
      %36 = dma.done [#allocation4], 128
    $region17: #{tpu_custom_call.1} parent=1 // pred_fallthru
      _
    %37 = vsyncpa [#allocation3], 1
    %38 = vsyncpa [#allocation4], 1

// kernel: tpu_custom_call.1
$region0: #{tpu_custom_call.1}
  #allocation0 [shape = 'u32[]', space=smem, size = 0x4, offset = 0x4, fixed_abs, tag = 'smem constant byte address 0x4 - core index']
  #allocation1 [shape = 'u32[144,128]{1,0:T(1,128)}', space=vmem, size = 0x12000, scoped, tag = 'internal scratch']
  %s0 = inlined_call_operand.hbm [shape: f32[32,32], index: 0, kind: input, shape index: {}]
  %s1 = inlined_call_operand.hbm [shape: f32[32,32], index: 1, kind: input, shape index: {}]
  %s2 = inlined_call_operand.vmem [shape: f32[2,32,32], index: 2, kind: input, shape index: {}]
  %s3 = inlined_call_operand.hbm [shape: f32[2,2,32], index: 3, kind: input, shape index: {}]
  %s4 = inlined_call_operand.hbm [shape: f32[2,2,32], index: 4, kind: input, shape index: {}]
  %s5 = inlined_call_operand.vmem [shape: bf16[2,2,32,32], index: 5, kind: input, shape index: {}]
  %s6 = inlined_call_operand.hbm [shape: f32[2,2,32], index: 6, kind: input, shape index: {}]
  %s7 = inlined_call_operand.vmem [shape: bf16[2,2,32,32], index: 7, kind: input, shape index: {}]
  %s8 = inlined_call_operand.hbm [shape: f32[2,2,32], index: 8, kind: input, shape index: {}]
  %s9 = inlined_call_operand.hbm [shape: bf16[2,2,32,32], index: 9, kind: input, shape index: {}]
  %s10 = inlined_call_operand.hbm [shape: f32[2,2,32], index: 10, kind: input, shape index: {}]
  %s11 = inlined_call_operand.hbm [shape: bf16[2,8,8,32], index: 11, kind: input, shape index: {}]
  %s12 = inlined_call_operand.hbm [shape: f32[2,2,32], index: 12, kind: input, shape index: {}]
  %s13 = inlined_call_operand.hbm [shape: f32[2,2,32], index: 13, kind: input, shape index: {}]
  %s14 = inlined_call_operand.hbm [shape: f32[2,2,32], index: 14, kind: input, shape index: {}]
  %s15 = inlined_call_operand.hbm [shape: bf16[2,2,32,64], index: 15, kind: input, shape index: {}]
  %s16 = inlined_call_operand.hbm [shape: f32[2,2,64], index: 16, kind: input, shape index: {}]
  %s17 = inlined_call_operand.vmem [shape: bf16[2,2,64,32], index: 17, kind: input, shape index: {}]
  %s18 = inlined_call_operand.vmem [shape: f32[2,2,32], index: 18, kind: input, shape index: {}]
  %s19 = inlined_call_operand.vmem [shape: f32[1,32], index: 19, kind: input, shape index: {}]
  %s20 = inlined_call_operand.vmem [shape: f32[1,32], index: 20, kind: input, shape index: {}]
  %s21 = inlined_call_operand.hbm [shape: f32[2,32,32], index: 21, kind: output, shape index: {}]
  %s22 = sld [smem:[#allocation0]]
  $region173: #{tpu_custom_call.1} parent=0
    _
  %s24 = ssub.s32 1, %s22
  %s25 = scalar_select 0, %s24, %s22
  $region1: #{tpu_custom_call.1} parent=0
    #allocation2 [shape = 'u8[16384]{0}', space=vmem, size = 0x4000, scoped, tag = 'input window, operand 0, single buffered']
    #allocation3 [shape = 's32[2]{0}', space=sflag, size = 0x8, scoped, tag = 'scoped memory for tpu_custom_call.1']
    #allocation4 [shape = 's32[2]{0}', space=sflag, size = 0x8, scoped, tag = 'scoped memory for tpu_custom_call.1']
    #allocation5 [shape = 'u8[16384]{0}', space=vmem, size = 0x4000, scoped, tag = 'input window, operand 1, single buffered']
    #allocation6 [shape = 's32[1]{0}', space=sflag, size = 0x4, scoped, tag = 'scoped memory for tpu_custom_call.1']
    #allocation7 [shape = 'u8[2048]{0}', space=vmem, size = 0x800, scoped, tag = 'input window, operand 3']
    #allocation8 [shape = 'u8[2048]{0}', space=vmem, size = 0x800, scoped, tag = 'input window, operand 4']
    #allocation9 [shape = 'u8[2048]{0}', space=vmem, size = 0x800, scoped, tag = 'input window, operand 6']
    #allocation10 [shape = 'u8[2048]{0}', space=vmem, size = 0x800, scoped, tag = 'input window, operand 8']
    #allocation11 [shape = 'u8[32768]{0}', space=vmem, size = 0x8000, scoped, tag = 'input window, operand 9']
    #allocation12 [shape = 'u8[2048]{0}', space=vmem, size = 0x800, scoped, tag = 'input window, operand 10']
    #allocation13 [shape = 'u8[32768]{0}', space=vmem, size = 0x8000, scoped, tag = 'input window, operand 11']
    #allocation14 [shape = 'u8[2048]{0}', space=vmem, size = 0x800, scoped, tag = 'input window, operand 12']
    #allocation15 [shape = 'u8[2048]{0}', space=vmem, size = 0x800, scoped, tag = 'input window, operand 13']
    #allocation16 [shape = 'u8[2048]{0}', space=vmem, size = 0x800, scoped, tag = 'input window, operand 14']
    #allocation17 [shape = 'u8[32768]{0}', space=vmem, size = 0x8000, scoped, tag = 'input window, operand 15']
    #allocation18 [shape = 'u8[2048]{0}', space=vmem, size = 0x800, scoped, tag = 'input window, operand 16']
    #allocation19 [shape = 'u8[32768]{0}', space=vmem, size = 0x8000, scoped, tag = 'output window, operand 0']
    %26 = vsyncpa [#allocation3], 0
    %27 = vsyncpa [#allocation6], 0
    %28 = vsyncpa [#allocation4], 0
    %s29 = scalar_lea.sflag [#allocation4], 1
    %30 = vsyncpa %s29, 0
    loop: start=0, step=1, limit=4
    $region2: #{tpu_custom_call.1} parent=1 // loop_pre_header
      _
    $region3: #{tpu_custom_call.1} parent=1 // loop_header
      %s32 = sphi 0, %s36
      %p33 = scmp.ge.s32.totalorder %s32, 4
      %s40 = sphi 0, %s40
      %s42 = sphi 0, %s40
      %s43 = sphi 0, %s42
      %s57 = sphi 0, %s43
      %s61 = sphi 0, %s61
      %s63 = sphi 0, %s61
      %s64 = sphi 0, %s63
      %s78 = sphi 0, %s64
      %s84 = sphi 0, %s86
      %s87 = sphi 0, %s84
      %s88 = sphi 0, %s87
      %s104 = sphi 0, %s88
      %s110 = sphi 0, %s112
      %s113 = sphi 0, %s110
      %s114 = sphi 0, %s113
      %s130 = sphi 0, %s114
      %s136 = sphi 0, %s138
      %s139 = sphi 0, %s136
      %s140 = sphi 0, %s139
      %s156 = sphi 0, %s140
      %s162 = sphi 0, %s164
      %s165 = sphi 0, %s162
      %s166 = sphi 0, %s165
      %s182 = sphi 0, %s166
      %s188 = sphi 0, %s190
      %s191 = sphi 0, %s188
      %s192 = sphi 0, %s191
      %s208 = sphi 0, %s192
      %s214 = sphi 0, %s216
      %s217 = sphi 0, %s214
      %s218 = sphi 0, %s217
      %s234 = sphi 0, %s218
      %s240 = sphi 0, %s242
      %s243 = sphi 0, %s240
      %s244 = sphi 0, %s243
      %s260 = sphi 0, %s244
      %s266 = sphi 0, %s268
      %s269 = sphi 0, %s266
      %s270 = sphi 0, %s269
      %s286 = sphi 0, %s270
      %s292 = sphi 0, %s294
      %s295 = sphi 0, %s292
      %s296 = sphi 0, %s295
      %s312 = sphi 0, %s296
      %s318 = sphi 0, %s320
      %s321 = sphi 0, %s318
      %s322 = sphi 0, %s321
      %s338 = sphi 0, %s322
      %s344 = sphi 0, %s346
      %s347 = sphi 0, %s344
      %s348 = sphi 0, %s347
      %s364 = sphi 0, %s348
      %s370 = sphi 0, %s372
      %s373 = sphi 0, %s370
      %s374 = sphi 0, %s373
      %s390 = sphi 0, %s374
      %s396 = sphi 0, %s398
      %s399 = sphi 0, %s396
      %s400 = sphi 0, %s399
      %s416 = sphi 0, %s400
      %s422 = sphi 0, %s424
      %s425 = sphi 0, %s422
      %s426 = sphi 0, %s425
      %s442 = sphi 0, %s426
      %s448 = sphi 0, %s450
      %s451 = sphi 0, %s448
      %s452 = sphi 0, %s451
      %s468 = sphi 0, %s452
      %s474 = sphi 0, %s476
      %s477 = sphi 0, %s474
      %s478 = sphi 0, %s477
      %s494 = sphi 0, %s478
      %s500 = sphi 0, %s502
      %s503 = sphi 0, %s500
      %s504 = sphi 0, %s503
      %s520 = sphi 0, %s504
      %s524 = sphi 0, %s524
      %s526 = sphi 0, %s524
      %s527 = sphi 0, %s526
      %s541 = sphi 0, %s527
      %s545 = sphi 0, %s545
      %s547 = sphi 0, %s545
      %s548 = sphi 0, %s547
      %s562 = sphi 0, %s548
      %s568 = sphi 0, %s570
      %s571 = sphi 0, %s568
      %s572 = sphi 0, %s571
      %s588 = sphi 0, %s572
    $region4: #{tpu_custom_call.1} parent=1 // loop_header_branch
      %35 = sbr.rel (%p33) target = $region8
    $region5: #{tpu_custom_call.1} parent=1 // loop_body
      %s37 = ssub.s32 %s32, 1
      %s38 = ssub.s32 %s32, 2
      %s39 = sadd.s32 %s32, 1
      %s41 = sadd.s32 %s40, 1
      %p44 = scmp.eq.s32.totalorder %s32, 1
      %p45 = scmp.ne.s32.totalorder %s40, %s42
      %p46 = scmp.eq.s32.totalorder %s32, 0
      %p47 = por %p45, %p46
      %p48 = scmp.ne.s32.totalorder %s40, %s42
      %p49 = scmp.eq.s32.totalorder %s37, 1
      %p50 = por %p48, %p49
      %p51 = scmp.ne.s32.totalorder %s42, %s43
      %p52 = scmp.eq.s32.totalorder %s37, 0
      %p53 = por %p51, %p52
      %p54 = scmp.ne.s32.totalorder %s42, %s43
      %p55 = scmp.eq.s32.totalorder %s38, 1
      %p56 = por %p54, %p55
      %p58 = scmp.ne.s32.totalorder %s43, %s57
      %p59 = scmp.eq.s32.totalorder %s38, 0
      %p60 = por %p58, %p59
      %s62 = sadd.s32 %s61, 1
      %p65 = scmp.eq.s32.totalorder %s32, 1
      %p66 = scmp.ne.s32.totalorder %s61, %s63
      %p67 = scmp.eq.s32.totalorder %s32, 0
      %p68 = por %p66, %p67
      %p69 = scmp.ne.s32.totalorder %s61, %s63
      %p70 = scmp.eq.s32.totalorder %s37, 1
      %p71 = por %p69, %p70
      %p72 = scmp.ne.s32.totalorder %s63, %s64
      %p73 = scmp.eq.s32.totalorder %s37, 0
      %p74 = por %p72, %p73
      %p75 = scmp.ne.s32.totalorder %s63, %s64
      %p76 = scmp.eq.s32.totalorder %s38, 1
      %p77 = por %p75, %p76
      %p79 = scmp.ne.s32.totalorder %s64, %s78
      %p80 = scmp.eq.s32.totalorder %s38, 0
      %p81 = por %p79, %p80
      %s82 = ssub.s32 %s32, %s39
      %p83 = scmp.eq.s32.totalorder %s82, 0
      %s85 = sadd.s32 %s84, 1
      %s86 = scalar_select %p83, %s84, %s85
      %p89 = pneg %p83
      %p90 = scmp.eq.s32.totalorder %s32, 1
      %p91 = por %p89, %p90
      %p92 = scmp.ne.s32.totalorder %s84, %s87
      %p93 = scmp.eq.s32.totalorder %s32, 0
      %p94 = por %p92, %p93
      %p95 = scmp.ne.s32.totalorder %s84, %s87
      %p96 = scmp.eq.s32.totalorder %s37, 1
      %p97 = por %p95, %p96
      %p98 = scmp.ne.s32.totalorder %s87, %s88
      %p99 = scmp.eq.s32.totalorder %s37, 0
      %p100 = por %p98, %p99
      %p101 = scmp.ne.s32.totalorder %s87, %s88
      %p102 = scmp.eq.s32.totalorder %s38, 1
      %p103 = por %p101, %p102
      %p105 = scmp.ne.s32.totalorder %s88, %s104
      %p106 = scmp.eq.s32.totalorder %s38, 0
      %p107 = por %p105, %p106
      %s108 = ssub.s32 %s32, %s39
      %p109 = scmp.eq.s32.totalorder %s108, 0
      %s111 = sadd.s32 %s110, 1
      %s112 = scalar_select %p109, %s110, %s111
      %p115 = pneg %p109
      %p116 = scmp.eq.s32.totalorder %s32, 1
      %p117 = por %p115, %p116
      %p118 = scmp.ne.s32.totalorder %s110, %s113
      %p119 = scmp.eq.s32.totalorder %s32, 0
      %p120 = por %p118, %p119
      %p121 = scmp.ne.s32.totalorder %s110, %s113
      %p122 = scmp.eq.s32.totalorder %s37, 1
      %p123 = por %p121, %p122
      %p124 = scmp.ne.s32.totalorder %s113, %s114
      %p125 = scmp.eq.s32.totalorder %s37, 0
      %p126 = por %p124, %p125
      %p127 = scmp.ne.s32.totalorder %s113, %s114
      %p128 = scmp.eq.s32.totalorder %s38, 1
      %p129 = por %p127, %p128
      %p131 = scmp.ne.s32.totalorder %s114, %s130
      %p132 = scmp.eq.s32.totalorder %s38, 0
      %p133 = por %p131, %p132
      %s134 = ssub.s32 %s32, %s39
      %p135 = scmp.eq.s32.totalorder %s134, 0
      %s137 = sadd.s32 %s136, 1
      %s138 = scalar_select %p135, %s136, %s137
      %p141 = pneg %p135
      %p142 = scmp.eq.s32.totalorder %s32, 1
      %p143 = por %p141, %p142
      %p144 = scmp.ne.s32.totalorder %s136, %s139
      %p145 = scmp.eq.s32.totalorder %s32, 0
      %p146 = por %p144, %p145
      %p147 = scmp.ne.s32.totalorder %s136, %s139
      %p148 = scmp.eq.s32.totalorder %s37, 1
      %p149 = por %p147, %p148
      %p150 = scmp.ne.s32.totalorder %s139, %s140
      %p151 = scmp.eq.s32.totalorder %s37, 0
      %p152 = por %p150, %p151
      %p153 = scmp.ne.s32.totalorder %s139, %s140
      %p154 = scmp.eq.s32.totalorder %s38, 1
      %p155 = por %p153, %p154
      %p157 = scmp.ne.s32.totalorder %s140, %s156
      %p158 = scmp.eq.s32.totalorder %s38, 0
      %p159 = por %p157, %p158
      %s160 = ssub.s32 %s32, %s39
      %p161 = scmp.eq.s32.totalorder %s160, 0
      %s163 = sadd.s32 %s162, 1
      %s164 = scalar_select %p161, %s162, %s163
      %p167 = pneg %p161
      %p168 = scmp.eq.s32.totalorder %s32, 1
      %p169 = por %p167, %p168
      %p170 = scmp.ne.s32.totalorder %s162, %s165
      %p171 = scmp.eq.s32.totalorder %s32, 0
      %p172 = por %p170, %p171
      %p173 = scmp.ne.s32.totalorder %s162, %s165
      %p174 = scmp.eq.s32.totalorder %s37, 1
      %p175 = por %p173, %p174
      %p176 = scmp.ne.s32.totalorder %s165, %s166
      %p177 = scmp.eq.s32.totalorder %s37, 0
      %p178 = por %p176, %p177
      %p179 = scmp.ne.s32.totalorder %s165, %s166
      %p180 = scmp.eq.s32.totalorder %s38, 1
      %p181 = por %p179, %p180
      %p183 = scmp.ne.s32.totalorder %s166, %s182
      %p184 = scmp.eq.s32.totalorder %s38, 0
      %p185 = por %p183, %p184
      %s186 = ssub.s32 %s32, %s39
      %p187 = scmp.eq.s32.totalorder %s186, 0
      %s189 = sadd.s32 %s188, 1
      %s190 = scalar_select %p187, %s188, %s189
      %p193 = pneg %p187
      %p194 = scmp.eq.s32.totalorder %s32, 1
      %p195 = por %p193, %p194
      %p196 = scmp.ne.s32.totalorder %s188, %s191
      %p197 = scmp.eq.s32.totalorder %s32, 0
      %p198 = por %p196, %p197
      %p199 = scmp.ne.s32.totalorder %s188, %s191
      %p200 = scmp.eq.s32.totalorder %s37, 1
      %p201 = por %p199, %p200
      %p202 = scmp.ne.s32.totalorder %s191, %s192
      %p203 = scmp.eq.s32.totalorder %s37, 0
      %p204 = por %p202, %p203
      %p205 = scmp.ne.s32.totalorder %s191, %s192
      %p206 = scmp.eq.s32.totalorder %s38, 1
      %p207 = por %p205, %p206
      %p209 = scmp.ne.s32.totalorder %s192, %s208
      %p210 = scmp.eq.s32.totalorder %s38, 0
      %p211 = por %p209, %p210
      %s212 = ssub.s32 %s32, %s39
      %p213 = scmp.eq.s32.totalorder %s212, 0
      %s215 = sadd.s32 %s214, 1
      %s216 = scalar_select %p213, %s214, %s215
      %p219 = pneg %p213
      %p220 = scmp.eq.s32.totalorder %s32, 1
      %p221 = por %p219, %p220
      %p222 = scmp.ne.s32.totalorder %s214, %s217
      %p223 = scmp.eq.s32.totalorder %s32, 0
      %p224 = por %p222, %p223
      %p225 = scmp.ne.s32.totalorder %s214, %s217
      %p226 = scmp.eq.s32.totalorder %s37, 1
      %p227 = por %p225, %p226
      %p228 = scmp.ne.s32.totalorder %s217, %s218
      %p229 = scmp.eq.s32.totalorder %s37, 0
      %p230 = por %p228, %p229
      %p231 = scmp.ne.s32.totalorder %s217, %s218
      %p232 = scmp.eq.s32.totalorder %s38, 1
      %p233 = por %p231, %p232
      %p235 = scmp.ne.s32.totalorder %s218, %s234
      %p236 = scmp.eq.s32.totalorder %s38, 0
      %p237 = por %p235, %p236
      %s238 = ssub.s32 %s32, %s39
      %p239 = scmp.eq.s32.totalorder %s238, 0
      %s241 = sadd.s32 %s240, 1
      %s242 = scalar_select %p239, %s240, %s241
      %p245 = pneg %p239
      %p246 = scmp.eq.s32.totalorder %s32, 1
      %p247 = por %p245, %p246
      %p248 = scmp.ne.s32.totalorder %s240, %s243
      %p249 = scmp.eq.s32.totalorder %s32, 0
      %p250 = por %p248, %p249
      %p251 = scmp.ne.s32.totalorder %s240, %s243
      %p252 = scmp.eq.s32.totalorder %s37, 1
      %p253 = por %p251, %p252
      %p254 = scmp.ne.s32.totalorder %s243, %s244
      %p255 = scmp.eq.s32.totalorder %s37, 0
      %p256 = por %p254, %p255
      %p257 = scmp.ne.s32.totalorder %s243, %s244
      %p258 = scmp.eq.s32.totalorder %s38, 1
      %p259 = por %p257, %p258
      %p261 = scmp.ne.s32.totalorder %s244, %s260
      %p262 = scmp.eq.s32.totalorder %s38, 0
      %p263 = por %p261, %p262
      %s264 = ssub.s32 %s32, %s39
      %p265 = scmp.eq.s32.totalorder %s264, 0
      %s267 = sadd.s32 %s266, 1
      %s268 = scalar_select %p265, %s266, %s267
      %p271 = pneg %p265
      %p272 = scmp.eq.s32.totalorder %s32, 1
      %p273 = por %p271, %p272
      %p274 = scmp.ne.s32.totalorder %s266, %s269
      %p275 = scmp.eq.s32.totalorder %s32, 0
      %p276 = por %p274, %p275
      %p277 = scmp.ne.s32.totalorder %s266, %s269
      %p278 = scmp.eq.s32.totalorder %s37, 1
      %p279 = por %p277, %p278
      %p280 = scmp.ne.s32.totalorder %s269, %s270
      %p281 = scmp.eq.s32.totalorder %s37, 0
      %p282 = por %p280, %p281
      %p283 = scmp.ne.s32.totalorder %s269, %s270
      %p284 = scmp.eq.s32.totalorder %s38, 1
      %p285 = por %p283, %p284
      %p287 = scmp.ne.s32.totalorder %s270, %s286
      %p288 = scmp.eq.s32.totalorder %s38, 0
      %p289 = por %p287, %p288
      %s290 = ssub.s32 %s32, %s39
      %p291 = scmp.eq.s32.totalorder %s290, 0
      %s293 = sadd.s32 %s292, 1
      %s294 = scalar_select %p291, %s292, %s293
      %p297 = pneg %p291
      %p298 = scmp.eq.s32.totalorder %s32, 1
      %p299 = por %p297, %p298
      %p300 = scmp.ne.s32.totalorder %s292, %s295
      %p301 = scmp.eq.s32.totalorder %s32, 0
      %p302 = por %p300, %p301
      %p303 = scmp.ne.s32.totalorder %s292, %s295
      %p304 = scmp.eq.s32.totalorder %s37, 1
      %p305 = por %p303, %p304
      %p306 = scmp.ne.s32.totalorder %s295, %s296
      %p307 = scmp.eq.s32.totalorder %s37, 0
      %p308 = por %p306, %p307
      %p309 = scmp.ne.s32.totalorder %s295, %s296
      %p310 = scmp.eq.s32.totalorder %s38, 1
      %p311 = por %p309, %p310
      %p313 = scmp.ne.s32.totalorder %s296, %s312
      %p314 = scmp.eq.s32.totalorder %s38, 0
      %p315 = por %p313, %p314
      %s316 = ssub.s32 %s32, %s39
      %p317 = scmp.eq.s32.totalorder %s316, 0
      %s319 = sadd.s32 %s318, 1
      %s320 = scalar_select %p317, %s318, %s319
      %p323 = pneg %p317
      %p324 = scmp.eq.s32.totalorder %s32, 1
      %p325 = por %p323, %p324
      %p326 = scmp.ne.s32.totalorder %s318, %s321
      %p327 = scmp.eq.s32.totalorder %s32, 0
      %p328 = por %p326, %p327
      %p329 = scmp.ne.s32.totalorder %s318, %s321
      %p330 = scmp.eq.s32.totalorder %s37, 1
      %p331 = por %p329, %p330
      %p332 = scmp.ne.s32.totalorder %s321, %s322
      %p333 = scmp.eq.s32.totalorder %s37, 0
      %p334 = por %p332, %p333
      %p335 = scmp.ne.s32.totalorder %s321, %s322
      %p336 = scmp.eq.s32.totalorder %s38, 1
      %p337 = por %p335, %p336
      %p339 = scmp.ne.s32.totalorder %s322, %s338
      %p340 = scmp.eq.s32.totalorder %s38, 0
      %p341 = por %p339, %p340
      %s342 = ssub.s32 %s32, %s39
      %p343 = scmp.eq.s32.totalorder %s342, 0
      %s345 = sadd.s32 %s344, 1
      %s346 = scalar_select %p343, %s344, %s345
      %p349 = pneg %p343
      %p350 = scmp.eq.s32.totalorder %s32, 1
      %p351 = por %p349, %p350
      %p352 = scmp.ne.s32.totalorder %s344, %s347
      %p353 = scmp.eq.s32.totalorder %s32, 0
      %p354 = por %p352, %p353
      %p355 = scmp.ne.s32.totalorder %s344, %s347
      %p356 = scmp.eq.s32.totalorder %s37, 1
      %p357 = por %p355, %p356
      %p358 = scmp.ne.s32.totalorder %s347, %s348
      %p359 = scmp.eq.s32.totalorder %s37, 0
      %p360 = por %p358, %p359
      %p361 = scmp.ne.s32.totalorder %s347, %s348
      %p362 = scmp.eq.s32.totalorder %s38, 1
      %p363 = por %p361, %p362
      %p365 = scmp.ne.s32.totalorder %s348, %s364
      %p366 = scmp.eq.s32.totalorder %s38, 0
      %p367 = por %p365, %p366
      %s368 = ssub.s32 %s32, %s39
      %p369 = scmp.eq.s32.totalorder %s368, 0
      %s371 = sadd.s32 %s370, 1
      %s372 = scalar_select %p369, %s370, %s371
      %p375 = pneg %p369
      %p376 = scmp.eq.s32.totalorder %s32, 1
      %p377 = por %p375, %p376
      %p378 = scmp.ne.s32.totalorder %s370, %s373
      %p379 = scmp.eq.s32.totalorder %s32, 0
      %p380 = por %p378, %p379
      %p381 = scmp.ne.s32.totalorder %s370, %s373
      %p382 = scmp.eq.s32.totalorder %s37, 1
      %p383 = por %p381, %p382
      %p384 = scmp.ne.s32.totalorder %s373, %s374
      %p385 = scmp.eq.s32.totalorder %s37, 0
      %p386 = por %p384, %p385
      %p387 = scmp.ne.s32.totalorder %s373, %s374
      %p388 = scmp.eq.s32.totalorder %s38, 1
      %p389 = por %p387, %p388
      %p391 = scmp.ne.s32.totalorder %s374, %s390
      %p392 = scmp.eq.s32.totalorder %s38, 0
      %p393 = por %p391, %p392
      %s394 = ssub.s32 %s32, %s39
      %p395 = scmp.eq.s32.totalorder %s394, 0
      %s397 = sadd.s32 %s396, 1
      %s398 = scalar_select %p395, %s396, %s397
      %p401 = pneg %p395
      %p402 = scmp.eq.s32.totalorder %s32, 1
      %p403 = por %p401, %p402
      %p404 = scmp.ne.s32.totalorder %s396, %s399
      %p405 = scmp.eq.s32.totalorder %s32, 0
      %p406 = por %p404, %p405
      %p407 = scmp.ne.s32.totalorder %s396, %s399
      %p408 = scmp.eq.s32.totalorder %s37, 1
      %p409 = por %p407, %p408
      %p410 = scmp.ne.s32.totalorder %s399, %s400
      %p411 = scmp.eq.s32.totalorder %s37, 0
      %p412 = por %p410, %p411
      %p413 = scmp.ne.s32.totalorder %s399, %s400
      %p414 = scmp.eq.s32.totalorder %s38, 1
      %p415 = por %p413, %p414
      %p417 = scmp.ne.s32.totalorder %s400, %s416
      %p418 = scmp.eq.s32.totalorder %s38, 0
      %p419 = por %p417, %p418
      %s420 = ssub.s32 %s32, %s39
      %p421 = scmp.eq.s32.totalorder %s420, 0
      %s423 = sadd.s32 %s422, 1
      %s424 = scalar_select %p421, %s422, %s423
      %p427 = pneg %p421
      %p428 = scmp.eq.s32.totalorder %s32, 1
      %p429 = por %p427, %p428
      %p430 = scmp.ne.s32.totalorder %s422, %s425
      %p431 = scmp.eq.s32.totalorder %s32, 0
      %p432 = por %p430, %p431
      %p433 = scmp.ne.s32.totalorder %s422, %s425
      %p434 = scmp.eq.s32.totalorder %s37, 1
      %p435 = por %p433, %p434
      %p436 = scmp.ne.s32.totalorder %s425, %s426
      %p437 = scmp.eq.s32.totalorder %s37, 0
      %p438 = por %p436, %p437
      %p439 = scmp.ne.s32.totalorder %s425, %s426
      %p440 = scmp.eq.s32.totalorder %s38, 1
      %p441 = por %p439, %p440
      %p443 = scmp.ne.s32.totalorder %s426, %s442
      %p444 = scmp.eq.s32.totalorder %s38, 0
      %p445 = por %p443, %p444
      %s446 = ssub.s32 %s32, %s39
      %p447 = scmp.eq.s32.totalorder %s446, 0
      %s449 = sadd.s32 %s448, 1
      %s450 = scalar_select %p447, %s448, %s449
      %p453 = pneg %p447
      %p454 = scmp.eq.s32.totalorder %s32, 1
      %p455 = por %p453, %p454
      %p456 = scmp.ne.s32.totalorder %s448, %s451
      %p457 = scmp.eq.s32.totalorder %s32, 0
      %p458 = por %p456, %p457
      %p459 = scmp.ne.s32.totalorder %s448, %s451
      %p460 = scmp.eq.s32.totalorder %s37, 1
      %p461 = por %p459, %p460
      %p462 = scmp.ne.s32.totalorder %s451, %s452
      %p463 = scmp.eq.s32.totalorder %s37, 0
      %p464 = por %p462, %p463
      %p465 = scmp.ne.s32.totalorder %s451, %s452
      %p466 = scmp.eq.s32.totalorder %s38, 1
      %p467 = por %p465, %p466
      %p469 = scmp.ne.s32.totalorder %s452, %s468
      %p470 = scmp.eq.s32.totalorder %s38, 0
      %p471 = por %p469, %p470
      %s472 = ssub.s32 %s32, %s39
      %p473 = scmp.eq.s32.totalorder %s472, 0
      %s475 = sadd.s32 %s474, 1
      %s476 = scalar_select %p473, %s474, %s475
      %p479 = pneg %p473
      %p480 = scmp.eq.s32.totalorder %s32, 1
      %p481 = por %p479, %p480
      %p482 = scmp.ne.s32.totalorder %s474, %s477
      %p483 = scmp.eq.s32.totalorder %s32, 0
      %p484 = por %p482, %p483
      %p485 = scmp.ne.s32.totalorder %s474, %s477
      %p486 = scmp.eq.s32.totalorder %s37, 1
      %p487 = por %p485, %p486
      %p488 = scmp.ne.s32.totalorder %s477, %s478
      %p489 = scmp.eq.s32.totalorder %s37, 0
      %p490 = por %p488, %p489
      %p491 = scmp.ne.s32.totalorder %s477, %s478
      %p492 = scmp.eq.s32.totalorder %s38, 1
      %p493 = por %p491, %p492
      %p495 = scmp.ne.s32.totalorder %s478, %s494
      %p496 = scmp.eq.s32.totalorder %s38, 0
      %p497 = por %p495, %p496
      %s498 = ssub.s32 %s32, %s39
      %p499 = scmp.eq.s32.totalorder %s498, 0
      %s501 = sadd.s32 %s500, 1
      %s502 = scalar_select %p499, %s500, %s501
      %p505 = pneg %p499
      %p506 = scmp.eq.s32.totalorder %s32, 1
      %p507 = por %p505, %p506
      %p508 = scmp.ne.s32.totalorder %s500, %s503
      %p509 = scmp.eq.s32.totalorder %s32, 0
      %p510 = por %p508, %p509
      %p511 = scmp.ne.s32.totalorder %s500, %s503
      %p512 = scmp.eq.s32.totalorder %s37, 1
      %p513 = por %p511, %p512
      %p514 = scmp.ne.s32.totalorder %s503, %s504
      %p515 = scmp.eq.s32.totalorder %s37, 0
      %p516 = por %p514, %p515
      %p517 = scmp.ne.s32.totalorder %s503, %s504
      %p518 = scmp.eq.s32.totalorder %s38, 1
      %p519 = por %p517, %p518
      %p521 = scmp.ne.s32.totalorder %s504, %s520
      %p522 = scmp.eq.s32.totalorder %s38, 0
      %p523 = por %p521, %p522
      %s525 = sadd.s32 %s524, 1
      %p528 = scmp.eq.s32.totalorder %s32, 1
      %p529 = scmp.ne.s32.totalorder %s524, %s526
      %p530 = scmp.eq.s32.totalorder %s32, 0
      %p531 = por %p529, %p530
      %p532 = scmp.ne.s32.totalorder %s524, %s526
      %p533 = scmp.eq.s32.totalorder %s37, 1
      %p534 = por %p532, %p533
      %p535 = scmp.ne.s32.totalorder %s526, %s527
      %p536 = scmp.eq.s32.totalorder %s37, 0
      %p537 = por %p535, %p536
      %p538 = scmp.ne.s32.totalorder %s526, %s527
      %p539 = scmp.eq.s32.totalorder %s38, 1
      %p540 = por %p538, %p539
      %p542 = scmp.ne.s32.totalorder %s527, %s541
      %p543 = scmp.eq.s32.totalorder %s38, 0
      %p544 = por %p542, %p543
      %s546 = sadd.s32 %s545, 1
      %p549 = scmp.eq.s32.totalorder %s32, 1
      %p550 = scmp.ne.s32.totalorder %s545, %s547
      %p551 = scmp.eq.s32.totalorder %s32, 0
      %p552 = por %p550, %p551
      %p553 = scmp.ne.s32.totalorder %s545, %s547
      %p554 = scmp.eq.s32.totalorder %s37, 1
      %p555 = por %p553, %p554
      %p556 = scmp.ne.s32.totalorder %s547, %s548
      %p557 = scmp.eq.s32.totalorder %s37, 0
      %p558 = por %p556, %p557
      %p559 = scmp.ne.s32.totalorder %s547, %s548
      %p560 = scmp.eq.s32.totalorder %s38, 1
      %p561 = por %p559, %p560
      %p563 = scmp.ne.s32.totalorder %s548, %s562
      %p564 = scmp.eq.s32.totalorder %s38, 0
      %p565 = por %p563, %p564
      %s566 = ssub.s32 %s32, %s39
      %p567 = scmp.eq.s32.totalorder %s566, 0
      %s569 = sadd.s32 %s568, 1
      %s570 = scalar_select %p567, %s568, %s569
      %p573 = pneg %p567
      %p574 = scmp.eq.s32.totalorder %s32, 1
      %p575 = por %p573, %p574
      %p576 = scmp.ne.s32.totalorder %s568, %s571
      %p577 = scmp.eq.s32.totalorder %s32, 0
      %p578 = por %p576, %p577
      %p579 = scmp.ne.s32.totalorder %s568, %s571
      %p580 = scmp.eq.s32.totalorder %s37, 1
      %p581 = por %p579, %p580
      %p582 = scmp.ne.s32.totalorder %s571, %s572
      %p583 = scmp.eq.s32.totalorder %s37, 0
      %p584 = por %p582, %p583
      %p585 = scmp.ne.s32.totalorder %s571, %s572
      %p586 = scmp.eq.s32.totalorder %s38, 1
      %p587 = por %p585, %p586
      %p589 = scmp.ne.s32.totalorder %s572, %s588
      %p590 = scmp.eq.s32.totalorder %s38, 0
      %p591 = por %p589, %p590
      %p592 = scmp.le.s32.totalorder 1, %s32
      %p593 = scmp.lt.s32.totalorder %s32, 3
      %p594 = pnand %p592, %p593
      %p595 = pneg %p594
      // Predicated region
      $region9: #{tpu_custom_call.1} parent=5 // pred_check
        _
      $region10: #{tpu_custom_call.1} parent=5 // pred_check_branch
        %597 = sbr.rel (%p594) target = $region12
      $region11: #{tpu_custom_call.1} parent=5 // pred_region
        %s598 = ssub.s32 %s32, 1
        // Predicated region
        $region13: #{tpu_custom_call.1} parent=11 // pred_check
          %p599 = pneg %p53
        $region14: #{tpu_custom_call.1} parent=11 // pred_check_branch
          %601 = sbr.rel (%p599) target = $region16
        $region15: #{tpu_custom_call.1} parent=11 // pred_region
          %s603 = ssub.s32 512, 512
          %604 = vsyncadd [#allocation3], %s603
          %s605 = sshll.u32 [#allocation2], 4
          %s606 = int_to_ptr.vmem [resolvable:$true] %s605
          %611 = dma.hbm_to_vmem [thread:$0]  %s0, 512, %s606, [#allocation3], 128, 128, 8
        $region16: #{tpu_custom_call.1} parent=11 // pred_fallthru
          _
        // Predicated region
        $region17: #{tpu_custom_call.1} parent=11 // pred_check
          %p612 = pneg %p74
        $region18: #{tpu_custom_call.1} parent=11 // pred_check_branch
          %614 = sbr.rel (%p612) target = $region20
        $region19: #{tpu_custom_call.1} parent=11 // pred_region
          %s616 = ssub.s32 512, 512
          %617 = vsyncadd [#allocation6], %s616
          %s618 = sshll.u32 [#allocation5], 4
          %s619 = int_to_ptr.vmem [resolvable:$true] %s618
          %624 = dma.hbm_to_vmem [thread:$0]  %s1, 512, %s619, [#allocation6], 128, 128, 8
        $region20: #{tpu_custom_call.1} parent=11 // pred_fallthru
          _
        // Predicated region
        $region21: #{tpu_custom_call.1} parent=11 // pred_check
          %p625 = pneg %p537
        $region22: #{tpu_custom_call.1} parent=11 // pred_check_branch
          %627 = sbr.rel (%p625) target = $region24
        $region23: #{tpu_custom_call.1} parent=11 // pred_region
          _
        $region24: #{tpu_custom_call.1} parent=11 // pred_fallthru
          _
        // Predicated region
        $region25: #{tpu_custom_call.1} parent=11 // pred_check
          %p628 = pneg %p558
        $region26: #{tpu_custom_call.1} parent=11 // pred_check_branch
          %630 = sbr.rel (%p628) target = $region28
        $region27: #{tpu_custom_call.1} parent=11 // pred_region
          _
        $region28: #{tpu_custom_call.1} parent=11 // pred_fallthru
          _
      $region12: #{tpu_custom_call.1} parent=5 // pred_fallthru
        _
      %p631 = scmp.lt.s32.totalorder %s32, 2
      // Predicated region
      $region29: #{tpu_custom_call.1} parent=5 // pred_check
        %p632 = pneg %p631
      $region30: #{tpu_custom_call.1} parent=5 // pred_check_branch
        %634 = sbr.rel (%p632) target = $region32
      $region31: #{tpu_custom_call.1} parent=5 // pred_region
        // Predicated region
        $region33: #{tpu_custom_call.1} parent=31 // pred_check
          %p635 = pneg %p94
        $region34: #{tpu_custom_call.1} parent=31 // pred_check_branch
          %637 = sbr.rel (%p635) target = $region36
        $region35: #{tpu_custom_call.1} parent=31 // pred_region
          %p638 = scmp.lt.s32.totalorder %s32, 1
          %s639 = scalar_select %p638, %s32, 1
          %s640 = smul.addr %s639, 4
          %s641 = smul.addr %s640, 8
          %s642 = scalar_lea.vmem %s2, %s641
        $region36: #{tpu_custom_call.1} parent=31 // pred_fallthru
          _
        // Predicated region
        $region37: #{tpu_custom_call.1} parent=31 // pred_check
          %p643 = pneg %p120
        $region38: #{tpu_custom_call.1} parent=31 // pred_check_branch
          %645 = sbr.rel (%p643) target = $region40
        $region39: #{tpu_custom_call.1} parent=31 // pred_region
          %s646 = sand.u32 %s32, 1
          %s647 = scalar_lea.sflag [#allocation3], %s646
          %s648 = sand.u32 %s110, 1
          %s649 = smul.addr %s648, 2
          %s650 = scalar_lea.vmem [#allocation7], %s649
          %s652 = ssub.s32 32, 32
          %653 = vsyncadd %s647, %s652
          %s654 = smul.addr %s32, 32
          %s655 = scalar_lea.hbm %s3, %s654
          %s657 = sshll.u32 %s650, 4
          %s658 = int_to_ptr.vmem [resolvable:$true] %s657
          %660 = dma.hbm_to_vmem [thread:$0]  %s655, 32, %s658, %s647
        $region40: #{tpu_custom_call.1} parent=31 // pred_fallthru
          _
        // Predicated region
        $region41: #{tpu_custom_call.1} parent=31 // pred_check
          %p661 = pneg %p146
        $region42: #{tpu_custom_call.1} parent=31 // pred_check_branch
          %663 = sbr.rel (%p661) target = $region44
        $region43: #{tpu_custom_call.1} parent=31 // pred_region
          %s664 = sand.u32 %s32, 1
          %s665 = scalar_lea.sflag [#allocation3], %s664
          %s666 = sand.u32 %s136, 1
          %s667 = smul.addr %s666, 2
          %s668 = scalar_lea.vmem [#allocation8], %s667
          %s670 = ssub.s32 32, 32
          %671 = vsyncadd %s665, %s670
          %s672 = smul.addr %s32, 32
          %s673 = scalar_lea.hbm %s4, %s672
          %s675 = sshll.u32 %s668, 4
          %s676 = int_to_ptr.vmem [resolvable:$true] %s675
          %678 = dma.hbm_to_vmem [thread:$0]  %s673, 32, %s676, %s665
        $region44: #{tpu_custom_call.1} parent=31 // pred_fallthru
          _
        // Predicated region
        $region45: #{tpu_custom_call.1} parent=31 // pred_check
          %p679 = pneg %p172
        $region46: #{tpu_custom_call.1} parent=31 // pred_check_branch
          %681 = sbr.rel (%p679) target = $region48
        $region47: #{tpu_custom_call.1} parent=31 // pred_region
          %p682 = scmp.lt.s32.totalorder %s32, 1
          %s683 = scalar_select %p682, %s32, 1
          %s684 = smul.addr %s683, 8
          %s685 = smul.addr %s684, 4
          %s686 = scalar_lea.vmem %s5, %s685
        $region48: #{tpu_custom_call.1} parent=31 // pred_fallthru
          _
        // Predicated region
        $region49: #{tpu_custom_call.1} parent=31 // pred_check
          %p687 = pneg %p198
        $region50: #{tpu_custom_call.1} parent=31 // pred_check_branch
          %689 = sbr.rel (%p687) target = $region52
        $region51: #{tpu_custom_call.1} parent=31 // pred_region
          %s690 = sand.u32 %s32, 1
          %s691 = scalar_lea.sflag [#allocation3], %s690
          %s692 = sand.u32 %s188, 1
          %s693 = smul.addr %s692, 2
          %s694 = scalar_lea.vmem [#allocation9], %s693
          %s696 = ssub.s32 32, 32
          %697 = vsyncadd %s691, %s696
          %s698 = smul.addr %s32, 32
          %s699 = scalar_lea.hbm %s6, %s698
          %s701 = sshll.u32 %s694, 4
          %s702 = int_to_ptr.vmem [resolvable:$true] %s701
          %704 = dma.hbm_to_vmem [thread:$0]  %s699, 32, %s702, %s691
        $region52: #{tpu_custom_call.1} parent=31 // pred_fallthru
          _
        // Predicated region
        $region53: #{tpu_custom_call.1} parent=31 // pred_check
          %p705 = pneg %p224
        $region54: #{tpu_custom_call.1} parent=31 // pred_check_branch
          %707 = sbr.rel (%p705) target = $region56
        $region55: #{tpu_custom_call.1} parent=31 // pred_region
          %p708 = scmp.lt.s32.totalorder %s32, 1
          %s709 = scalar_select %p708, %s32, 1
          %s710 = smul.addr %s709, 8
          %s711 = smul.addr %s710, 4
          %s712 = scalar_lea.vmem %s7, %s711
        $region56: #{tpu_custom_call.1} parent=31 // pred_fallthru
          _
        // Predicated region
        $region57: #{tpu_custom_call.1} parent=31 // pred_check
          %p713 = pneg %p250
        $region58: #{tpu_custom_call.1} parent=31 // pred_check_branch
          %715 = sbr.rel (%p713) target = $region60
        $region59: #{tpu_custom_call.1} parent=31 // pred_region
          %s716 = sand.u32 %s32, 1
          %s717 = scalar_lea.sflag [#allocation3], %s716
          %s718 = sand.u32 %s240, 1
          %s719 = smul.addr %s718, 2
          %s720 = scalar_lea.vmem [#allocation10], %s719
          %s722 = ssub.s32 32, 32
          %723 = vsyncadd %s717, %s722
          %s724 = smul.addr %s32, 32
          %s725 = scalar_lea.hbm %s8, %s724
          %s727 = sshll.u32 %s720, 4
          %s728 = int_to_ptr.vmem [resolvable:$true] %s727
          %730 = dma.hbm_to_vmem [thread:$0]  %s725, 32, %s728, %s717
        $region60: #{tpu_custom_call.1} parent=31 // pred_fallthru
          _
        // Predicated region
        $region61: #{tpu_custom_call.1} parent=31 // pred_check
          %p731 = pneg %p276
        $region62: #{tpu_custom_call.1} parent=31 // pred_check_branch
          %733 = sbr.rel (%p731) target = $region64
        $region63: #{tpu_custom_call.1} parent=31 // pred_region
          %s734 = sand.u32 %s32, 1
          %s735 = scalar_lea.sflag [#allocation3], %s734
          %s736 = sand.u32 %s266, 1
          %s737 = smul.addr %s736, 32
          %s738 = scalar_lea.vmem [#allocation11], %s737
          %s740 = ssub.s32 512, 512
          %741 = vsyncadd %s735, %s740
          %s742 = smul.addr %s32, 8
          %s743 = smul.addr %s742, 64
          %s744 = scalar_lea.hbm %s9, %s743
          %s745 = sshll.u32 %s738, 4
          %s746 = int_to_ptr.vmem [resolvable:$true] %s745
          %751 = dma.hbm_to_vmem [thread:$0]  %s744, 512, %s746, %s735, 64, 64, 4
        $region64: #{tpu_custom_call.1} parent=31 // pred_fallthru
          _
        // Predicated region
        $region65: #{tpu_custom_call.1} parent=31 // pred_check
          %p752 = pneg %p302
        $region66: #{tpu_custom_call.1} parent=31 // pred_check_branch
          %754 = sbr.rel (%p752) target = $region68
        $region67: #{tpu_custom_call.1} parent=31 // pred_region
          %s755 = sand.u32 %s32, 1
          %s756 = scalar_lea.sflag [#allocation3], %s755
          %s757 = sand.u32 %s292, 1
          %s758 = smul.addr %s757, 2
          %s759 = scalar_lea.vmem [#allocation12], %s758
          %s761 = ssub.s32 32, 32
          %762 = vsyncadd %s756, %s761
          %s763 = smul.addr %s32, 32
          %s764 = scalar_lea.hbm %s10, %s763
          %s766 = sshll.u32 %s759, 4
          %s767 = int_to_ptr.vmem [resolvable:$true] %s766
          %769 = dma.hbm_to_vmem [thread:$0]  %s764, 32, %s767, %s756
        $region68: #{tpu_custom_call.1} parent=31 // pred_fallthru
          _
        // Predicated region
        $region69: #{tpu_custom_call.1} parent=31 // pred_check
          %p770 = pneg %p328
        $region70: #{tpu_custom_call.1} parent=31 // pred_check_branch
          %772 = sbr.rel (%p770) target = $region72
        $region71: #{tpu_custom_call.1} parent=31 // pred_region
          %s773 = sand.u32 %s32, 1
          %s774 = scalar_lea.sflag [#allocation3], %s773
          %s775 = sand.u32 %s318, 1
          %s776 = smul.addr %s775, 32
          %s777 = scalar_lea.vmem [#allocation13], %s776
          %s779 = ssub.s32 512, 512
          %780 = vsyncadd %s774, %s779
          %s781 = smul.addr %s32, 8
          %s782 = smul.addr %s781, 64
          %s783 = scalar_lea.hbm %s11, %s782
          %s784 = sshll.u32 %s777, 4
          %s785 = int_to_ptr.vmem [resolvable:$true] %s784
          %790 = dma.hbm_to_vmem [thread:$0]  %s783, 512, %s785, %s774, 64, 64, 4
        $region72: #{tpu_custom_call.1} parent=31 // pred_fallthru
          _
        // Predicated region
        $region73: #{tpu_custom_call.1} parent=31 // pred_check
          %p791 = pneg %p354
        $region74: #{tpu_custom_call.1} parent=31 // pred_check_branch
          %793 = sbr.rel (%p791) target = $region76
        $region75: #{tpu_custom_call.1} parent=31 // pred_region
          %s794 = sand.u32 %s32, 1
          %s795 = scalar_lea.sflag [#allocation3], %s794
          %s796 = sand.u32 %s344, 1
          %s797 = smul.addr %s796, 2
          %s798 = scalar_lea.vmem [#allocation14], %s797
          %s800 = ssub.s32 32, 32
          %801 = vsyncadd %s795, %s800
          %s802 = smul.addr %s32, 32
          %s803 = scalar_lea.hbm %s12, %s802
          %s805 = sshll.u32 %s798, 4
          %s806 = int_to_ptr.vmem [resolvable:$true] %s805
          %808 = dma.hbm_to_vmem [thread:$0]  %s803, 32, %s806, %s795
        $region76: #{tpu_custom_call.1} parent=31 // pred_fallthru
          _
        // Predicated region
        $region77: #{tpu_custom_call.1} parent=31 // pred_check
          %p809 = pneg %p380
        $region78: #{tpu_custom_call.1} parent=31 // pred_check_branch
          %811 = sbr.rel (%p809) target = $region80
        $region79: #{tpu_custom_call.1} parent=31 // pred_region
          %s812 = sand.u32 %s32, 1
          %s813 = scalar_lea.sflag [#allocation3], %s812
          %s814 = sand.u32 %s370, 1
          %s815 = smul.addr %s814, 2
          %s816 = scalar_lea.vmem [#allocation15], %s815
          %s818 = ssub.s32 32, 32
          %819 = vsyncadd %s813, %s818
          %s820 = smul.addr %s32, 32
          %s821 = scalar_lea.hbm %s13, %s820
          %s823 = sshll.u32 %s816, 4
          %s824 = int_to_ptr.vmem [resolvable:$true] %s823
          %826 = dma.hbm_to_vmem [thread:$0]  %s821, 32, %s824, %s813
        $region80: #{tpu_custom_call.1} parent=31 // pred_fallthru
          _
        // Predicated region
        $region81: #{tpu_custom_call.1} parent=31 // pred_check
          %p827 = pneg %p406
        $region82: #{tpu_custom_call.1} parent=31 // pred_check_branch
          %829 = sbr.rel (%p827) target = $region84
        $region83: #{tpu_custom_call.1} parent=31 // pred_region
          %s830 = sand.u32 %s32, 1
          %s831 = scalar_lea.sflag [#allocation3], %s830
          %s832 = sand.u32 %s396, 1
          %s833 = smul.addr %s832, 2
          %s834 = scalar_lea.vmem [#allocation16], %s833
          %s836 = ssub.s32 32, 32
          %837 = vsyncadd %s831, %s836
          %s838 = smul.addr %s32, 32
          %s839 = scalar_lea.hbm %s14, %s838
          %s841 = sshll.u32 %s834, 4
          %s842 = int_to_ptr.vmem [resolvable:$true] %s841
          %844 = dma.hbm_to_vmem [thread:$0]  %s839, 32, %s842, %s831
        $region84: #{tpu_custom_call.1} parent=31 // pred_fallthru
          _
        // Predicated region
        $region85: #{tpu_custom_call.1} parent=31 // pred_check
          %p845 = pneg %p432
        $region86: #{tpu_custom_call.1} parent=31 // pred_check_branch
          %847 = sbr.rel (%p845) target = $region88
        $region87: #{tpu_custom_call.1} parent=31 // pred_region
          %s848 = sand.u32 %s32, 1
          %s849 = scalar_lea.sflag [#allocation3], %s848
          %s850 = sand.u32 %s422, 1
          %s851 = smul.addr %s850, 32
          %s852 = scalar_lea.vmem [#allocation17], %s851
          %s854 = ssub.s32 512, 512
          %855 = vsyncadd %s849, %s854
          %s856 = smul.addr %s32, 8
          %s857 = smul.addr %s856, 64
          %s858 = scalar_lea.hbm %s15, %s857
          %s859 = sshll.u32 %s852, 4
          %s860 = int_to_ptr.vmem [resolvable:$true] %s859
          %865 = dma.hbm_to_vmem [thread:$0]  %s858, 512, %s860, %s849, 64, 64, 4
        $region88: #{tpu_custom_call.1} parent=31 // pred_fallthru
          _
        // Predicated region
        $region89: #{tpu_custom_call.1} parent=31 // pred_check
          %p866 = pneg %p458
        $region90: #{tpu_custom_call.1} parent=31 // pred_check_branch
          %868 = sbr.rel (%p866) target = $region92
        $region91: #{tpu_custom_call.1} parent=31 // pred_region
          %s869 = sand.u32 %s32, 1
          %s870 = scalar_lea.sflag [#allocation3], %s869
          %s871 = sand.u32 %s448, 1
          %s872 = smul.addr %s871, 2
          %s873 = scalar_lea.vmem [#allocation18], %s872
          %s875 = ssub.s32 32, 32
          %876 = vsyncadd %s870, %s875
          %s877 = smul.addr %s32, 32
          %s878 = scalar_lea.hbm %s16, %s877
          %s880 = sshll.u32 %s873, 4
          %s881 = int_to_ptr.vmem [resolvable:$true] %s880
          %883 = dma.hbm_to_vmem [thread:$0]  %s878, 32, %s881, %s870
        $region92: #{tpu_custom_call.1} parent=31 // pred_fallthru
          _
        // Predicated region
        $region93: #{tpu_custom_call.1} parent=31 // pred_check
          %p884 = pneg %p484
        $region94: #{tpu_custom_call.1} parent=31 // pred_check_branch
          %886 = sbr.rel (%p884) target = $region96
        $region95: #{tpu_custom_call.1} parent=31 // pred_region
          %p887 = scmp.lt.s32.totalorder %s32, 1
          %s888 = scalar_select %p887, %s32, 1
          %s889 = smul.addr %s888, 16
          %s890 = smul.addr %s889, 4
          %s891 = scalar_lea.vmem %s17, %s890
        $region96: #{tpu_custom_call.1} parent=31 // pred_fallthru
          _
        // Predicated region
        $region97: #{tpu_custom_call.1} parent=31 // pred_check
          %p892 = pneg %p510
        $region98: #{tpu_custom_call.1} parent=31 // pred_check_branch
          %894 = sbr.rel (%p892) target = $region100
        $region99: #{tpu_custom_call.1} parent=31 // pred_region
          %p895 = scmp.lt.s32.totalorder %s32, 1
          %s896 = scalar_select %p895, %s32, 1
          %s897 = smul.addr %s896, 2
          %s898 = scalar_lea.vmem %s18, %s897
        $region100: #{tpu_custom_call.1} parent=31 // pred_fallthru
          _
      $region32: #{tpu_custom_call.1} parent=5 // pred_fallthru
        _
      %p899 = scmp.le.s32.totalorder 1, %s32
      %p900 = scmp.lt.s32.totalorder %s32, 3
      %p901 = pnand %p899, %p900
      %p902 = pneg %p901
      // Predicated region
      $region101: #{tpu_custom_call.1} parent=5 // pred_check
        _
      $region102: #{tpu_custom_call.1} parent=5 // pred_check_branch
        %904 = sbr.rel (%p901) target = $region104
      $region103: #{tpu_custom_call.1} parent=5 // pred_region
        %s905 = ssub.s32 %s32, 1
        // Predicated region
        $region105: #{tpu_custom_call.1} parent=103 // pred_check
          %p906 = pneg %p53
        $region106: #{tpu_custom_call.1} parent=103 // pred_check_branch
          %908 = sbr.rel (%p906) target = $region108
        $region107: #{tpu_custom_call.1} parent=103 // pred_region
          %909 = dma.done [#allocation3], 512
        $region108: #{tpu_custom_call.1} parent=103 // pred_fallthru
          _
        // Predicated region
        $region109: #{tpu_custom_call.1} parent=103 // pred_check
          %p910 = pneg %p74
        $region110: #{tpu_custom_call.1} parent=103 // pred_check_branch
          %912 = sbr.rel (%p910) target = $region112
        $region111: #{tpu_custom_call.1} parent=103 // pred_region
          %913 = dma.done [#allocation6], 512
        $region112: #{tpu_custom_call.1} parent=103 // pred_fallthru
          _
        %s914 = sand.u32 %s37, 1
        %s915 = scalar_lea.sflag [#allocation3], %s914
        %s916 = sand.u32 %s113, 1
        %s917 = smul.addr %s916, 2
        %s918 = scalar_lea.vmem [#allocation7], %s917
        // Predicated region
        $region113: #{tpu_custom_call.1} parent=103 // pred_check
          %p919 = pneg %p126
        $region114: #{tpu_custom_call.1} parent=103 // pred_check_branch
          %921 = sbr.rel (%p919) target = $region116
        $region115: #{tpu_custom_call.1} parent=103 // pred_region
          %922 = dma.done %s915, 32
        $region116: #{tpu_custom_call.1} parent=103 // pred_fallthru
          _
        %s923 = sand.u32 %s37, 1
        %s924 = scalar_lea.sflag [#allocation3], %s923
        %s925 = sand.u32 %s139, 1
        %s926 = smul.addr %s925, 2
        %s927 = scalar_lea.vmem [#allocation8], %s926
        // Predicated region
        $region117: #{tpu_custom_call.1} parent=103 // pred_check
          %p928 = pneg %p152
        $region118: #{tpu_custom_call.1} parent=103 // pred_check_branch
          %930 = sbr.rel (%p928) target = $region120
        $region119: #{tpu_custom_call.1} parent=103 // pred_region
          %931 = dma.done %s924, 32
        $region120: #{tpu_custom_call.1} parent=103 // pred_fallthru
          _
        %s932 = sand.u32 %s37, 1
        %s933 = scalar_lea.sflag [#allocation3], %s932
        %s934 = sand.u32 %s191, 1
        %s935 = smul.addr %s934, 2
        %s936 = scalar_lea.vmem [#allocation9], %s935
        // Predicated region
        $region121: #{tpu_custom_call.1} parent=103 // pred_check
          %p937 = pneg %p204
        $region122: #{tpu_custom_call.1} parent=103 // pred_check_branch
          %939 = sbr.rel (%p937) target = $region124
        $region123: #{tpu_custom_call.1} parent=103 // pred_region
          %940 = dma.done %s933, 32
        $region124: #{tpu_custom_call.1} parent=103 // pred_fallthru
          _
        %s941 = sand.u32 %s37, 1
        %s942 = scalar_lea.sflag [#allocation3], %s941
        %s943 = sand.u32 %s243, 1
        %s944 = smul.addr %s943, 2
        %s945 = scalar_lea.vmem [#allocation10], %s944
        // Predicated region
        $region125: #{tpu_custom_call.1} parent=103 // pred_check
          %p946 = pneg %p256
        $region126: #{tpu_custom_call.1} parent=103 // pred_check_branch
          %948 = sbr.rel (%p946) target = $region128
        $region127: #{tpu_custom_call.1} parent=103 // pred_region
          %949 = dma.done %s942, 32
        $region128: #{tpu_custom_call.1} parent=103 // pred_fallthru
          _
        %s950 = sand.u32 %s37, 1
        %s951 = scalar_lea.sflag [#allocation3], %s950
        %s952 = sand.u32 %s269, 1
        %s953 = smul.addr %s952, 32
        %s954 = scalar_lea.vmem [#allocation11], %s953
        // Predicated region
        $region129: #{tpu_custom_call.1} parent=103 // pred_check
          %p955 = pneg %p282
        $region130: #{tpu_custom_call.1} parent=103 // pred_check_branch
          %957 = sbr.rel (%p955) target = $region132
        $region131: #{tpu_custom_call.1} parent=103 // pred_region
          %958 = dma.done %s951, 512
        $region132: #{tpu_custom_call.1} parent=103 // pred_fallthru
          _
        %s959 = sand.u32 %s37, 1
        %s960 = scalar_lea.sflag [#allocation3], %s959
        %s961 = sand.u32 %s295, 1
        %s962 = smul.addr %s961, 2
        %s963 = scalar_lea.vmem [#allocation12], %s962
        // Predicated region
        $region133: #{tpu_custom_call.1} parent=103 // pred_check
          %p964 = pneg %p308
        $region134: #{tpu_custom_call.1} parent=103 // pred_check_branch
          %966 = sbr.rel (%p964) target = $region136
        $region135: #{tpu_custom_call.1} parent=103 // pred_region
          %967 = dma.done %s960, 32
        $region136: #{tpu_custom_call.1} parent=103 // pred_fallthru
          _
        %s968 = sand.u32 %s37, 1
        %s969 = scalar_lea.sflag [#allocation3], %s968
        %s970 = sand.u32 %s321, 1
        %s971 = smul.addr %s970, 32
        %s972 = scalar_lea.vmem [#allocation13], %s971
        // Predicated region
        $region137: #{tpu_custom_call.1} parent=103 // pred_check
          %p973 = pneg %p334
        $region138: #{tpu_custom_call.1} parent=103 // pred_check_branch
          %975 = sbr.rel (%p973) target = $region140
        $region139: #{tpu_custom_call.1} parent=103 // pred_region
          %976 = dma.done %s969, 512
        $region140: #{tpu_custom_call.1} parent=103 // pred_fallthru
          _
        %s977 = sand.u32 %s37, 1
        %s978 = scalar_lea.sflag [#allocation3], %s977
        %s979 = sand.u32 %s347, 1
        %s980 = smul.addr %s979, 2
        %s981 = scalar_lea.vmem [#allocation14], %s980
        // Predicated region
        $region141: #{tpu_custom_call.1} parent=103 // pred_check
          %p982 = pneg %p360
        $region142: #{tpu_custom_call.1} parent=103 // pred_check_branch
          %984 = sbr.rel (%p982) target = $region144
        $region143: #{tpu_custom_call.1} parent=103 // pred_region
          %985 = dma.done %s978, 32
        $region144: #{tpu_custom_call.1} parent=103 // pred_fallthru
          _
        %s986 = sand.u32 %s37, 1
        %s987 = scalar_lea.sflag [#allocation3], %s986
        %s988 = sand.u32 %s373, 1
        %s989 = smul.addr %s988, 2
        %s990 = scalar_lea.vmem [#allocation15], %s989
        // Predicated region
        $region145: #{tpu_custom_call.1} parent=103 // pred_check
          %p991 = pneg %p386
        $region146: #{tpu_custom_call.1} parent=103 // pred_check_branch
          %993 = sbr.rel (%p991) target = $region148
        $region147: #{tpu_custom_call.1} parent=103 // pred_region
          %994 = dma.done %s987, 32
        $region148: #{tpu_custom_call.1} parent=103 // pred_fallthru
          _
        %s995 = sand.u32 %s37, 1
        %s996 = scalar_lea.sflag [#allocation3], %s995
        %s997 = sand.u32 %s399, 1
        %s998 = smul.addr %s997, 2
        %s999 = scalar_lea.vmem [#allocation16], %s998
        // Predicated region
        $region149: #{tpu_custom_call.1} parent=103 // pred_check
          %p1000 = pneg %p412
        $region150: #{tpu_custom_call.1} parent=103 // pred_check_branch
          %1002 = sbr.rel (%p1000) target = $region152
        $region151: #{tpu_custom_call.1} parent=103 // pred_region
          %1003 = dma.done %s996, 32
        $region152: #{tpu_custom_call.1} parent=103 // pred_fallthru
          _
        %s1004 = sand.u32 %s37, 1
        %s1005 = scalar_lea.sflag [#allocation3], %s1004
        %s1006 = sand.u32 %s425, 1
        %s1007 = smul.addr %s1006, 32
        %s1008 = scalar_lea.vmem [#allocation17], %s1007
        // Predicated region
        $region153: #{tpu_custom_call.1} parent=103 // pred_check
          %p1009 = pneg %p438
        $region154: #{tpu_custom_call.1} parent=103 // pred_check_branch
          %1011 = sbr.rel (%p1009) target = $region156
        $region155: #{tpu_custom_call.1} parent=103 // pred_region
          %1012 = dma.done %s1005, 512
        $region156: #{tpu_custom_call.1} parent=103 // pred_fallthru
          _
        %s1013 = sand.u32 %s37, 1
        %s1014 = scalar_lea.sflag [#allocation3], %s1013
        %s1015 = sand.u32 %s451, 1
        %s1016 = smul.addr %s1015, 2
        %s1017 = scalar_lea.vmem [#allocation18], %s1016
        // Predicated region
        $region157: #{tpu_custom_call.1} parent=103 // pred_check
          %p1018 = pneg %p464
        $region158: #{tpu_custom_call.1} parent=103 // pred_check_branch
          %1020 = sbr.rel (%p1018) target = $region160
        $region159: #{tpu_custom_call.1} parent=103 // pred_region
          %1021 = dma.done %s1014, 32
        $region160: #{tpu_custom_call.1} parent=103 // pred_fallthru
          _
        %p1022 = pneg %p53
        %p1023 = pneg %p50
        %p1024 = pneg %p74
        %p1025 = pneg %p71
        %p1026 = scmp.lt.s32.totalorder %s37, 1
        %s1027 = scalar_select %p1026, %s37, 1
        %s1028 = smul.addr %s1027, 4
        %s1029 = smul.addr %s1028, 8
        %s1030 = scalar_lea.vmem %s2, %s1029
        %p1031 = pneg %p100
        %p1032 = pneg %p97
        %s1033 = sand.u32 %s37, 1
        %s1034 = scalar_lea.sflag [#allocation3], %s1033
        %s1035 = sand.u32 %s113, 1
        %s1036 = smul.addr %s1035, 2
        %s1037 = scalar_lea.vmem [#allocation7], %s1036
        %p1038 = pneg %p126
        %p1039 = pneg %p123
        %s1040 = sand.u32 %s37, 1
        %s1041 = scalar_lea.sflag [#allocation3], %s1040
        %s1042 = sand.u32 %s139, 1
        %s1043 = smul.addr %s1042, 2
        %s1044 = scalar_lea.vmem [#allocation8], %s1043
        %p1045 = pneg %p152
        %p1046 = pneg %p149
        %p1047 = scmp.lt.s32.totalorder %s37, 1
        %s1048 = scalar_select %p1047, %s37, 1
        %s1049 = smul.addr %s1048, 8
        %s1050 = smul.addr %s1049, 4
        %s1051 = scalar_lea.vmem %s5, %s1050
        %p1052 = pneg %p178
        %p1053 = pneg %p175
        %s1054 = sand.u32 %s37, 1
        %s1055 = scalar_lea.sflag [#allocation3], %s1054
        %s1056 = sand.u32 %s191, 1
        %s1057 = smul.addr %s1056, 2
        %s1058 = scalar_lea.vmem [#allocation9], %s1057
        %p1059 = pneg %p204
        %p1060 = pneg %p201
        %p1061 = scmp.lt.s32.totalorder %s37, 1
        %s1062 = scalar_select %p1061, %s37, 1
        %s1063 = smul.addr %s1062, 8
        %s1064 = smul.addr %s1063, 4
        %s1065 = scalar_lea.vmem %s7, %s1064
        %p1066 = pneg %p230
        %p1067 = pneg %p227
        %s1068 = sand.u32 %s37, 1
        %s1069 = scalar_lea.sflag [#allocation3], %s1068
        %s1070 = sand.u32 %s243, 1
        %s1071 = smul.addr %s1070, 2
        %s1072 = scalar_lea.vmem [#allocation10], %s1071
        %p1073 = pneg %p256
        %p1074 = pneg %p253
        %s1075 = sand.u32 %s37, 1
        %s1076 = scalar_lea.sflag [#allocation3], %s1075
        %s1077 = sand.u32 %s269, 1
        %s1078 = smul.addr %s1077, 32
        %s1079 = scalar_lea.vmem [#allocation11], %s1078
        %p1080 = pneg %p282
        %p1081 = pneg %p279
        %s1082 = sand.u32 %s37, 1
        %s1083 = scalar_lea.sflag [#allocation3], %s1082
        %s1084 = sand.u32 %s295, 1
        %s1085 = smul.addr %s1084, 2
        %s1086 = scalar_lea.vmem [#allocation12], %s1085
        %p1087 = pneg %p308
        %p1088 = pneg %p305
        %s1089 = sand.u32 %s37, 1
        %s1090 = scalar_lea.sflag [#allocation3], %s1089
        %s1091 = sand.u32 %s321, 1
        %s1092 = smul.addr %s1091, 32
        %s1093 = scalar_lea.vmem [#allocation13], %s1092
        %p1094 = pneg %p334
        %p1095 = pneg %p331
        %s1096 = sand.u32 %s37, 1
        %s1097 = scalar_lea.sflag [#allocation3], %s1096
        %s1098 = sand.u32 %s347, 1
        %s1099 = smul.addr %s1098, 2
        %s1100 = scalar_lea.vmem [#allocation14], %s1099
        %p1101 = pneg %p360
        %p1102 = pneg %p357
        %s1103 = sand.u32 %s37, 1
        %s1104 = scalar_lea.sflag [#allocation3], %s1103
        %s1105 = sand.u32 %s373, 1
        %s1106 = smul.addr %s1105, 2
        %s1107 = scalar_lea.vmem [#allocation15], %s1106
        %p1108 = pneg %p386
        %p1109 = pneg %p383
        %s1110 = sand.u32 %s37, 1
        %s1111 = scalar_lea.sflag [#allocation3], %s1110
        %s1112 = sand.u32 %s399, 1
        %s1113 = smul.addr %s1112, 2
        %s1114 = scalar_lea.vmem [#allocation16], %s1113
        %p1115 = pneg %p412
        %p1116 = pneg %p409
        %s1117 = sand.u32 %s37, 1
        %s1118 = scalar_lea.sflag [#allocation3], %s1117
        %s1119 = sand.u32 %s425, 1
        %s1120 = smul.addr %s1119, 32
        %s1121 = scalar_lea.vmem [#allocation17], %s1120
        %p1122 = pneg %p438
        %p1123 = pneg %p435
        %s1124 = sand.u32 %s37, 1
        %s1125 = scalar_lea.sflag [#allocation3], %s1124
        %s1126 = sand.u32 %s451, 1
        %s1127 = smul.addr %s1126, 2
        %s1128 = scalar_lea.vmem [#allocation18], %s1127
        %p1129 = pneg %p464
        %p1130 = pneg %p461
        %p1131 = scmp.lt.s32.totalorder %s37, 1
        %s1132 = scalar_select %p1131, %s37, 1
        %s1133 = smul.addr %s1132, 16
        %s1134 = smul.addr %s1133, 4
        %s1135 = scalar_lea.vmem %s17, %s1134
        %p1136 = pneg %p490
        %p1137 = pneg %p487
        %p1138 = scmp.lt.s32.totalorder %s37, 1
        %s1139 = scalar_select %p1138, %s37, 1
        %s1140 = smul.addr %s1139, 2
        %s1141 = scalar_lea.vmem %s18, %s1140
        %p1142 = pneg %p516
        %p1143 = pneg %p513
        %p1144 = pneg %p537
        %p1145 = pneg %p534
        %p1146 = pneg %p558
        %p1147 = pneg %p555
        %p1148 = pneg %p584
        %p1149 = pneg %p581
        %s1150 = sand.u32 %s571, 1
        %s1151 = scalar_lea.sflag [#allocation4], %s1150
        %s1152 = sand.u32 %s571, 1
        %s1153 = smul.addr %s1152, 32
        %s1154 = scalar_lea.vmem [#allocation19], %s1153
        %p1155 = scmp.lt.s32.totalorder %s37, 1
        %s1156 = scalar_select %p1155, %s37, 1
        %s1157 = smul.addr %s1156, 4
        %s1158 = smul.addr %s1157, 8
        %s1159 = scalar_lea.vmem %s2, %s1158
        %p1160 = scmp.lt.s32.totalorder %s37, 1
        %s1161 = scalar_select %p1160, %s37, 1
        %s1162 = smul.addr %s1161, 8
        %s1163 = smul.addr %s1162, 4
        %s1164 = scalar_lea.vmem %s5, %s1163
        %p1165 = scmp.lt.s32.totalorder %s37, 1
        %s1166 = scalar_select %p1165, %s37, 1
        %s1167 = smul.addr %s1166, 8
        %s1168 = smul.addr %s1167, 4
        %s1169 = scalar_lea.vmem %s7, %s1168
        %p1170 = scmp.lt.s32.totalorder %s37, 1
        %s1171 = scalar_select %p1170, %s37, 1
        %s1172 = smul.addr %s1171, 16
        %s1173 = smul.addr %s1172, 4
        %s1174 = scalar_lea.vmem %s17, %s1173
        %p1175 = scmp.lt.s32.totalorder %s37, 1
        %s1176 = scalar_select %p1175, %s37, 1
        %s1177 = smul.addr %s1176, 2
        %s1178 = scalar_lea.vmem %s18, %s1177
        %v1180 = vld [vmem:[#allocation2] sm:$0xff]
        %v1181 = vld [vmem:[#allocation2 + $0x8] sm:$0xff]
        %v1182 = vld [vmem:[#allocation2 + $0x10] sm:$0xff]
        %v1183 = vld [vmem:[#allocation2 + $0x18] sm:$0xff]
        %v1184 = vld [vmem:[#allocation5] sm:$0xff]
        %v1185 = vld [vmem:[#allocation5 + $0x8] sm:$0xff]
        %v1186 = vld [vmem:[#allocation5 + $0x10] sm:$0xff]
        %v1187 = vld [vmem:[#allocation5 + $0x18] sm:$0xff]
        %v1188 = vadd.f32 %v1180, %v1184
        %v1189 = vadd.f32 %v1181, %v1185
        %v1190 = vadd.f32 %v1182, %v1186
        %v1191 = vadd.f32 %v1183, %v1187
        %v1192 = vld [vmem:[%s1159] sm:$0xff]
        %v1193 = vld [vmem:[%s1159 + $0x8] sm:$0xff]
        %v1194 = vld [vmem:[%s1159 + $0x10] sm:$0xff]
        %v1195 = vld [vmem:[%s1159 + $0x18] sm:$0xff]
        %v1196 = vld [vmem:[%s918] sm:$0x1]
        %v1197 = vld [vmem:[%s927] sm:$0x1]
        %vm1198 = vcmask 261120
        %v1199 = vsel %vm1198, %v1188, 0.0
        %1200 = vadd.xlane.f32.xlu0 %v1199
        %v1201 = vpop.xlane.xlu0 %1200
        %v1202 = vsel %vm1198, %v1189, 0.0
        %1203 = vadd.xlane.f32.xlu0 %v1202
        %v1204 = vpop.xlane.xlu0 %1203
        %v1205 = vsel %vm1198, %v1190, 0.0
        %1206 = vadd.xlane.f32.xlu0 %v1205
        %v1207 = vpop.xlane.xlu0 %1206
        %v1208 = vsel %vm1198, %v1191, 0.0
        %1209 = vadd.xlane.f32.xlu0 %v1208
        %v1210 = vpop.xlane.xlu0 %1209
        %v1211 = vrcp.pop 32.0
        %v1212 = vmul.f32 %v1201, %v1211
        %v1213 = vmul.f32 %v1204, %v1211
        %v1214 = vmul.f32 %v1207, %v1211
        %v1215 = vmul.f32 %v1210, %v1211
        %v1216 = vsub.f32 %v1188, %v1212
        %v1217 = vsub.f32 %v1189, %v1213
        %v1218 = vsub.f32 %v1190, %v1214
        %v1219 = vsub.f32 %v1191, %v1215
        %v1220 = vmul.f32 %v1216, %v1216
        %v1221 = vmul.f32 %v1217, %v1217
        %v1222 = vmul.f32 %v1218, %v1218
        %v1223 = vmul.f32 %v1219, %v1219
        %v1224 = vsel %vm1198, %v1220, 0.0
        %1225 = vadd.xlane.f32.xlu0 %v1224
        %v1226 = vpop.xlane.xlu0 %1225
        %v1227 = vsel %vm1198, %v1221, 0.0
        %1228 = vadd.xlane.f32.xlu0 %v1227
        %v1229 = vpop.xlane.xlu0 %1228
        %v1230 = vsel %vm1198, %v1222, 0.0
        %1231 = vadd.xlane.f32.xlu0 %v1230
        %v1232 = vpop.xlane.xlu0 %1231
        %v1233 = vsel %vm1198, %v1223, 0.0
        %1234 = vadd.xlane.f32.xlu0 %v1233
        %v1235 = vpop.xlane.xlu0 %1234
        %v1236 = vmul.f32 %v1226, %v1211
        %v1237 = vmul.f32 %v1229, %v1211
        %v1238 = vmul.f32 %v1232, %v1211
        %v1239 = vmul.f32 %v1235, %v1211
        %v1240 = vadd.f32 %v1236, 1e-05
        %v1241 = vadd.f32 %v1237, 1e-05
        %v1242 = vadd.f32 %v1238, 1e-05
        %v1243 = vadd.f32 %v1239, 1e-05
        %v1244 = vrsqrt.pop %v1240
        %v1245 = vrsqrt.pop %v1241
        %v1246 = vrsqrt.pop %v1242
        %v1247 = vrsqrt.pop %v1243
        %v1248 = vmul.f32 %v1216, %v1244
        %v1249 = vmul.f32 %v1217, %v1245
        %v1250 = vmul.f32 %v1218, %v1246
        %v1251 = vmul.f32 %v1219, %v1247
        %v1252 = vlaneseq
        %v1253 = vshrl.u32 %v1252, 7
        %v1254 = vsub.s32 0, %v1253
        %v1255 = vrot.slane %v1196, %v1254
        %v1256 = vmul.f32 %v1248, %v1255
        %v1257 = vmul.f32 %v1249, %v1255
        %v1258 = vmul.f32 %v1250, %v1255
        %v1259 = vmul.f32 %v1251, %v1255
        %v1260 = vlaneseq
        %v1261 = vshrl.u32 %v1260, 7
        %v1262 = vsub.s32 0, %v1261
        %v1263 = vrot.slane %v1197, %v1262
        %v1264 = vadd.f32 %v1256, %v1263
        %v1265 = vadd.f32 %v1257, %v1263
        %v1266 = vadd.f32 %v1258, %v1263
        %v1267 = vadd.f32 %v1259, %v1263
        %v1268 = vpack.c.bf16 %v1265, %v1264
        %v1269 = vpack.c.bf16 %v1267, %v1266
        %v1270 = vld [vmem:[%s1164] sm:$0xf]
        %v1271 = vld [vmem:[%s1164 + $0x4] sm:$0xf]
        %v1272 = vld [vmem:[%s1164 + $0x8] sm:$0xf]
        %v1273 = vld [vmem:[%s1164 + $0xc] sm:$0xf]
        %v1274 = vld [vmem:[%s936] sm:$0x1]
        %v1275 = vlaneseq
        %v1276 = vshrl.u32 %v1275, 7
        %v1277 = vsub.s32 0, %v1276
        %v1278 = vrot.slane %v1274, %v1277
        %v1283 = vunpack.c.l.b16 %v1270
        %v1284 = vunpack.c.l.b16 %v1271
        %v1285 = vunpack.c.l.b16 %v1272
        %v1286 = vunpack.c.l.b16 %v1273
        %v1287 = vpack.c.b16 %v1284, %v1283
        %v1288 = vpack.c.b16 %v1286, %v1285
        %v1292 = vsel %vm1198, %v1268, 0
        %v1295 = vsel %vm1198, %v1269, 0
        %1297 = vmatprep.subr.bf16.mxu0 0
        %1298 = vmatpush1.bf16.msra.mxu0 %v1287
        %1299 = vmatprep.subr.bf16.mxu0 0
        %1300 = vmatpush1.bf16.msra.mxu0 %v1288
        %1301 = vmatprep.subr.bf16.mxu0 0
        %1302 = vmatpush1.bf16.msra.mxu0 0
        %1303 = vmatprep.subr.bf16.mxu0 0
        %1304 = vmatpush1.bf16.msra.mxu0 0
        %1305 = vmatprep.subr.bf16.mxu0 0
        %1306 = vmatpush1.bf16.msra.mxu0 0
        %1307 = vmatprep.subr.bf16.mxu0 0
        %1308 = vmatpush1.bf16.msra.mxu0 0
        %1309 = vmatprep.subr.bf16.mxu0 0
        %1310 = vmatpush1.bf16.msra.mxu0 0
        %1311 = vmatprep.subr.bf16.mxu0 0
        %1312 = vmatpush1.bf16.msra.mxu0 0
        %1313 = vmatprep.subr.bf16.mxu0 0
        %1314 = vmatpush1.bf16.msra.mxu0 0
        %1315 = vmatprep.subr.bf16.mxu0 0
        %1316 = vmatpush1.bf16.msra.mxu0 0
        %1317 = vmatprep.subr.bf16.mxu0 0
        %1318 = vmatpush1.bf16.msra.mxu0 0
        %1319 = vmatprep.subr.bf16.mxu0 0
        %1320 = vmatpush1.bf16.msra.mxu0 0
        %1321 = vmatprep.subr.bf16.mxu0 0
        %1322 = vmatpush1.bf16.msra.mxu0 0
        %1323 = vmatprep.subr.bf16.mxu0 0
        %1324 = vmatpush1.bf16.msra.mxu0 0
        %1325 = vmatprep.subr.bf16.mxu0 0
        %1326 = vmatpush1.bf16.msra.mxu0 0
        %1327 = vmatprep.subr.bf16.mxu0 0
        %1328 = vmatpush1.bf16.msra.mxu0 0
        %1329 = vmatprep.mubr.bf16.mxu0 0
        %1330 = vmatmul.mubr.bf16.gmra.mrb[0].mxu0 %v1292
        %v1331 = vpop.f32.mrb[0].mxu0
        %v1332 = vadd.f32 %v1278, %v1331
        %v1333 = vpop.f32.mrb[0].mxu0
        %v1334 = vpop.f32.mrb[0].mxu0
        %v1335 = vadd.f32 %v1278, %v1334
        %v1336 = vpop.f32.mrb[0].mxu0
        %1337 = vmatprep.mubr.bf16.mxu0 0
        %1338 = vmatmul.mubr.bf16.gmra.mrb[0].mxu0 %v1295
        %v1339 = vpop.f32.mrb[0].mxu0
        %v1340 = vadd.f32 %v1278, %v1339
        %v1341 = vpop.f32.mrb[0].mxu0
        %v1342 = vpop.f32.mrb[0].mxu0
        %v1343 = vadd.f32 %v1278, %v1342
        %v1344 = vpop.f32.mrb[0].mxu0
        %1345 = vdwg.mxu0
        %v1346 = vld [vmem:[%s1169] sm:$0xf]
        %v1347 = vld [vmem:[%s1169 + $0x4] sm:$0xf]
        %v1348 = vld [vmem:[%s1169 + $0x8] sm:$0xf]
        %v1349 = vld [vmem:[%s1169 + $0xc] sm:$0xf]
        %v1350 = vld [vmem:[%s945] sm:$0x1]
        %v1351 = vlaneseq
        %v1352 = vshrl.u32 %v1351, 7
        %v1353 = vsub.s32 0, %v1352
        %v1354 = vrot.slane %v1350, %v1353
        %v1359 = vunpack.c.l.b16 %v1346
        %v1360 = vunpack.c.l.b16 %v1347
        %v1361 = vunpack.c.l.b16 %v1348
        %v1362 = vunpack.c.l.b16 %v1349
        %v1363 = vpack.c.b16 %v1360, %v1359
        %v1364 = vpack.c.b16 %v1362, %v1361
        %1367 = vmatprep.subr.bf16.mxu0 0
        %1368 = vmatpush1.bf16.msra.mxu0 %v1363
        %1369 = vmatprep.subr.bf16.mxu0 0
        %1370 = vmatpush1.bf16.msra.mxu0 %v1364
        %1371 = vmatprep.subr.bf16.mxu0 0
        %1372 = vmatpush1.bf16.msra.mxu0 0
        %1373 = vmatprep.subr.bf16.mxu0 0
        %1374 = vmatpush1.bf16.msra.mxu0 0
        %1375 = vmatprep.subr.bf16.mxu0 0
        %1376 = vmatpush1.bf16.msra.mxu0 0
        %1377 = vmatprep.subr.bf16.mxu0 0
        %1378 = vmatpush1.bf16.msra.mxu0 0
        %1379 = vmatprep.subr.bf16.mxu0 0
        %1380 = vmatpush1.bf16.msra.mxu0 0
        %1381 = vmatprep.subr.bf16.mxu0 0
        %1382 = vmatpush1.bf16.msra.mxu0 0
        %1383 = vmatprep.subr.bf16.mxu0 0
        %1384 = vmatpush1.bf16.msra.mxu0 0
        %1385 = vmatprep.subr.bf16.mxu0 0
        %1386 = vmatpush1.bf16.msra.mxu0 0
        %1387 = vmatprep.subr.bf16.mxu0 0
        %1388 = vmatpush1.bf16.msra.mxu0 0
        %1389 = vmatprep.subr.bf16.mxu0 0
        %1390 = vmatpush1.bf16.msra.mxu0 0
        %1391 = vmatprep.subr.bf16.mxu0 0
        %1392 = vmatpush1.bf16.msra.mxu0 0
        %1393 = vmatprep.subr.bf16.mxu0 0
        %1394 = vmatpush1.bf16.msra.mxu0 0
        %1395 = vmatprep.subr.bf16.mxu0 0
        %1396 = vmatpush1.bf16.msra.mxu0 0
        %1397 = vmatprep.subr.bf16.mxu0 0
        %1398 = vmatpush1.bf16.msra.mxu0 0
        %1399 = vmatprep.mubr.bf16.mxu0 0
        %1400 = vmatmul.mubr.bf16.gmra.mrb[0].mxu0 %v1292
        %v1401 = vpop.f32.mrb[0].mxu0
        %v1402 = vadd.f32 %v1354, %v1401
        %v1403 = vpop.f32.mrb[0].mxu0
        %v1404 = vpop.f32.mrb[0].mxu0
        %v1405 = vadd.f32 %v1354, %v1404
        %v1406 = vpop.f32.mrb[0].mxu0
        %1407 = vmatprep.mubr.bf16.mxu0 0
        %1408 = vmatmul.mubr.bf16.gmra.mrb[0].mxu0 %v1295
        %v1409 = vpop.f32.mrb[0].mxu0
        %v1410 = vadd.f32 %v1354, %v1409
        %v1411 = vpop.f32.mrb[0].mxu0
        %v1412 = vpop.f32.mrb[0].mxu0
        %v1413 = vadd.f32 %v1354, %v1412
        %v1414 = vpop.f32.mrb[0].mxu0
        %1415 = vdwg.mxu0
        %v1416 = vld [vmem:[%s954] sm:$0xf]
        %v1417 = vld [vmem:[%s954 + $0x4] sm:$0xf]
        %v1418 = vld [vmem:[%s954 + $0x8] sm:$0xf]
        %v1419 = vld [vmem:[%s954 + $0xc] sm:$0xf]
        %v1420 = vld [vmem:[%s963] sm:$0x1]
        %v1421 = vlaneseq
        %v1422 = vshrl.u32 %v1421, 7
        %v1423 = vsub.s32 0, %v1422
        %v1424 = vrot.slane %v1420, %v1423
        %v1429 = vunpack.c.l.b16 %v1416
        %v1430 = vunpack.c.l.b16 %v1417
        %v1431 = vunpack.c.l.b16 %v1418
        %v1432 = vunpack.c.l.b16 %v1419
        %v1433 = vpack.c.b16 %v1430, %v1429
        %v1434 = vpack.c.b16 %v1432, %v1431
        %1437 = vmatprep.subr.bf16.mxu0 0
        %1438 = vmatpush1.bf16.msra.mxu0 %v1433
        %1439 = vmatprep.subr.bf16.mxu0 0
        %1440 = vmatpush1.bf16.msra.mxu0 %v1434
        %1441 = vmatprep.subr.bf16.mxu0 0
        %1442 = vmatpush1.bf16.msra.mxu0 0
        %1443 = vmatprep.subr.bf16.mxu0 0
        %1444 = vmatpush1.bf16.msra.mxu0 0
        %1445 = vmatprep.subr.bf16.mxu0 0
        %1446 = vmatpush1.bf16.msra.mxu0 0
        %1447 = vmatprep.subr.bf16.mxu0 0
        %1448 = vmatpush1.bf16.msra.mxu0 0
        %1449 = vmatprep.subr.bf16.mxu0 0
        %1450 = vmatpush1.bf16.msra.mxu0 0
        %1451 = vmatprep.subr.bf16.mxu0 0
        %1452 = vmatpush1.bf16.msra.mxu0 0
        %1453 = vmatprep.subr.bf16.mxu0 0
        %1454 = vmatpush1.bf16.msra.mxu0 0
        %1455 = vmatprep.subr.bf16.mxu0 0
        %1456 = vmatpush1.bf16.msra.mxu0 0
        %1457 = vmatprep.subr.bf16.mxu0 0
        %1458 = vmatpush1.bf16.msra.mxu0 0
        %1459 = vmatprep.subr.bf16.mxu0 0
        %1460 = vmatpush1.bf16.msra.mxu0 0
        %1461 = vmatprep.subr.bf16.mxu0 0
        %1462 = vmatpush1.bf16.msra.mxu0 0
        %1463 = vmatprep.subr.bf16.mxu0 0
        %1464 = vmatpush1.bf16.msra.mxu0 0
        %1465 = vmatprep.subr.bf16.mxu0 0
        %1466 = vmatpush1.bf16.msra.mxu0 0
        %1467 = vmatprep.subr.bf16.mxu0 0
        %1468 = vmatpush1.bf16.msra.mxu0 0
        %1469 = vmatprep.mubr.bf16.mxu0 0
        %1470 = vmatmul.mubr.bf16.gmra.mrb[0].mxu0 %v1292
        %v1471 = vpop.f32.mrb[0].mxu0
        %v1472 = vadd.f32 %v1424, %v1471
        %v1473 = vpop.f32.mrb[0].mxu0
        %v1474 = vpop.f32.mrb[0].mxu0
        %v1475 = vadd.f32 %v1424, %v1474
        %v1476 = vpop.f32.mrb[0].mxu0
        %1477 = vmatprep.mubr.bf16.mxu0 0
        %1478 = vmatmul.mubr.bf16.gmra.mrb[0].mxu0 %v1295
        %v1479 = vpop.f32.mrb[0].mxu0
        %v1480 = vadd.f32 %v1424, %v1479
        %v1481 = vpop.f32.mrb[0].mxu0
        %v1482 = vpop.f32.mrb[0].mxu0
        %v1483 = vadd.f32 %v1424, %v1482
        %v1484 = vpop.f32.mrb[0].mxu0
        %1485 = vdwg.mxu0
        %1486 = vxpose.xlu0.b32.start [1/16] %v1402, 128
        %1487 = vxpose.xlu0.b32.cont [2/16] %v1405, 128
        %1488 = vxpose.xlu0.b32.cont [3/16] %v1410, 128
        %1489 = vxpose.xlu0.b32.cont [4/16] %v1413, 128
        %1490 = vxpose.xlu0.b32.cont [5/16] 0.0, 128
        %1491 = vxpose.xlu0.b32.cont [6/16] 0.0, 128
        %1492 = vxpose.xlu0.b32.cont [7/16] 0.0, 128
        %1493 = vxpose.xlu0.b32.cont [8/16] 0.0, 128
        %1494 = vxpose.xlu0.b32.cont [9/16] 0.0, 128
        %1495 = vxpose.xlu0.b32.cont [10/16] 0.0, 128
        %1496 = vxpose.xlu0.b32.cont [11/16] 0.0, 128
        %1497 = vxpose.xlu0.b32.cont [12/16] 0.0, 128
        %1498 = vxpose.xlu0.b32.cont [13/16] 0.0, 128
        %1499 = vxpose.xlu0.b32.cont [14/16] 0.0, 128
        %1500 = vxpose.xlu0.b32.cont [15/16] 0.0, 128
        %1501 = vxpose.xlu0.b32.end [16/16] 0.0, 128
        %v1502 = vpop.trf.xlu0
        %v1503 = vpop.trf.xlu0
        %v1504 = vpop.trf.xlu0
        %v1505 = vpop.trf.xlu0
        %v1506 = vpop.trf.xlu0
        %v1507 = vpop.trf.xlu0
        %v1508 = vpop.trf.xlu0
        %v1509 = vpop.trf.xlu0
        %v1510 = vpop.trf.xlu0
        %v1511 = vpop.trf.xlu0
        %v1512 = vpop.trf.xlu0
        %v1513 = vpop.trf.xlu0
        %v1514 = vpop.trf.xlu0
        %v1515 = vpop.trf.xlu0
        %v1516 = vpop.trf.xlu0
        %v1517 = vpop.trf.xlu0
        %v1518 = vpack.c.bf16 %v1335, %v1332
        %v1519 = vpack.c.bf16 %v1343, %v1340
        %v1520 = vpack.c.bf16 %v1502, %v1502
        %v1521 = vpack.c.bf16 %v1475, %v1472
        %v1522 = vpack.c.bf16 %v1483, %v1480
        %vm1523 = vcmask 64512
        %v1525 = vsel %vm1523, %v1518, 0
        %v1528 = vsel %vm1523, %v1519, 0
        %vm1530 = vcmask 1043456
        %v1532 = vsel %vm1530, %v1520, 0
        %1534 = vmatprep.subr.bf16.mxu0 0
        %1535 = vmatpush1.bf16.msra.mxu0 %v1532
        %1536 = vmatprep.subr.bf16.mxu0 0
        %1537 = vmatpush1.bf16.msra.mxu0 0
        %1538 = vmatprep.subr.bf16.mxu0 0
        %1539 = vmatpush1.bf16.msra.mxu0 0
        %1540 = vmatprep.subr.bf16.mxu0 0
        %1541 = vmatpush1.bf16.msra.mxu0 0
        %1542 = vmatprep.subr.bf16.mxu0 0
        %1543 = vmatpush1.bf16.msra.mxu0 0
        %1544 = vmatprep.subr.bf16.mxu0 0
        %1545 = vmatpush1.bf16.msra.mxu0 0
        %1546 = vmatprep.subr.bf16.mxu0 0
        %1547 = vmatpush1.bf16.msra.mxu0 0
        %1548 = vmatprep.subr.bf16.mxu0 0
        %1549 = vmatpush1.bf16.msra.mxu0 0
        %1550 = vmatprep.subr.bf16.mxu0 0
        %1551 = vmatpush1.bf16.msra.mxu0 0
        %1552 = vmatprep.subr.bf16.mxu0 0
        %1553 = vmatpush1.bf16.msra.mxu0 0
        %1554 = vmatprep.subr.bf16.mxu0 0
        %1555 = vmatpush1.bf16.msra.mxu0 0
        %1556 = vmatprep.subr.bf16.mxu0 0
        %1557 = vmatpush1.bf16.msra.mxu0 0
        %1558 = vmatprep.subr.bf16.mxu0 0
        %1559 = vmatpush1.bf16.msra.mxu0 0
        %1560 = vmatprep.subr.bf16.mxu0 0
        %1561 = vmatpush1.bf16.msra.mxu0 0
        %1562 = vmatprep.subr.bf16.mxu0 0
        %1563 = vmatpush1.bf16.msra.mxu0 0
        %1564 = vmatprep.subr.bf16.mxu0 0
        %1565 = vmatpush1.bf16.msra.mxu0 0
        %1566 = vmatprep.mubr.bf16.mxu0 0
        %1567 = vmatmul.mubr.bf16.gmra.mrb[0].mxu0 %v1525
        %v1568 = vpop.f32.mrb[0].mxu0
        %v1569 = vadd.f32 0.0, %v1568
        %v1570 = vpop.f32.mrb[0].mxu0
        %v1571 = vpop.f32.mrb[0].mxu0
        %v1572 = vadd.f32 0.0, %v1571
        %v1573 = vpop.f32.mrb[0].mxu0
        %1574 = vmatprep.mubr.bf16.mxu0 0
        %1575 = vmatmul.mubr.bf16.gmra.mrb[0].mxu0 %v1528
        %v1576 = vpop.f32.mrb[0].mxu0
        %v1577 = vadd.f32 0.0, %v1576
        %v1578 = vpop.f32.mrb[0].mxu0
        %v1579 = vpop.f32.mrb[0].mxu0
        %v1580 = vadd.f32 0.0, %v1579
        %v1581 = vpop.f32.mrb[0].mxu0
        %1582 = vdwg.mxu0
        %v1583 = vmul.f32 %v1569, 0.35355338
        %v1584 = vmul.f32 %v1572, 0.35355338
        %v1585 = vmul.f32 %v1577, 0.35355338
        %v1586 = vmul.f32 %v1580, 0.35355338
        %v1587 = vadd.f32 %v1583, %v1192
        %v1588 = vadd.f32 %v1584, %v1193
        %v1589 = vadd.f32 %v1585, %v1194
        %v1590 = vadd.f32 %v1586, %v1195
        %v1591 = vsel %vm1198, %v1587, -inf
        %1592 = vmax.xlane.f32.xlu0 %v1591
        %v1593 = vpop.xlane.xlu0 %1592
        %v1594 = vsel %vm1198, %v1588, -inf
        %1595 = vmax.xlane.f32.xlu0 %v1594
        %v1596 = vpop.xlane.xlu0 %1595
        %v1597 = vsel %vm1198, %v1589, -inf
        %1598 = vmax.xlane.f32.xlu0 %v1597
        %v1599 = vpop.xlane.xlu0 %1598
        %v1600 = vsel %vm1198, %v1590, -inf
        %1601 = vmax.xlane.f32.xlu0 %v1600
        %v1602 = vpop.xlane.xlu0 %1601
        %v1603 = vsub.f32 %v1587, %v1593
        %v1604 = vsub.f32 %v1588, %v1596
        %v1605 = vsub.f32 %v1589, %v1599
        %v1606 = vsub.f32 %v1590, %v1602
        %v1607 = vmul.f32 %v1603, 1.442695
        %v1608 = vpow.pop %v1607
        %v1609 = vmul.f32 %v1604, 1.442695
        %v1610 = vpow.pop %v1609
        %v1611 = vmul.f32 %v1605, 1.442695
        %v1612 = vpow.pop %v1611
        %v1613 = vmul.f32 %v1606, 1.442695
        %v1614 = vpow.pop %v1613
        %v1615 = vsel %vm1198, %v1608, 0.0
        %1616 = vadd.xlane.f32.xlu0 %v1615
        %v1617 = vpop.xlane.xlu0 %1616
        %v1618 = vsel %vm1198, %v1610, 0.0
        %1619 = vadd.xlane.f32.xlu0 %v1618
        %v1620 = vpop.xlane.xlu0 %1619
        %v1621 = vsel %vm1198, %v1612, 0.0
        %1622 = vadd.xlane.f32.xlu0 %v1621
        %v1623 = vpop.xlane.xlu0 %1622
        %v1624 = vsel %vm1198, %v1614, 0.0
        %1625 = vadd.xlane.f32.xlu0 %v1624
        %v1626 = vpop.xlane.xlu0 %1625
        %v1627 = vrcp.pop %v1617
        %v1628 = vrcp.pop %v1620
        %v1629 = vrcp.pop %v1623
        %v1630 = vrcp.pop %v1626
        %v1631 = vmul.f32 %v1608, %v1627
        %v1632 = vmul.f32 %v1610, %v1628
        %v1633 = vmul.f32 %v1612, %v1629
        %v1634 = vmul.f32 %v1614, %v1630
        %v1635 = vpack.c.bf16 %v1632, %v1631
        %v1636 = vpack.c.bf16 %v1634, %v1633
        %v1638 = vsel %vm1198, %v1635, 0
        %v1641 = vsel %vm1198, %v1636, 0
        %1643 = vmatprep.subr.bf16.mxu0 0
        %1644 = vmatpush1.bf16.msra.mxu0 %v1521
        %1645 = vmatprep.subr.bf16.mxu0 0
        %1646 = vmatpush1.bf16.msra.mxu0 %v1522
        %1647 = vmatprep.subr.bf16.mxu0 0
        %1648 = vmatpush1.bf16.msra.mxu0 0
        %1649 = vmatprep.subr.bf16.mxu0 0
        %1650 = vmatpush1.bf16.msra.mxu0 0
        %1651 = vmatprep.subr.bf16.mxu0 0
        %1652 = vmatpush1.bf16.msra.mxu0 0
        %1653 = vmatprep.subr.bf16.mxu0 0
        %1654 = vmatpush1.bf16.msra.mxu0 0
        %1655 = vmatprep.subr.bf16.mxu0 0
        %1656 = vmatpush1.bf16.msra.mxu0 0
        %1657 = vmatprep.subr.bf16.mxu0 0
        %1658 = vmatpush1.bf16.msra.mxu0 0
        %1659 = vmatprep.subr.bf16.mxu0 0
        %1660 = vmatpush1.bf16.msra.mxu0 0
        %1661 = vmatprep.subr.bf16.mxu0 0
        %1662 = vmatpush1.bf16.msra.mxu0 0
        %1663 = vmatprep.subr.bf16.mxu0 0
        %1664 = vmatpush1.bf16.msra.mxu0 0
        %1665 = vmatprep.subr.bf16.mxu0 0
        %1666 = vmatpush1.bf16.msra.mxu0 0
        %1667 = vmatprep.subr.bf16.mxu0 0
        %1668 = vmatpush1.bf16.msra.mxu0 0
        %1669 = vmatprep.subr.bf16.mxu0 0
        %1670 = vmatpush1.bf16.msra.mxu0 0
        %1671 = vmatprep.subr.bf16.mxu0 0
        %1672 = vmatpush1.bf16.msra.mxu0 0
        %1673 = vmatprep.subr.bf16.mxu0 0
        %1674 = vmatpush1.bf16.msra.mxu0 0
        %1675 = vmatprep.mubr.bf16.mxu0 0
        %1676 = vmatmul.mubr.bf16.gmra.mrb[0].mxu0 %v1638
        %v1677 = vpop.f32.mrb[0].mxu0
        %v1678 = vadd.f32 0.0, %v1677
        %v1679 = vpop.f32.mrb[0].mxu0
        %v1680 = vpop.f32.mrb[0].mxu0
        %v1681 = vadd.f32 0.0, %v1680
        %v1682 = vpop.f32.mrb[0].mxu0
        %1683 = vmatprep.mubr.bf16.mxu0 0
        %1684 = vmatmul.mubr.bf16.gmra.mrb[0].mxu0 %v1641
        %v1685 = vpop.f32.mrb[0].mxu0
        %v1686 = vadd.f32 0.0, %v1685
        %v1687 = vpop.f32.mrb[0].mxu0
        %v1688 = vpop.f32.mrb[0].mxu0
        %v1689 = vadd.f32 0.0, %v1688
        %v1690 = vpop.f32.mrb[0].mxu0
        %1691 = vdwg.mxu0
        %v1692 = vpack.c.bf16 %v1681, %v1678
        %v1693 = vpack.c.bf16 %v1689, %v1686
        %v1694 = vld [vmem:[%s972] sm:$0xf]
        %v1695 = vpack.c.bf16 %v1503, %v1503
        %1698 = vrot.lane.b32.xlu0 %v1518, 120
        %v1699 = vpop.permute.xlu0 %1698
        %1700 = vrot.lane.b32.xlu0 %v1519, 120
        %v1701 = vpop.permute.xlu0 %1700
        %v1703 = vsel %vm1523, %v1699, 0
        %v1706 = vsel %vm1523, %v1701, 0
        %v1709 = vsel %vm1530, %v1695, 0
        %1711 = vmatprep.subr.bf16.mxu0 0
        %1712 = vmatpush1.bf16.msra.mxu0 %v1709
        %1713 = vmatprep.subr.bf16.mxu0 0
        %1714 = vmatpush1.bf16.msra.mxu0 0
        %1715 = vmatprep.subr.bf16.mxu0 0
        %1716 = vmatpush1.bf16.msra.mxu0 0
        %1717 = vmatprep.subr.bf16.mxu0 0
        %1718 = vmatpush1.bf16.msra.mxu0 0
        %1719 = vmatprep.subr.bf16.mxu0 0
        %1720 = vmatpush1.bf16.msra.mxu0 0
        %1721 = vmatprep.subr.bf16.mxu0 0
        %1722 = vmatpush1.bf16.msra.mxu0 0
        %1723 = vmatprep.subr.bf16.mxu0 0
        %1724 = vmatpush1.bf16.msra.mxu0 0
        %1725 = vmatprep.subr.bf16.mxu0 0
        %1726 = vmatpush1.bf16.msra.mxu0 0
        %1727 = vmatprep.subr.bf16.mxu0 0
        %1728 = vmatpush1.bf16.msra.mxu0 0
        %1729 = vmatprep.subr.bf16.mxu0 0
        %1730 = vmatpush1.bf16.msra.mxu0 0
        %1731 = vmatprep.subr.bf16.mxu0 0
        %1732 = vmatpush1.bf16.msra.mxu0 0
        %1733 = vmatprep.subr.bf16.mxu0 0
        %1734 = vmatpush1.bf16.msra.mxu0 0
        %1735 = vmatprep.subr.bf16.mxu0 0
        %1736 = vmatpush1.bf16.msra.mxu0 0
        %1737 = vmatprep.subr.bf16.mxu0 0
        %1738 = vmatpush1.bf16.msra.mxu0 0
        %1739 = vmatprep.subr.bf16.mxu0 0
        %1740 = vmatpush1.bf16.msra.mxu0 0
        %1741 = vmatprep.subr.bf16.mxu0 0
        %1742 = vmatpush1.bf16.msra.mxu0 0
        %1743 = vmatprep.mubr.bf16.mxu0 0
        %1744 = vmatmul.mubr.bf16.gmra.mrb[0].mxu0 %v1703
        %v1745 = vpop.f32.mrb[0].mxu0
        %v1746 = vadd.f32 0.0, %v1745
        %v1747 = vpop.f32.mrb[0].mxu0
        %v1748 = vpop.f32.mrb[0].mxu0
        %v1749 = vadd.f32 0.0, %v1748
        %v1750 = vpop.f32.mrb[0].mxu0
        %1751 = vmatprep.mubr.bf16.mxu0 0
        %1752 = vmatmul.mubr.bf16.gmra.mrb[0].mxu0 %v1706
        %v1753 = vpop.f32.mrb[0].mxu0
        %v1754 = vadd.f32 0.0, %v1753
        %v1755 = vpop.f32.mrb[0].mxu0
        %v1756 = vpop.f32.mrb[0].mxu0
        %v1757 = vadd.f32 0.0, %v1756
        %v1758 = vpop.f32.mrb[0].mxu0
        %1759 = vdwg.mxu0
        %v1760 = vmul.f32 %v1746, 0.35355338
        %v1761 = vmul.f32 %v1749, 0.35355338
        %v1762 = vmul.f32 %v1754, 0.35355338
        %v1763 = vmul.f32 %v1757, 0.35355338
        %v1764 = vadd.f32 %v1760, %v1192
        %v1765 = vadd.f32 %v1761, %v1193
        %v1766 = vadd.f32 %v1762, %v1194
        %v1767 = vadd.f32 %v1763, %v1195
        %v1768 = vsel %vm1198, %v1764, -inf
        %1769 = vmax.xlane.f32.xlu0 %v1768
        %v1770 = vpop.xlane.xlu0 %1769
        %v1771 = vsel %vm1198, %v1765, -inf
        %1772 = vmax.xlane.f32.xlu0 %v1771
        %v1773 = vpop.xlane.xlu0 %1772
        %v1774 = vsel %vm1198, %v1766, -inf
        %1775 = vmax.xlane.f32.xlu0 %v1774
        %v1776 = vpop.xlane.xlu0 %1775
        %v1777 = vsel %vm1198, %v1767, -inf
        %1778 = vmax.xlane.f32.xlu0 %v1777
        %v1779 = vpop.xlane.xlu0 %1778
        %v1780 = vsub.f32 %v1764, %v1770
        %v1781 = vsub.f32 %v1765, %v1773
        %v1782 = vsub.f32 %v1766, %v1776
        %v1783 = vsub.f32 %v1767, %v1779
        %v1784 = vmul.f32 %v1780, 1.442695
        %v1785 = vpow.pop %v1784
        %v1786 = vmul.f32 %v1781, 1.442695
        %v1787 = vpow.pop %v1786
        %v1788 = vmul.f32 %v1782, 1.442695
        %v1789 = vpow.pop %v1788
        %v1790 = vmul.f32 %v1783, 1.442695
        %v1791 = vpow.pop %v1790
        %v1792 = vsel %vm1198, %v1785, 0.0
        %1793 = vadd.xlane.f32.xlu0 %v1792
        %v1794 = vpop.xlane.xlu0 %1793
        %v1795 = vsel %vm1198, %v1787, 0.0
        %1796 = vadd.xlane.f32.xlu0 %v1795
        %v1797 = vpop.xlane.xlu0 %1796
        %v1798 = vsel %vm1198, %v1789, 0.0
        %1799 = vadd.xlane.f32.xlu0 %v1798
        %v1800 = vpop.xlane.xlu0 %1799
        %v1801 = vsel %vm1198, %v1791, 0.0
        %1802 = vadd.xlane.f32.xlu0 %v1801
        %v1803 = vpop.xlane.xlu0 %1802
        %v1804 = vrcp.pop %v1794
        %v1805 = vrcp.pop %v1797
        %v1806 = vrcp.pop %v1800
        %v1807 = vrcp.pop %v1803
        %v1808 = vmul.f32 %v1785, %v1804
        %v1809 = vmul.f32 %v1787, %v1805
        %v1810 = vmul.f32 %v1789, %v1806
        %v1811 = vmul.f32 %v1791, %v1807
        %v1812 = vpack.c.bf16 %v1809, %v1808
        %v1813 = vpack.c.bf16 %v1811, %v1810
        %1816 = vrot.lane.b32.xlu0 %v1521, 120
        %v1817 = vpop.permute.xlu0 %1816
        %1818 = vrot.lane.b32.xlu0 %v1522, 120
        %v1819 = vpop.permute.xlu0 %1818
        %v1823 = vsel %vm1198, %v1812, 0
        %v1826 = vsel %vm1198, %v1813, 0
        %1828 = vmatprep.subr.bf16.mxu0 0
        %1829 = vmatpush1.bf16.msra.mxu0 %v1817
        %1830 = vmatprep.subr.bf16.mxu0 0
        %1831 = vmatpush1.bf16.msra.mxu0 %v1819
        %1832 = vmatprep.subr.bf16.mxu0 0
        %1833 = vmatpush1.bf16.msra.mxu0 0
        %1834 = vmatprep.subr.bf16.mxu0 0
        %1835 = vmatpush1.bf16.msra.mxu0 0
        %1836 = vmatprep.subr.bf16.mxu0 0
        %1837 = vmatpush1.bf16.msra.mxu0 0
        %1838 = vmatprep.subr.bf16.mxu0 0
        %1839 = vmatpush1.bf16.msra.mxu0 0
        %1840 = vmatprep.subr.bf16.mxu0 0
        %1841 = vmatpush1.bf16.msra.mxu0 0
        %1842 = vmatprep.subr.bf16.mxu0 0
        %1843 = vmatpush1.bf16.msra.mxu0 0
        %1844 = vmatprep.subr.bf16.mxu0 0
        %1845 = vmatpush1.bf16.msra.mxu0 0
        %1846 = vmatprep.subr.bf16.mxu0 0
        %1847 = vmatpush1.bf16.msra.mxu0 0
        %1848 = vmatprep.subr.bf16.mxu0 0
        %1849 = vmatpush1.bf16.msra.mxu0 0
        %1850 = vmatprep.subr.bf16.mxu0 0
        %1851 = vmatpush1.bf16.msra.mxu0 0
        %1852 = vmatprep.subr.bf16.mxu0 0
        %1853 = vmatpush1.bf16.msra.mxu0 0
        %1854 = vmatprep.subr.bf16.mxu0 0
        %1855 = vmatpush1.bf16.msra.mxu0 0
        %1856 = vmatprep.subr.bf16.mxu0 0
        %1857 = vmatpush1.bf16.msra.mxu0 0
        %1858 = vmatprep.subr.bf16.mxu0 0
        %1859 = vmatpush1.bf16.msra.mxu0 0
        %1860 = vmatprep.mubr.bf16.mxu0 0
        %1861 = vmatmul.mubr.bf16.gmra.mrb[0].mxu0 %v1823
        %v1862 = vpop.f32.mrb[0].mxu0
        %v1863 = vadd.f32 0.0, %v1862
        %v1864 = vpop.f32.mrb[0].mxu0
        %v1865 = vpop.f32.mrb[0].mxu0
        %v1866 = vadd.f32 0.0, %v1865
        %v1867 = vpop.f32.mrb[0].mxu0
        %1868 = vmatprep.mubr.bf16.mxu0 0
        %1869 = vmatmul.mubr.bf16.gmra.mrb[0].mxu0 %v1826
        %v1870 = vpop.f32.mrb[0].mxu0
        %v1871 = vadd.f32 0.0, %v1870
        %v1872 = vpop.f32.mrb[0].mxu0
        %v1873 = vpop.f32.mrb[0].mxu0
        %v1874 = vadd.f32 0.0, %v1873
        %v1875 = vpop.f32.mrb[0].mxu0
        %1876 = vdwg.mxu0
        %v1877 = vpack.c.bf16 %v1866, %v1863
        %v1878 = vpack.c.bf16 %v1874, %v1871
        %s1879 = scalar_lea.vmem %s972, 4 [#allocation13]
        %v1880 = vld [vmem:[%s1879] sm:$0xf]
        %v1882 = vsel %vm1523, %v1877, 0
        %v1885 = vsel %vm1523, %v1878, 0
        %v1888 = vsel %vm1530, %v1880, 0
        %1890 = vmatprep.subr.bf16.mxu0 0
        %1891 = vmatpush1.bf16.msra.mxu0 %v1888
        %1892 = vmatprep.subr.bf16.mxu0 0
        %1893 = vmatpush1.bf16.msra.mxu0 0
        %1894 = vmatprep.subr.bf16.mxu0 0
        %1895 = vmatpush1.bf16.msra.mxu0 0
        %1896 = vmatprep.subr.bf16.mxu0 0
        %1897 = vmatpush1.bf16.msra.mxu0 0
        %1898 = vmatprep.subr.bf16.mxu0 0
        %1899 = vmatpush1.bf16.msra.mxu0 0
        %1900 = vmatprep.subr.bf16.mxu0 0
        %1901 = vmatpush1.bf16.msra.mxu0 0
        %1902 = vmatprep.subr.bf16.mxu0 0
        %1903 = vmatpush1.bf16.msra.mxu0 0
        %1904 = vmatprep.subr.bf16.mxu0 0
        %1905 = vmatpush1.bf16.msra.mxu0 0
        %1906 = vmatprep.subr.bf16.mxu0 0
        %1907 = vmatpush1.bf16.msra.mxu0 0
        %1908 = vmatprep.subr.bf16.mxu0 0
        %1909 = vmatpush1.bf16.msra.mxu0 0
        %1910 = vmatprep.subr.bf16.mxu0 0
        %1911 = vmatpush1.bf16.msra.mxu0 0
        %1912 = vmatprep.subr.bf16.mxu0 0
        %1913 = vmatpush1.bf16.msra.mxu0 0
        %1914 = vmatprep.subr.bf16.mxu0 0
        %1915 = vmatpush1.bf16.msra.mxu0 0
        %1916 = vmatprep.subr.bf16.mxu0 0
        %1917 = vmatpush1.bf16.msra.mxu0 0
        %1918 = vmatprep.subr.bf16.mxu0 0
        %1919 = vmatpush1.bf16.msra.mxu0 0
        %1920 = vmatprep.subr.bf16.mxu0 0
        %1921 = vmatpush1.bf16.msra.mxu0 0
        %1922 = vmatprep.mubr.bf16.mxu0 0
        %1923 = vmatmul.mubr.bf16.gmra.mrb[0].mxu0 %v1882
        %v1924 = vpop.f32.mrb[0].mxu0
        %v1925 = vadd.f32 0.0, %v1924
        %v1926 = vpop.f32.mrb[0].mxu0
        %v1927 = vpop.f32.mrb[0].mxu0
        %v1928 = vadd.f32 0.0, %v1927
        %v1929 = vpop.f32.mrb[0].mxu0
        %1930 = vmatprep.mubr.bf16.mxu0 0
        %1931 = vmatmul.mubr.bf16.gmra.mrb[0].mxu0 %v1885
        %v1932 = vpop.f32.mrb[0].mxu0
        %v1933 = vadd.f32 0.0, %v1932
        %v1934 = vpop.f32.mrb[0].mxu0
        %v1935 = vpop.f32.mrb[0].mxu0
        %v1936 = vadd.f32 0.0, %v1935
        %v1937 = vpop.f32.mrb[0].mxu0
        %1938 = vdwg.mxu0
        %v1940 = vsel %vm1523, %v1692, 0
        %v1943 = vsel %vm1523, %v1693, 0
        %v1946 = vsel %vm1530, %v1694, 0
        %1948 = vmatprep.subr.bf16.mxu0 0
        %1949 = vmatpush1.bf16.msra.mxu0 %v1946
        %1950 = vmatprep.subr.bf16.mxu0 0
        %1951 = vmatpush1.bf16.msra.mxu0 0
        %1952 = vmatprep.subr.bf16.mxu0 0
        %1953 = vmatpush1.bf16.msra.mxu0 0
        %1954 = vmatprep.subr.bf16.mxu0 0
        %1955 = vmatpush1.bf16.msra.mxu0 0
        %1956 = vmatprep.subr.bf16.mxu0 0
        %1957 = vmatpush1.bf16.msra.mxu0 0
        %1958 = vmatprep.subr.bf16.mxu0 0
        %1959 = vmatpush1.bf16.msra.mxu0 0
        %1960 = vmatprep.subr.bf16.mxu0 0
        %1961 = vmatpush1.bf16.msra.mxu0 0
        %1962 = vmatprep.subr.bf16.mxu0 0
        %1963 = vmatpush1.bf16.msra.mxu0 0
        %1964 = vmatprep.subr.bf16.mxu0 0
        %1965 = vmatpush1.bf16.msra.mxu0 0
        %1966 = vmatprep.subr.bf16.mxu0 0
        %1967 = vmatpush1.bf16.msra.mxu0 0
        %1968 = vmatprep.subr.bf16.mxu0 0
        %1969 = vmatpush1.bf16.msra.mxu0 0
        %1970 = vmatprep.subr.bf16.mxu0 0
        %1971 = vmatpush1.bf16.msra.mxu0 0
        %1972 = vmatprep.subr.bf16.mxu0 0
        %1973 = vmatpush1.bf16.msra.mxu0 0
        %1974 = vmatprep.subr.bf16.mxu0 0
        %1975 = vmatpush1.bf16.msra.mxu0 0
        %1976 = vmatprep.subr.bf16.mxu0 0
        %1977 = vmatpush1.bf16.msra.mxu0 0
        %1978 = vmatprep.subr.bf16.mxu0 0
        %1979 = vmatpush1.bf16.msra.mxu0 0
        %1980 = vmatprep.mubr.bf16.mxu0 0
        %1981 = vmatmul.mubr.bf16.gmra.mrb[0].mxu0 %v1940
        %v1982 = vpop.f32.mrb[0].mxu0
        %v1983 = vadd.f32 %v1925, %v1982
        %v1984 = vpop.f32.mrb[0].mxu0
        %v1985 = vpop.f32.mrb[0].mxu0
        %v1986 = vadd.f32 %v1928, %v1985
        %v1987 = vpop.f32.mrb[0].mxu0
        %1988 = vmatprep.mubr.bf16.mxu0 0
        %1989 = vmatmul.mubr.bf16.gmra.mrb[0].mxu0 %v1943
        %v1990 = vpop.f32.mrb[0].mxu0
        %v1991 = vadd.f32 %v1933, %v1990
        %v1992 = vpop.f32.mrb[0].mxu0
        %v1993 = vpop.f32.mrb[0].mxu0
        %v1994 = vadd.f32 %v1936, %v1993
        %v1995 = vpop.f32.mrb[0].mxu0
        %1996 = vdwg.mxu0
        %v1997 = vpack.c.bf16 %v1504, %v1504
        %1998 = vrot.lane.b32.xlu0 %v1518, 112
        %v1999 = vpop.permute.xlu0 %1998
        %2000 = vrot.lane.b32.xlu0 %v1519, 112
        %v2001 = vpop.permute.xlu0 %2000
        %v2003 = vsel %vm1523, %v1999, 0
        %v2006 = vsel %vm1523, %v2001, 0
        %v2009 = vsel %vm1530, %v1997, 0
        %2011 = vmatprep.subr.bf16.mxu0 0
        %2012 = vmatpush1.bf16.msra.mxu0 %v2009
        %2013 = vmatprep.subr.bf16.mxu0 0
        %2014 = vmatpush1.bf16.msra.mxu0 0
        %2015 = vmatprep.subr.bf16.mxu0 0
        %2016 = vmatpush1.bf16.msra.mxu0 0
        %2017 = vmatprep.subr.bf16.mxu0 0
        %2018 = vmatpush1.bf16.msra.mxu0 0
        %2019 = vmatprep.subr.bf16.mxu0 0
        %2020 = vmatpush1.bf16.msra.mxu0 0
        %2021 = vmatprep.subr.bf16.mxu0 0
        %2022 = vmatpush1.bf16.msra.mxu0 0
        %2023 = vmatprep.subr.bf16.mxu0 0
        %2024 = vmatpush1.bf16.msra.mxu0 0
        %2025 = vmatprep.subr.bf16.mxu0 0
        %2026 = vmatpush1.bf16.msra.mxu0 0
        %2027 = vmatprep.subr.bf16.mxu0 0
        %2028 = vmatpush1.bf16.msra.mxu0 0
        %2029 = vmatprep.subr.bf16.mxu0 0
        %2030 = vmatpush1.bf16.msra.mxu0 0
        %2031 = vmatprep.subr.bf16.mxu0 0
        %2032 = vmatpush1.bf16.msra.mxu0 0
        %2033 = vmatprep.subr.bf16.mxu0 0
        %2034 = vmatpush1.bf16.msra.mxu0 0
        %2035 = vmatprep.subr.bf16.mxu0 0
        %2036 = vmatpush1.bf16.msra.mxu0 0
        %2037 = vmatprep.subr.bf16.mxu0 0
        %2038 = vmatpush1.bf16.msra.mxu0 0
        %2039 = vmatprep.subr.bf16.mxu0 0
        %2040 = vmatpush1.bf16.msra.mxu0 0
        %2041 = vmatprep.subr.bf16.mxu0 0
        %2042 = vmatpush1.bf16.msra.mxu0 0
        %2043 = vmatprep.mubr.bf16.mxu0 0
        %2044 = vmatmul.mubr.bf16.gmra.mrb[0].mxu0 %v2003
        %v2045 = vpop.f32.mrb[0].mxu0
        %v2046 = vadd.f32 0.0, %v2045
        %v2047 = vpop.f32.mrb[0].mxu0
        %v2048 = vpop.f32.mrb[0].mxu0
        %v2049 = vadd.f32 0.0, %v2048
        %v2050 = vpop.f32.mrb[0].mxu0
        %2051 = vmatprep.mubr.bf16.mxu0 0
        %2052 = vmatmul.mubr.bf16.gmra.mrb[0].mxu0 %v2006
        %v2053 = vpop.f32.mrb[0].mxu0
        %v2054 = vadd.f32 0.0, %v2053
        %v2055 = vpop.f32.mrb[0].mxu0
        %v2056 = vpop.f32.mrb[0].mxu0
        %v2057 = vadd.f32 0.0, %v2056
        %v2058 = vpop.f32.mrb[0].mxu0
        %2059 = vdwg.mxu0
        %v2060 = vmul.f32 %v2046, 0.35355338
        %v2061 = vmul.f32 %v2049, 0.35355338
        %v2062 = vmul.f32 %v2054, 0.35355338
        %v2063 = vmul.f32 %v2057, 0.35355338
        %v2064 = vadd.f32 %v2060, %v1192
        %v2065 = vadd.f32 %v2061, %v1193
        %v2066 = vadd.f32 %v2062, %v1194
        %v2067 = vadd.f32 %v2063, %v1195
        %v2068 = vsel %vm1198, %v2064, -inf
        %2069 = vmax.xlane.f32.xlu0 %v2068
        %v2070 = vpop.xlane.xlu0 %2069
        %v2071 = vsel %vm1198, %v2065, -inf
        %2072 = vmax.xlane.f32.xlu0 %v2071
        %v2073 = vpop.xlane.xlu0 %2072
        %v2074 = vsel %vm1198, %v2066, -inf
        %2075 = vmax.xlane.f32.xlu0 %v2074
        %v2076 = vpop.xlane.xlu0 %2075
        %v2077 = vsel %vm1198, %v2067, -inf
        %2078 = vmax.xlane.f32.xlu0 %v2077
        %v2079 = vpop.xlane.xlu0 %2078
        %v2080 = vsub.f32 %v2064, %v2070
        %v2081 = vsub.f32 %v2065, %v2073
        %v2082 = vsub.f32 %v2066, %v2076
        %v2083 = vsub.f32 %v2067, %v2079
        %v2084 = vmul.f32 %v2080, 1.442695
        %v2085 = vpow.pop %v2084
        %v2086 = vmul.f32 %v2081, 1.442695
        %v2087 = vpow.pop %v2086
        %v2088 = vmul.f32 %v2082, 1.442695
        %v2089 = vpow.pop %v2088
        %v2090 = vmul.f32 %v2083, 1.442695
        %v2091 = vpow.pop %v2090
        %v2092 = vsel %vm1198, %v2085, 0.0
        %2093 = vadd.xlane.f32.xlu0 %v2092
        %v2094 = vpop.xlane.xlu0 %2093
        %v2095 = vsel %vm1198, %v2087, 0.0
        %2096 = vadd.xlane.f32.xlu0 %v2095
        %v2097 = vpop.xlane.xlu0 %2096
        %v2098 = vsel %vm1198, %v2089, 0.0
        %2099 = vadd.xlane.f32.xlu0 %v2098
        %v2100 = vpop.xlane.xlu0 %2099
        %v2101 = vsel %vm1198, %v2091, 0.0
        %2102 = vadd.xlane.f32.xlu0 %v2101
        %v2103 = vpop.xlane.xlu0 %2102
        %v2104 = vrcp.pop %v2094
        %v2105 = vrcp.pop %v2097
        %v2106 = vrcp.pop %v2100
        %v2107 = vrcp.pop %v2103
        %v2108 = vmul.f32 %v2085, %v2104
        %v2109 = vmul.f32 %v2087, %v2105
        %v2110 = vmul.f32 %v2089, %v2106
        %v2111 = vmul.f32 %v2091, %v2107
        %v2112 = vpack.c.bf16 %v2109, %v2108
        %v2113 = vpack.c.bf16 %v2111, %v2110
        %2114 = vrot.lane.b32.xlu0 %v1521, 112
        %v2115 = vpop.permute.xlu0 %2114
        %2116 = vrot.lane.b32.xlu0 %v1522, 112
        %v2117 = vpop.permute.xlu0 %2116
        %v2121 = vsel %vm1198, %v2112, 0
        %v2124 = vsel %vm1198, %v2113, 0
        %2126 = vmatprep.subr.bf16.mxu0 0
        %2127 = vmatpush1.bf16.msra.mxu0 %v2115
        %2128 = vmatprep.subr.bf16.mxu0 0
        %2129 = vmatpush1.bf16.msra.mxu0 %v2117
        %2130 = vmatprep.subr.bf16.mxu0 0
        %2131 = vmatpush1.bf16.msra.mxu0 0
        %2132 = vmatprep.subr.bf16.mxu0 0
        %2133 = vmatpush1.bf16.msra.mxu0 0
        %2134 = vmatprep.subr.bf16.mxu0 0
        %2135 = vmatpush1.bf16.msra.mxu0 0
        %2136 = vmatprep.subr.bf16.mxu0 0
        %2137 = vmatpush1.bf16.msra.mxu0 0
        %2138 = vmatprep.subr.bf16.mxu0 0
        %2139 = vmatpush1.bf16.msra.mxu0 0
        %2140 = vmatprep.subr.bf16.mxu0 0
        %2141 = vmatpush1.bf16.msra.mxu0 0
        %2142 = vmatprep.subr.bf16.mxu0 0
        %2143 = vmatpush1.bf16.msra.mxu0 0
        %2144 = vmatprep.subr.bf16.mxu0 0
        %2145 = vmatpush1.bf16.msra.mxu0 0
        %2146 = vmatprep.subr.bf16.mxu0 0
        %2147 = vmatpush1.bf16.msra.mxu0 0
        %2148 = vmatprep.subr.bf16.mxu0 0
        %2149 = vmatpush1.bf16.msra.mxu0 0
        %2150 = vmatprep.subr.bf16.mxu0 0
        %2151 = vmatpush1.bf16.msra.mxu0 0
        %2152 = vmatprep.subr.bf16.mxu0 0
        %2153 = vmatpush1.bf16.msra.mxu0 0
        %2154 = vmatprep.subr.bf16.mxu0 0
        %2155 = vmatpush1.bf16.msra.mxu0 0
        %2156 = vmatprep.subr.bf16.mxu0 0
        %2157 = vmatpush1.bf16.msra.mxu0 0
        %2158 = vmatprep.mubr.bf16.mxu0 0
        %2159 = vmatmul.mubr.bf16.gmra.mrb[0].mxu0 %v2121
        %v2160 = vpop.f32.mrb[0].mxu0
        %v2161 = vadd.f32 0.0, %v2160
        %v2162 = vpop.f32.mrb[0].mxu0
        %v2163 = vpop.f32.mrb[0].mxu0
        %v2164 = vadd.f32 0.0, %v2163
        %v2165 = vpop.f32.mrb[0].mxu0
        %2166 = vmatprep.mubr.bf16.mxu0 0
        %2167 = vmatmul.mubr.bf16.gmra.mrb[0].mxu0 %v2124
        %v2168 = vpop.f32.mrb[0].mxu0
        %v2169 = vadd.f32 0.0, %v2168
        %v2170 = vpop.f32.mrb[0].mxu0
        %v2171 = vpop.f32.mrb[0].mxu0
        %v2172 = vadd.f32 0.0, %v2171
        %v2173 = vpop.f32.mrb[0].mxu0
        %2174 = vdwg.mxu0
        %v2175 = vpack.c.bf16 %v2164, %v2161
        %v2176 = vpack.c.bf16 %v2172, %v2169
        %s2177 = scalar_lea.vmem %s972, 8 [#allocation13]
        %v2178 = vld [vmem:[%s2177] sm:$0xf]
        %v2180 = vsel %vm1523, %v2175, 0
        %v2183 = vsel %vm1523, %v2176, 0
        %v2186 = vsel %vm1530, %v2178, 0
        %2188 = vmatprep.subr.bf16.mxu0 0
        %2189 = vmatpush1.bf16.msra.mxu0 %v2186
        %2190 = vmatprep.subr.bf16.mxu0 0
        %2191 = vmatpush1.bf16.msra.mxu0 0
        %2192 = vmatprep.subr.bf16.mxu0 0
        %2193 = vmatpush1.bf16.msra.mxu0 0
        %2194 = vmatprep.subr.bf16.mxu0 0
        %2195 = vmatpush1.bf16.msra.mxu0 0
        %2196 = vmatprep.subr.bf16.mxu0 0
        %2197 = vmatpush1.bf16.msra.mxu0 0
        %2198 = vmatprep.subr.bf16.mxu0 0
        %2199 = vmatpush1.bf16.msra.mxu0 0
        %2200 = vmatprep.subr.bf16.mxu0 0
        %2201 = vmatpush1.bf16.msra.mxu0 0
        %2202 = vmatprep.subr.bf16.mxu0 0
        %2203 = vmatpush1.bf16.msra.mxu0 0
        %2204 = vmatprep.subr.bf16.mxu0 0
        %2205 = vmatpush1.bf16.msra.mxu0 0
        %2206 = vmatprep.subr.bf16.mxu0 0
        %2207 = vmatpush1.bf16.msra.mxu0 0
        %2208 = vmatprep.subr.bf16.mxu0 0
        %2209 = vmatpush1.bf16.msra.mxu0 0
        %2210 = vmatprep.subr.bf16.mxu0 0
        %2211 = vmatpush1.bf16.msra.mxu0 0
        %2212 = vmatprep.subr.bf16.mxu0 0
        %2213 = vmatpush1.bf16.msra.mxu0 0
        %2214 = vmatprep.subr.bf16.mxu0 0
        %2215 = vmatpush1.bf16.msra.mxu0 0
        %2216 = vmatprep.subr.bf16.mxu0 0
        %2217 = vmatpush1.bf16.msra.mxu0 0
        %2218 = vmatprep.subr.bf16.mxu0 0
        %2219 = vmatpush1.bf16.msra.mxu0 0
        %2220 = vmatprep.mubr.bf16.mxu0 0
        %2221 = vmatmul.mubr.bf16.gmra.mrb[0].mxu0 %v2180
        %v2222 = vpop.f32.mrb[0].mxu0
        %v2223 = vadd.f32 0.0, %v2222
        %v2224 = vpop.f32.mrb[0].mxu0
        %v2225 = vpop.f32.mrb[0].mxu0
        %v2226 = vadd.f32 0.0, %v2225
        %v2227 = vpop.f32.mrb[0].mxu0
        %2228 = vmatprep.mubr.bf16.mxu0 0
        %2229 = vmatmul.mubr.bf16.gmra.mrb[0].mxu0 %v2183
        %v2230 = vpop.f32.mrb[0].mxu0
        %v2231 = vadd.f32 0.0, %v2230
        %v2232 = vpop.f32.mrb[0].mxu0
        %v2233 = vpop.f32.mrb[0].mxu0
        %v2234 = vadd.f32 0.0, %v2233
        %v2235 = vpop.f32.mrb[0].mxu0
        %2236 = vdwg.mxu0
        %v2237 = vadd.f32 %v1983, %v2223
        %v2238 = vadd.f32 %v1986, %v2226
        %v2239 = vadd.f32 %v1991, %v2231
        %v2240 = vadd.f32 %v1994, %v2234
        %v2241 = vpack.c.bf16 %v1505, %v1505
        %2242 = vrot.lane.b32.xlu0 %v1518, 104
        %v2243 = vpop.permute.xlu0 %2242
        %2244 = vrot.lane.b32.xlu0 %v1519, 104
        %v2245 = vpop.permute.xlu0 %2244
        %v2247 = vsel %vm1523, %v2243, 0
        %v2250 = vsel %vm1523, %v2245, 0
        %v2253 = vsel %vm1530, %v2241, 0
        %2255 = vmatprep.subr.bf16.mxu0 0
        %2256 = vmatpush1.bf16.msra.mxu0 %v2253
        %2257 = vmatprep.subr.bf16.mxu0 0
        %2258 = vmatpush1.bf16.msra.mxu0 0
        %2259 = vmatprep.subr.bf16.mxu0 0
        %2260 = vmatpush1.bf16.msra.mxu0 0
        %2261 = vmatprep.subr.bf16.mxu0 0
        %2262 = vmatpush1.bf16.msra.mxu0 0
        %2263 = vmatprep.subr.bf16.mxu0 0
        %2264 = vmatpush1.bf16.msra.mxu0 0
        %2265 = vmatprep.subr.bf16.mxu0 0
        %2266 = vmatpush1.bf16.msra.mxu0 0
        %2267 = vmatprep.subr.bf16.mxu0 0
        %2268 = vmatpush1.bf16.msra.mxu0 0
        %2269 = vmatprep.subr.bf16.mxu0 0
        %2270 = vmatpush1.bf16.msra.mxu0 0
        %2271 = vmatprep.subr.bf16.mxu0 0
        %2272 = vmatpush1.bf16.msra.mxu0 0
        %2273 = vmatprep.subr.bf16.mxu0 0
        %2274 = vmatpush1.bf16.msra.mxu0 0
        %2275 = vmatprep.subr.bf16.mxu0 0
        %2276 = vmatpush1.bf16.msra.mxu0 0
        %2277 = vmatprep.subr.bf16.mxu0 0
        %2278 = vmatpush1.bf16.msra.mxu0 0
        %2279 = vmatprep.subr.bf16.mxu0 0
        %2280 = vmatpush1.bf16.msra.mxu0 0
        %2281 = vmatprep.subr.bf16.mxu0 0
        %2282 = vmatpush1.bf16.msra.mxu0 0
        %2283 = vmatprep.subr.bf16.mxu0 0
        %2284 = vmatpush1.bf16.msra.mxu0 0
        %2285 = vmatprep.subr.bf16.mxu0 0
        %2286 = vmatpush1.bf16.msra.mxu0 0
        %2287 = vmatprep.mubr.bf16.mxu0 0
        %2288 = vmatmul.mubr.bf16.gmra.mrb[0].mxu0 %v2247
        %v2289 = vpop.f32.mrb[0].mxu0
        %v2290 = vadd.f32 0.0, %v2289
        %v2291 = vpop.f32.mrb[0].mxu0
        %v2292 = vpop.f32.mrb[0].mxu0
        %v2293 = vadd.f32 0.0, %v2292
        %v2294 = vpop.f32.mrb[0].mxu0
        %2295 = vmatprep.mubr.bf16.mxu0 0
        %2296 = vmatmul.mubr.bf16.gmra.mrb[0].mxu0 %v2250
        %v2297 = vpop.f32.mrb[0].mxu0
        %v2298 = vadd.f32 0.0, %v2297
        %v2299 = vpop.f32.mrb[0].mxu0
        %v2300 = vpop.f32.mrb[0].mxu0
        %v2301 = vadd.f32 0.0, %v2300
        %v2302 = vpop.f32.mrb[0].mxu0
        %2303 = vdwg.mxu0
        %v2304 = vmul.f32 %v2290, 0.35355338
        %v2305 = vmul.f32 %v2293, 0.35355338
        %v2306 = vmul.f32 %v2298, 0.35355338
        %v2307 = vmul.f32 %v2301, 0.35355338
        %v2308 = vadd.f32 %v2304, %v1192
        %v2309 = vadd.f32 %v2305, %v1193
        %v2310 = vadd.f32 %v2306, %v1194
        %v2311 = vadd.f32 %v2307, %v1195
        %v2312 = vsel %vm1198, %v2308, -inf
        %2313 = vmax.xlane.f32.xlu0 %v2312
        %v2314 = vpop.xlane.xlu0 %2313
        %v2315 = vsel %vm1198, %v2309, -inf
        %2316 = vmax.xlane.f32.xlu0 %v2315
        %v2317 = vpop.xlane.xlu0 %2316
        %v2318 = vsel %vm1198, %v2310, -inf
        %2319 = vmax.xlane.f32.xlu0 %v2318
        %v2320 = vpop.xlane.xlu0 %2319
        %v2321 = vsel %vm1198, %v2311, -inf
        %2322 = vmax.xlane.f32.xlu0 %v2321
        %v2323 = vpop.xlane.xlu0 %2322
        %v2324 = vsub.f32 %v2308, %v2314
        %v2325 = vsub.f32 %v2309, %v2317
        %v2326 = vsub.f32 %v2310, %v2320
        %v2327 = vsub.f32 %v2311, %v2323
        %v2328 = vmul.f32 %v2324, 1.442695
        %v2329 = vpow.pop %v2328
        %v2330 = vmul.f32 %v2325, 1.442695
        %v2331 = vpow.pop %v2330
        %v2332 = vmul.f32 %v2326, 1.442695
        %v2333 = vpow.pop %v2332
        %v2334 = vmul.f32 %v2327, 1.442695
        %v2335 = vpow.pop %v2334
        %v2336 = vsel %vm1198, %v2329, 0.0
        %2337 = vadd.xlane.f32.xlu0 %v2336
        %v2338 = vpop.xlane.xlu0 %2337
        %v2339 = vsel %vm1198, %v2331, 0.0
        %2340 = vadd.xlane.f32.xlu0 %v2339
        %v2341 = vpop.xlane.xlu0 %2340
        %v2342 = vsel %vm1198, %v2333, 0.0
        %2343 = vadd.xlane.f32.xlu0 %v2342
        %v2344 = vpop.xlane.xlu0 %2343
        %v2345 = vsel %vm1198, %v2335, 0.0
        %2346 = vadd.xlane.f32.xlu0 %v2345
        %v2347 = vpop.xlane.xlu0 %2346
        %v2348 = vrcp.pop %v2338
        %v2349 = vrcp.pop %v2341
        %v2350 = vrcp.pop %v2344
        %v2351 = vrcp.pop %v2347
        %v2352 = vmul.f32 %v2329, %v2348
        %v2353 = vmul.f32 %v2331, %v2349
        %v2354 = vmul.f32 %v2333, %v2350
        %v2355 = vmul.f32 %v2335, %v2351
        %v2356 = vpack.c.bf16 %v2353, %v2352
        %v2357 = vpack.c.bf16 %v2355, %v2354
        %2358 = vrot.lane.b32.xlu0 %v1521, 104
        %v2359 = vpop.permute.xlu0 %2358
        %2360 = vrot.lane.b32.xlu0 %v1522, 104
        %v2361 = vpop.permute.xlu0 %2360
        %v2365 = vsel %vm1198, %v2356, 0
        %v2368 = vsel %vm1198, %v2357, 0
        %2370 = vmatprep.subr.bf16.mxu0 0
        %2371 = vmatpush1.bf16.msra.mxu0 %v2359
        %2372 = vmatprep.subr.bf16.mxu0 0
        %2373 = vmatpush1.bf16.msra.mxu0 %v2361
        %2374 = vmatprep.subr.bf16.mxu0 0
        %2375 = vmatpush1.bf16.msra.mxu0 0
        %2376 = vmatprep.subr.bf16.mxu0 0
        %2377 = vmatpush1.bf16.msra.mxu0 0
        %2378 = vmatprep.subr.bf16.mxu0 0
        %2379 = vmatpush1.bf16.msra.mxu0 0
        %2380 = vmatprep.subr.bf16.mxu0 0
        %2381 = vmatpush1.bf16.msra.mxu0 0
        %2382 = vmatprep.subr.bf16.mxu0 0
        %2383 = vmatpush1.bf16.msra.mxu0 0
        %2384 = vmatprep.subr.bf16.mxu0 0
        %2385 = vmatpush1.bf16.msra.mxu0 0
        %2386 = vmatprep.subr.bf16.mxu0 0
        %2387 = vmatpush1.bf16.msra.mxu0 0
        %2388 = vmatprep.subr.bf16.mxu0 0
        %2389 = vmatpush1.bf16.msra.mxu0 0
        %2390 = vmatprep.subr.bf16.mxu0 0
        %2391 = vmatpush1.bf16.msra.mxu0 0
        %2392 = vmatprep.subr.bf16.mxu0 0
        %2393 = vmatpush1.bf16.msra.mxu0 0
        %2394 = vmatprep.subr.bf16.mxu0 0
        %2395 = vmatpush1.bf16.msra.mxu0 0
        %2396 = vmatprep.subr.bf16.mxu0 0
        %2397 = vmatpush1.bf16.msra.mxu0 0
        %2398 = vmatprep.subr.bf16.mxu0 0
        %2399 = vmatpush1.bf16.msra.mxu0 0
        %2400 = vmatprep.subr.bf16.mxu0 0
        %2401 = vmatpush1.bf16.msra.mxu0 0
        %2402 = vmatprep.mubr.bf16.mxu0 0
        %2403 = vmatmul.mubr.bf16.gmra.mrb[0].mxu0 %v2365
        %v2404 = vpop.f32.mrb[0].mxu0
        %v2405 = vadd.f32 0.0, %v2404
        %v2406 = vpop.f32.mrb[0].mxu0
        %v2407 = vpop.f32.mrb[0].mxu0
        %v2408 = vadd.f32 0.0, %v2407
        %v2409 = vpop.f32.mrb[0].mxu0
        %2410 = vmatprep.mubr.bf16.mxu0 0
        %2411 = vmatmul.mubr.bf16.gmra.mrb[0].mxu0 %v2368
        %v2412 = vpop.f32.mrb[0].mxu0
        %v2413 = vadd.f32 0.0, %v2412
        %v2414 = vpop.f32.mrb[0].mxu0
        %v2415 = vpop.f32.mrb[0].mxu0
        %v2416 = vadd.f32 0.0, %v2415
        %v2417 = vpop.f32.mrb[0].mxu0
        %2418 = vdwg.mxu0
        %v2419 = vpack.c.bf16 %v2408, %v2405
        %v2420 = vpack.c.bf16 %v2416, %v2413
        %s2421 = scalar_lea.vmem %s972, 12 [#allocation13]
        %v2422 = vld [vmem:[%s2421] sm:$0xf]
        %v2424 = vsel %vm1523, %v2419, 0
        %v2427 = vsel %vm1523, %v2420, 0
        %v2430 = vsel %vm1530, %v2422, 0
        %2432 = vmatprep.subr.bf16.mxu0 0
        %2433 = vmatpush1.bf16.msra.mxu0 %v2430
        %2434 = vmatprep.subr.bf16.mxu0 0
        %2435 = vmatpush1.bf16.msra.mxu0 0
        %2436 = vmatprep.subr.bf16.mxu0 0
        %2437 = vmatpush1.bf16.msra.mxu0 0
        %2438 = vmatprep.subr.bf16.mxu0 0
        %2439 = vmatpush1.bf16.msra.mxu0 0
        %2440 = vmatprep.subr.bf16.mxu0 0
        %2441 = vmatpush1.bf16.msra.mxu0 0
        %2442 = vmatprep.subr.bf16.mxu0 0
        %2443 = vmatpush1.bf16.msra.mxu0 0
        %2444 = vmatprep.subr.bf16.mxu0 0
        %2445 = vmatpush1.bf16.msra.mxu0 0
        %2446 = vmatprep.subr.bf16.mxu0 0
        %2447 = vmatpush1.bf16.msra.mxu0 0
        %2448 = vmatprep.subr.bf16.mxu0 0
        %2449 = vmatpush1.bf16.msra.mxu0 0
        %2450 = vmatprep.subr.bf16.mxu0 0
        %2451 = vmatpush1.bf16.msra.mxu0 0
        %2452 = vmatprep.subr.bf16.mxu0 0
        %2453 = vmatpush1.bf16.msra.mxu0 0
        %2454 = vmatprep.subr.bf16.mxu0 0
        %2455 = vmatpush1.bf16.msra.mxu0 0
        %2456 = vmatprep.subr.bf16.mxu0 0
        %2457 = vmatpush1.bf16.msra.mxu0 0
        %2458 = vmatprep.subr.bf16.mxu0 0
        %2459 = vmatpush1.bf16.msra.mxu0 0
        %2460 = vmatprep.subr.bf16.mxu0 0
        %2461 = vmatpush1.bf16.msra.mxu0 0
        %2462 = vmatprep.subr.bf16.mxu0 0
        %2463 = vmatpush1.bf16.msra.mxu0 0
        %2464 = vmatprep.mubr.bf16.mxu0 0
        %2465 = vmatmul.mubr.bf16.gmra.mrb[0].mxu0 %v2424
        %v2466 = vpop.f32.mrb[0].mxu0
        %v2467 = vadd.f32 0.0, %v2466
        %v2468 = vpop.f32.mrb[0].mxu0
        %v2469 = vpop.f32.mrb[0].mxu0
        %v2470 = vadd.f32 0.0, %v2469
        %v2471 = vpop.f32.mrb[0].mxu0
        %2472 = vmatprep.mubr.bf16.mxu0 0
        %2473 = vmatmul.mubr.bf16.gmra.mrb[0].mxu0 %v2427
        %v2474 = vpop.f32.mrb[0].mxu0
        %v2475 = vadd.f32 0.0, %v2474
        %v2476 = vpop.f32.mrb[0].mxu0
        %v2477 = vpop.f32.mrb[0].mxu0
        %v2478 = vadd.f32 0.0, %v2477
        %v2479 = vpop.f32.mrb[0].mxu0
        %2480 = vdwg.mxu0
        %v2481 = vadd.f32 %v2237, %v2467
        %v2482 = vadd.f32 %v2238, %v2470
        %v2483 = vadd.f32 %v2239, %v2475
        %v2484 = vadd.f32 %v2240, %v2478
        %v2485 = vadd.f32 %v1188, %v2481
        %v2486 = vadd.f32 %v1189, %v2482
        %v2487 = vadd.f32 %v1190, %v2483
        %v2488 = vadd.f32 %v1191, %v2484
        %v2489 = vld [vmem:[%s981] sm:$0x1]
        %v2490 = vlaneseq
        %v2491 = vshrl.u32 %v2490, 7
        %v2492 = vsub.s32 0, %v2491
        %v2493 = vrot.slane %v2489, %v2492
        %v2494 = vadd.f32 %v2485, %v2493
        %v2495 = vadd.f32 %v2486, %v2493
        %v2496 = vadd.f32 %v2487, %v2493
        %v2497 = vadd.f32 %v2488, %v2493
        %v2498 = vld [vmem:[%s990] sm:$0x1]
        %v2499 = vld [vmem:[%s999] sm:$0x1]
        %v2500 = vsel %vm1198, %v2494, 0.0
        %2501 = vadd.xlane.f32.xlu0 %v2500
        %v2502 = vpop.xlane.xlu0 %2501
        %v2503 = vsel %vm1198, %v2495, 0.0
        %2504 = vadd.xlane.f32.xlu0 %v2503
        %v2505 = vpop.xlane.xlu0 %2504
        %v2506 = vsel %vm1198, %v2496, 0.0
        %2507 = vadd.xlane.f32.xlu0 %v2506
        %v2508 = vpop.xlane.xlu0 %2507
        %v2509 = vsel %vm1198, %v2497, 0.0
        %2510 = vadd.xlane.f32.xlu0 %v2509
        %v2511 = vpop.xlane.xlu0 %2510
        %v2512 = vmul.f32 %v2502, %v1211
        %v2513 = vmul.f32 %v2505, %v1211
        %v2514 = vmul.f32 %v2508, %v1211
        %v2515 = vmul.f32 %v2511, %v1211
        %v2516 = vsub.f32 %v2494, %v2512
        %v2517 = vsub.f32 %v2495, %v2513
        %v2518 = vsub.f32 %v2496, %v2514
        %v2519 = vsub.f32 %v2497, %v2515
        %v2520 = vmul.f32 %v2516, %v2516
        %v2521 = vmul.f32 %v2517, %v2517
        %v2522 = vmul.f32 %v2518, %v2518
        %v2523 = vmul.f32 %v2519, %v2519
        %v2524 = vsel %vm1198, %v2520, 0.0
        %2525 = vadd.xlane.f32.xlu0 %v2524
        %v2526 = vpop.xlane.xlu0 %2525
        %v2527 = vsel %vm1198, %v2521, 0.0
        %2528 = vadd.xlane.f32.xlu0 %v2527
        %v2529 = vpop.xlane.xlu0 %2528
        %v2530 = vsel %vm1198, %v2522, 0.0
        %2531 = vadd.xlane.f32.xlu0 %v2530
        %v2532 = vpop.xlane.xlu0 %2531
        %v2533 = vsel %vm1198, %v2523, 0.0
        %2534 = vadd.xlane.f32.xlu0 %v2533
        %v2535 = vpop.xlane.xlu0 %2534
        %v2536 = vmul.f32 %v2526, %v1211
        %v2537 = vmul.f32 %v2529, %v1211
        %v2538 = vmul.f32 %v2532, %v1211
        %v2539 = vmul.f32 %v2535, %v1211
        %v2540 = vadd.f32 %v2536, 1e-05
        %v2541 = vadd.f32 %v2537, 1e-05
        %v2542 = vadd.f32 %v2538, 1e-05
        %v2543 = vadd.f32 %v2539, 1e-05
        %v2544 = vrsqrt.pop %v2540
        %v2545 = vrsqrt.pop %v2541
        %v2546 = vrsqrt.pop %v2542
        %v2547 = vrsqrt.pop %v2543
        %v2548 = vmul.f32 %v2516, %v2544
        %v2549 = vmul.f32 %v2517, %v2545
        %v2550 = vmul.f32 %v2518, %v2546
        %v2551 = vmul.f32 %v2519, %v2547
        %v2552 = vlaneseq
        %v2553 = vshrl.u32 %v2552, 7
        %v2554 = vsub.s32 0, %v2553
        %v2555 = vrot.slane %v2498, %v2554
        %v2556 = vmul.f32 %v2548, %v2555
        %v2557 = vmul.f32 %v2549, %v2555
        %v2558 = vmul.f32 %v2550, %v2555
        %v2559 = vmul.f32 %v2551, %v2555
        %v2560 = vlaneseq
        %v2561 = vshrl.u32 %v2560, 7
        %v2562 = vsub.s32 0, %v2561
        %v2563 = vrot.slane %v2499, %v2562
        %v2564 = vadd.f32 %v2556, %v2563
        %v2565 = vadd.f32 %v2557, %v2563
        %v2566 = vadd.f32 %v2558, %v2563
        %v2567 = vadd.f32 %v2559, %v2563
        %v2568 = vpack.c.bf16 %v2565, %v2564
        %v2569 = vpack.c.bf16 %v2567, %v2566
        %v2570 = vld [vmem:[%s1008] sm:$0xf]
        %v2571 = vld [vmem:[%s1008 + $0x4] sm:$0xf]
        %v2572 = vld [vmem:[%s1008 + $0x8] sm:$0xf]
        %v2573 = vld [vmem:[%s1008 + $0xc] sm:$0xf]
        %v2574 = vld [vmem:[%s1017] sm:$0x1]
        %v2575 = vlaneseq
        %v2576 = vshrl.u32 %v2575, 7
        %v2577 = vsub.s32 0, %v2576
        %v2578 = vrot.slane %v2574, %v2577
        %v2583 = vunpack.c.l.b16 %v2570
        %v2584 = vunpack.c.l.b16 %v2571
        %v2585 = vunpack.c.l.b16 %v2572
        %v2586 = vunpack.c.l.b16 %v2573
        %v2587 = vpack.c.b16 %v2584, %v2583
        %v2588 = vpack.c.b16 %v2586, %v2585
        %v2592 = vsel %vm1198, %v2568, 0
        %v2595 = vsel %vm1198, %v2569, 0
        %2597 = vmatprep.subr.bf16.mxu0 0
        %2598 = vmatpush1.bf16.msra.mxu0 %v2587
        %2599 = vmatprep.subr.bf16.mxu0 0
        %2600 = vmatpush1.bf16.msra.mxu0 %v2588
        %2601 = vmatprep.subr.bf16.mxu0 0
        %2602 = vmatpush1.bf16.msra.mxu0 0
        %2603 = vmatprep.subr.bf16.mxu0 0
        %2604 = vmatpush1.bf16.msra.mxu0 0
        %2605 = vmatprep.subr.bf16.mxu0 0
        %2606 = vmatpush1.bf16.msra.mxu0 0
        %2607 = vmatprep.subr.bf16.mxu0 0
        %2608 = vmatpush1.bf16.msra.mxu0 0
        %2609 = vmatprep.subr.bf16.mxu0 0
        %2610 = vmatpush1.bf16.msra.mxu0 0
        %2611 = vmatprep.subr.bf16.mxu0 0
        %2612 = vmatpush1.bf16.msra.mxu0 0
        %2613 = vmatprep.subr.bf16.mxu0 0
        %2614 = vmatpush1.bf16.msra.mxu0 0
        %2615 = vmatprep.subr.bf16.mxu0 0
        %2616 = vmatpush1.bf16.msra.mxu0 0
        %2617 = vmatprep.subr.bf16.mxu0 0
        %2618 = vmatpush1.bf16.msra.mxu0 0
        %2619 = vmatprep.subr.bf16.mxu0 0
        %2620 = vmatpush1.bf16.msra.mxu0 0
        %2621 = vmatprep.subr.bf16.mxu0 0
        %2622 = vmatpush1.bf16.msra.mxu0 0
        %2623 = vmatprep.subr.bf16.mxu0 0
        %2624 = vmatpush1.bf16.msra.mxu0 0
        %2625 = vmatprep.subr.bf16.mxu0 0
        %2626 = vmatpush1.bf16.msra.mxu0 0
        %2627 = vmatprep.subr.bf16.mxu0 0
        %2628 = vmatpush1.bf16.msra.mxu0 0
        %2629 = vmatprep.mubr.bf16.mxu0 0
        %2630 = vmatmul.mubr.bf16.gmra.mrb[0].mxu0 %v2592
        %v2631 = vpop.f32.mrb[0].mxu0
        %v2632 = vadd.f32 %v2578, %v2631
        %v2633 = vpop.f32.mrb[0].mxu0
        %v2634 = vpop.f32.mrb[0].mxu0
        %v2635 = vadd.f32 %v2578, %v2634
        %v2636 = vpop.f32.mrb[0].mxu0
        %2637 = vmatprep.mubr.bf16.mxu0 0
        %2638 = vmatmul.mubr.bf16.gmra.mrb[0].mxu0 %v2595
        %v2639 = vpop.f32.mrb[0].mxu0
        %v2640 = vadd.f32 %v2578, %v2639
        %v2641 = vpop.f32.mrb[0].mxu0
        %v2642 = vpop.f32.mrb[0].mxu0
        %v2643 = vadd.f32 %v2578, %v2642
        %v2644 = vpop.f32.mrb[0].mxu0
        %2645 = vdwg.mxu0
        %v2646 = vmul.f32 %v2632, 0.5
        %v2647 = vmul.f32 %v2635, 0.5
        %v2648 = vmul.f32 %v2640, 0.5
        %v2649 = vmul.f32 %v2643, 0.5
        %v2650 = vmul.f32 %v2632, 0.044715
        %v2651 = vmul.f32 %v2635, 0.044715
        %v2652 = vmul.f32 %v2640, 0.044715
        %v2653 = vmul.f32 %v2643, 0.044715
        %v2654 = vmul.f32 %v2650, %v2632
        %v2655 = vmul.f32 %v2651, %v2635
        %v2656 = vmul.f32 %v2652, %v2640
        %v2657 = vmul.f32 %v2653, %v2643
        %v2658 = vmul.f32 %v2654, %v2632
        %v2659 = vmul.f32 %v2655, %v2635
        %v2660 = vmul.f32 %v2656, %v2640
        %v2661 = vmul.f32 %v2657, %v2643
        %v2662 = vadd.f32 %v2632, %v2658
        %v2663 = vadd.f32 %v2635, %v2659
        %v2664 = vadd.f32 %v2640, %v2660
        %v2665 = vadd.f32 %v2643, %v2661
        %v2666 = vmul.f32 %v2662, 0.7978846
        %v2667 = vmul.f32 %v2663, 0.7978846
        %v2668 = vmul.f32 %v2664, 0.7978846
        %v2669 = vmul.f32 %v2665, 0.7978846
        %v2670 = vtanh.pop %v2666
        %v2671 = vtanh.pop %v2667
        %v2672 = vtanh.pop %v2668
        %v2673 = vtanh.pop %v2669
        %v2674 = vadd.f32 %v2670, 1.0
        %v2675 = vadd.f32 %v2671, 1.0
        %v2676 = vadd.f32 %v2672, 1.0
        %v2677 = vadd.f32 %v2673, 1.0
        %v2678 = vmul.f32 %v2646, %v2674
        %v2679 = vmul.f32 %v2647, %v2675
        %v2680 = vmul.f32 %v2648, %v2676
        %v2681 = vmul.f32 %v2649, %v2677
        %v2682 = vpack.c.bf16 %v2679, %v2678
        %v2683 = vpack.c.bf16 %v2681, %v2680
        %v2684 = vld [vmem:[%s1174] sm:$0xf]
        %v2685 = vld [vmem:[%s1174 + $0x4] sm:$0xf]
        %v2686 = vld [vmem:[%s1174 + $0x8] sm:$0xf]
        %v2687 = vld [vmem:[%s1174 + $0xc] sm:$0xf]
        %v2688 = vld [vmem:[%s1174 + $0x10] sm:$0xf]
        %v2689 = vld [vmem:[%s1174 + $0x14] sm:$0xf]
        %v2690 = vld [vmem:[%s1174 + $0x18] sm:$0xf]
        %v2691 = vld [vmem:[%s1174 + $0x1c] sm:$0xf]
        %v2692 = vld [vmem:[%s1178] sm:$0x1]
        %v2693 = vlaneseq
        %v2694 = vshrl.u32 %v2693, 7
        %v2695 = vsub.s32 0, %v2694
        %v2696 = vrot.slane %v2692, %v2695
        %v2705 = vunpack.c.l.b16 %v2684
        %v2706 = vunpack.c.l.b16 %v2685
        %v2707 = vunpack.c.l.b16 %v2686
        %v2708 = vunpack.c.l.b16 %v2687
        %v2709 = vunpack.c.l.b16 %v2688
        %v2710 = vunpack.c.l.b16 %v2689
        %v2711 = vunpack.c.l.b16 %v2690
        %v2712 = vunpack.c.l.b16 %v2691
        %v2713 = vpack.c.b16 %v2706, %v2705
        %v2714 = vpack.c.b16 %v2708, %v2707
        %v2715 = vpack.c.b16 %v2710, %v2709
        %v2716 = vpack.c.b16 %v2712, %v2711
        %vm2721 = vcmask 523264
        %v2723 = vsel %vm2721, %v2682, 0
        %v2726 = vsel %vm2721, %v2683, 0
        %2728 = vmatprep.subr.bf16.mxu0 0
        %2729 = vmatpush1.bf16.msra.mxu0 %v2713
        %2730 = vmatprep.subr.bf16.mxu0 0
        %2731 = vmatpush1.bf16.msra.mxu0 %v2714
        %2732 = vmatprep.subr.bf16.mxu0 0
        %2733 = vmatpush1.bf16.msra.mxu0 %v2715
        %2734 = vmatprep.subr.bf16.mxu0 0
        %2735 = vmatpush1.bf16.msra.mxu0 %v2716
        %2736 = vmatprep.subr.bf16.mxu0 0
        %2737 = vmatpush1.bf16.msra.mxu0 0
        %2738 = vmatprep.subr.bf16.mxu0 0
        %2739 = vmatpush1.bf16.msra.mxu0 0
        %2740 = vmatprep.subr.bf16.mxu0 0
        %2741 = vmatpush1.bf16.msra.mxu0 0
        %2742 = vmatprep.subr.bf16.mxu0 0
        %2743 = vmatpush1.bf16.msra.mxu0 0
        %2744 = vmatprep.subr.bf16.mxu0 0
        %2745 = vmatpush1.bf16.msra.mxu0 0
        %2746 = vmatprep.subr.bf16.mxu0 0
        %2747 = vmatpush1.bf16.msra.mxu0 0
        %2748 = vmatprep.subr.bf16.mxu0 0
        %2749 = vmatpush1.bf16.msra.mxu0 0
        %2750 = vmatprep.subr.bf16.mxu0 0
        %2751 = vmatpush1.bf16.msra.mxu0 0
        %2752 = vmatprep.subr.bf16.mxu0 0
        %2753 = vmatpush1.bf16.msra.mxu0 0
        %2754 = vmatprep.subr.bf16.mxu0 0
        %2755 = vmatpush1.bf16.msra.mxu0 0
        %2756 = vmatprep.subr.bf16.mxu0 0
        %2757 = vmatpush1.bf16.msra.mxu0 0
        %2758 = vmatprep.subr.bf16.mxu0 0
        %2759 = vmatpush1.bf16.msra.mxu0 0
        %2760 = vmatprep.mubr.bf16.mxu0 0
        %2761 = vmatmul.mubr.bf16.gmra.mrb[0].mxu0 %v2723
        %v2762 = vpop.f32.mrb[0].mxu0
        %v2763 = vadd.f32 %v2696, %v2762
        %v2764 = vpop.f32.mrb[0].mxu0
        %v2765 = vpop.f32.mrb[0].mxu0
        %v2766 = vadd.f32 %v2696, %v2765
        %v2767 = vpop.f32.mrb[0].mxu0
        %2768 = vmatprep.mubr.bf16.mxu0 0
        %2769 = vmatmul.mubr.bf16.gmra.mrb[0].mxu0 %v2726
        %v2770 = vpop.f32.mrb[0].mxu0
        %v2771 = vadd.f32 %v2696, %v2770
        %v2772 = vpop.f32.mrb[0].mxu0
        %v2773 = vpop.f32.mrb[0].mxu0
        %v2774 = vadd.f32 %v2696, %v2773
        %v2775 = vpop.f32.mrb[0].mxu0
        %2776 = vdwg.mxu0
        %v2777 = vadd.f32 %v2494, %v2763
        %v2778 = vadd.f32 %v2495, %v2766
        %v2779 = vadd.f32 %v2496, %v2771
        %v2780 = vadd.f32 %v2497, %v2774
        %v2781 = vld [vmem:[%s918 + $0x1] sm:$0x1]
        %v2782 = vld [vmem:[%s927 + $0x1] sm:$0x1]
        %v2783 = vsel %vm1198, %v2777, 0.0
        %2784 = vadd.xlane.f32.xlu0 %v2783
        %v2785 = vpop.xlane.xlu0 %2784
        %v2786 = vsel %vm1198, %v2778, 0.0
        %2787 = vadd.xlane.f32.xlu0 %v2786
        %v2788 = vpop.xlane.xlu0 %2787
        %v2789 = vsel %vm1198, %v2779, 0.0
        %2790 = vadd.xlane.f32.xlu0 %v2789
        %v2791 = vpop.xlane.xlu0 %2790
        %v2792 = vsel %vm1198, %v2780, 0.0
        %2793 = vadd.xlane.f32.xlu0 %v2792
        %v2794 = vpop.xlane.xlu0 %2793
        %v2795 = vmul.f32 %v2785, %v1211
        %v2796 = vmul.f32 %v2788, %v1211
        %v2797 = vmul.f32 %v2791, %v1211
        %v2798 = vmul.f32 %v2794, %v1211
        %v2799 = vsub.f32 %v2777, %v2795
        %v2800 = vsub.f32 %v2778, %v2796
        %v2801 = vsub.f32 %v2779, %v2797
        %v2802 = vsub.f32 %v2780, %v2798
        %v2803 = vmul.f32 %v2799, %v2799
        %v2804 = vmul.f32 %v2800, %v2800
        %v2805 = vmul.f32 %v2801, %v2801
        %v2806 = vmul.f32 %v2802, %v2802
        %v2807 = vsel %vm1198, %v2803, 0.0
        %2808 = vadd.xlane.f32.xlu0 %v2807
        %v2809 = vpop.xlane.xlu0 %2808
        %v2810 = vsel %vm1198, %v2804, 0.0
        %2811 = vadd.xlane.f32.xlu0 %v2810
        %v2812 = vpop.xlane.xlu0 %2811
        %v2813 = vsel %vm1198, %v2805, 0.0
        %2814 = vadd.xlane.f32.xlu0 %v2813
        %v2815 = vpop.xlane.xlu0 %2814
        %v2816 = vsel %vm1198, %v2806, 0.0
        %2817 = vadd.xlane.f32.xlu0 %v2816
        %v2818 = vpop.xlane.xlu0 %2817
        %v2819 = vmul.f32 %v2809, %v1211
        %v2820 = vmul.f32 %v2812, %v1211
        %v2821 = vmul.f32 %v2815, %v1211
        %v2822 = vmul.f32 %v2818, %v1211
        %v2823 = vadd.f32 %v2819, 1e-05
        %v2824 = vadd.f32 %v2820, 1e-05
        %v2825 = vadd.f32 %v2821, 1e-05
        %v2826 = vadd.f32 %v2822, 1e-05
        %v2827 = vrsqrt.pop %v2823
        %v2828 = vrsqrt.pop %v2824
        %v2829 = vrsqrt.pop %v2825
        %v2830 = vrsqrt.pop %v2826
        %v2831 = vmul.f32 %v2799, %v2827
        %v2832 = vmul.f32 %v2800, %v2828
        %v2833 = vmul.f32 %v2801, %v2829
        %v2834 = vmul.f32 %v2802, %v2830
        %v2835 = vlaneseq
        %v2836 = vshrl.u32 %v2835, 7
        %v2837 = vsub.s32 0, %v2836
        %v2838 = vrot.slane %v2781, %v2837
        %v2839 = vmul.f32 %v2831, %v2838
        %v2840 = vmul.f32 %v2832, %v2838
        %v2841 = vmul.f32 %v2833, %v2838
        %v2842 = vmul.f32 %v2834, %v2838
        %v2843 = vlaneseq
        %v2844 = vshrl.u32 %v2843, 7
        %v2845 = vsub.s32 0, %v2844
        %v2846 = vrot.slane %v2782, %v2845
        %v2847 = vadd.f32 %v2839, %v2846
        %v2848 = vadd.f32 %v2840, %v2846
        %v2849 = vadd.f32 %v2841, %v2846
        %v2850 = vadd.f32 %v2842, %v2846
        %v2851 = vpack.c.bf16 %v2848, %v2847
        %v2852 = vpack.c.bf16 %v2850, %v2849
        %s2853 = scalar_lea.vmem %s1164, 16
        %v2854 = vld [vmem:[%s2853] sm:$0xf]
        %v2855 = vld [vmem:[%s2853 + $0x4] sm:$0xf]
        %v2856 = vld [vmem:[%s2853 + $0x8] sm:$0xf]
        %v2857 = vld [vmem:[%s2853 + $0xc] sm:$0xf]
        %v2858 = vld [vmem:[%s936 + $0x1] sm:$0x1]
        %v2859 = vlaneseq
        %v2860 = vshrl.u32 %v2859, 7
        %v2861 = vsub.s32 0, %v2860
        %v2862 = vrot.slane %v2858, %v2861
        %v2867 = vunpack.c.l.b16 %v2854
        %v2868 = vunpack.c.l.b16 %v2855
        %v2869 = vunpack.c.l.b16 %v2856
        %v2870 = vunpack.c.l.b16 %v2857
        %v2871 = vpack.c.b16 %v2868, %v2867
        %v2872 = vpack.c.b16 %v2870, %v2869
        %v2876 = vsel %vm1198, %v2851, 0
        %v2879 = vsel %vm1198, %v2852, 0
        %2881 = vmatprep.subr.bf16.mxu0 0
        %2882 = vmatpush1.bf16.msra.mxu0 %v2871
        %2883 = vmatprep.subr.bf16.mxu0 0
        %2884 = vmatpush1.bf16.msra.mxu0 %v2872
        %2885 = vmatprep.subr.bf16.mxu0 0
        %2886 = vmatpush1.bf16.msra.mxu0 0
        %2887 = vmatprep.subr.bf16.mxu0 0
        %2888 = vmatpush1.bf16.msra.mxu0 0
        %2889 = vmatprep.subr.bf16.mxu0 0
        %2890 = vmatpush1.bf16.msra.mxu0 0
        %2891 = vmatprep.subr.bf16.mxu0 0
        %2892 = vmatpush1.bf16.msra.mxu0 0
        %2893 = vmatprep.subr.bf16.mxu0 0
        %2894 = vmatpush1.bf16.msra.mxu0 0
        %2895 = vmatprep.subr.bf16.mxu0 0
        %2896 = vmatpush1.bf16.msra.mxu0 0
        %2897 = vmatprep.subr.bf16.mxu0 0
        %2898 = vmatpush1.bf16.msra.mxu0 0
        %2899 = vmatprep.subr.bf16.mxu0 0
        %2900 = vmatpush1.bf16.msra.mxu0 0
        %2901 = vmatprep.subr.bf16.mxu0 0
        %2902 = vmatpush1.bf16.msra.mxu0 0
        %2903 = vmatprep.subr.bf16.mxu0 0
        %2904 = vmatpush1.bf16.msra.mxu0 0
        %2905 = vmatprep.subr.bf16.mxu0 0
        %2906 = vmatpush1.bf16.msra.mxu0 0
        %2907 = vmatprep.subr.bf16.mxu0 0
        %2908 = vmatpush1.bf16.msra.mxu0 0
        %2909 = vmatprep.subr.bf16.mxu0 0
        %2910 = vmatpush1.bf16.msra.mxu0 0
        %2911 = vmatprep.subr.bf16.mxu0 0
        %2912 = vmatpush1.bf16.msra.mxu0 0
        %2913 = vmatprep.mubr.bf16.mxu0 0
        %2914 = vmatmul.mubr.bf16.gmra.mrb[0].mxu0 %v2876
        %v2915 = vpop.f32.mrb[0].mxu0
        %v2916 = vadd.f32 %v2862, %v2915
        %v2917 = vpop.f32.mrb[0].mxu0
        %v2918 = vpop.f32.mrb[0].mxu0
        %v2919 = vadd.f32 %v2862, %v2918
        %v2920 = vpop.f32.mrb[0].mxu0
        %2921 = vmatprep.mubr.bf16.mxu0 0
        %2922 = vmatmul.mubr.bf16.gmra.mrb[0].mxu0 %v2879
        %v2923 = vpop.f32.mrb[0].mxu0
        %v2924 = vadd.f32 %v2862, %v2923
        %v2925 = vpop.f32.mrb[0].mxu0
        %v2926 = vpop.f32.mrb[0].mxu0
        %v2927 = vadd.f32 %v2862, %v2926
        %v2928 = vpop.f32.mrb[0].mxu0
        %2929 = vdwg.mxu0
        %s2930 = scalar_lea.vmem %s1169, 16
        %v2931 = vld [vmem:[%s2930] sm:$0xf]
        %v2932 = vld [vmem:[%s2930 + $0x4] sm:$0xf]
        %v2933 = vld [vmem:[%s2930 + $0x8] sm:$0xf]
        %v2934 = vld [vmem:[%s2930 + $0xc] sm:$0xf]
        %v2935 = vld [vmem:[%s945 + $0x1] sm:$0x1]
        %v2936 = vlaneseq
        %v2937 = vshrl.u32 %v2936, 7
        %v2938 = vsub.s32 0, %v2937
        %v2939 = vrot.slane %v2935, %v2938
        %v2944 = vunpack.c.l.b16 %v2931
        %v2945 = vunpack.c.l.b16 %v2932
        %v2946 = vunpack.c.l.b16 %v2933
        %v2947 = vunpack.c.l.b16 %v2934
        %v2948 = vpack.c.b16 %v2945, %v2944
        %v2949 = vpack.c.b16 %v2947, %v2946
        %2952 = vmatprep.subr.bf16.mxu0 0
        %2953 = vmatpush1.bf16.msra.mxu0 %v2948
        %2954 = vmatprep.subr.bf16.mxu0 0
        %2955 = vmatpush1.bf16.msra.mxu0 %v2949
        %2956 = vmatprep.subr.bf16.mxu0 0
        %2957 = vmatpush1.bf16.msra.mxu0 0
        %2958 = vmatprep.subr.bf16.mxu0 0
        %2959 = vmatpush1.bf16.msra.mxu0 0
        %2960 = vmatprep.subr.bf16.mxu0 0
        %2961 = vmatpush1.bf16.msra.mxu0 0
        %2962 = vmatprep.subr.bf16.mxu0 0
        %2963 = vmatpush1.bf16.msra.mxu0 0
        %2964 = vmatprep.subr.bf16.mxu0 0
        %2965 = vmatpush1.bf16.msra.mxu0 0
        %2966 = vmatprep.subr.bf16.mxu0 0
        %2967 = vmatpush1.bf16.msra.mxu0 0
        %2968 = vmatprep.subr.bf16.mxu0 0
        %2969 = vmatpush1.bf16.msra.mxu0 0
        %2970 = vmatprep.subr.bf16.mxu0 0
        %2971 = vmatpush1.bf16.msra.mxu0 0
        %2972 = vmatprep.subr.bf16.mxu0 0
        %2973 = vmatpush1.bf16.msra.mxu0 0
        %2974 = vmatprep.subr.bf16.mxu0 0
        %2975 = vmatpush1.bf16.msra.mxu0 0
        %2976 = vmatprep.subr.bf16.mxu0 0
        %2977 = vmatpush1.bf16.msra.mxu0 0
        %2978 = vmatprep.subr.bf16.mxu0 0
        %2979 = vmatpush1.bf16.msra.mxu0 0
        %2980 = vmatprep.subr.bf16.mxu0 0
        %2981 = vmatpush1.bf16.msra.mxu0 0
        %2982 = vmatprep.subr.bf16.mxu0 0
        %2983 = vmatpush1.bf16.msra.mxu0 0
        %2984 = vmatprep.mubr.bf16.mxu0 0
        %2985 = vmatmul.mubr.bf16.gmra.mrb[0].mxu0 %v2876
        %v2986 = vpop.f32.mrb[0].mxu0
        %v2987 = vadd.f32 %v2939, %v2986
        %v2988 = vpop.f32.mrb[0].mxu0
        %v2989 = vpop.f32.mrb[0].mxu0
        %v2990 = vadd.f32 %v2939, %v2989
        %v2991 = vpop.f32.mrb[0].mxu0
        %2992 = vmatprep.mubr.bf16.mxu0 0
        %2993 = vmatmul.mubr.bf16.gmra.mrb[0].mxu0 %v2879
        %v2994 = vpop.f32.mrb[0].mxu0
        %v2995 = vadd.f32 %v2939, %v2994
        %v2996 = vpop.f32.mrb[0].mxu0
        %v2997 = vpop.f32.mrb[0].mxu0
        %v2998 = vadd.f32 %v2939, %v2997
        %v2999 = vpop.f32.mrb[0].mxu0
        %3000 = vdwg.mxu0
        %s3001 = scalar_lea.vmem %s954, 16 [#allocation11]
        %v3002 = vld [vmem:[%s3001] sm:$0xf]
        %v3003 = vld [vmem:[%s3001 + $0x4] sm:$0xf]
        %v3004 = vld [vmem:[%s3001 + $0x8] sm:$0xf]
        %v3005 = vld [vmem:[%s3001 + $0xc] sm:$0xf]
        %v3006 = vld [vmem:[%s963 + $0x1] sm:$0x1]
        %v3007 = vlaneseq
        %v3008 = vshrl.u32 %v3007, 7
        %v3009 = vsub.s32 0, %v3008
        %v3010 = vrot.slane %v3006, %v3009
        %v3015 = vunpack.c.l.b16 %v3002
        %v3016 = vunpack.c.l.b16 %v3003
        %v3017 = vunpack.c.l.b16 %v3004
        %v3018 = vunpack.c.l.b16 %v3005
        %v3019 = vpack.c.b16 %v3016, %v3015
        %v3020 = vpack.c.b16 %v3018, %v3017
        %3023 = vmatprep.subr.bf16.mxu0 0
        %3024 = vmatpush1.bf16.msra.mxu0 %v3019
        %3025 = vmatprep.subr.bf16.mxu0 0
        %3026 = vmatpush1.bf16.msra.mxu0 %v3020
        %3027 = vmatprep.subr.bf16.mxu0 0
        %3028 = vmatpush1.bf16.msra.mxu0 0
        %3029 = vmatprep.subr.bf16.mxu0 0
        %3030 = vmatpush1.bf16.msra.mxu0 0
        %3031 = vmatprep.subr.bf16.mxu0 0
        %3032 = vmatpush1.bf16.msra.mxu0 0
        %3033 = vmatprep.subr.bf16.mxu0 0
        %3034 = vmatpush1.bf16.msra.mxu0 0
        %3035 = vmatprep.subr.bf16.mxu0 0
        %3036 = vmatpush1.bf16.msra.mxu0 0
        %3037 = vmatprep.subr.bf16.mxu0 0
        %3038 = vmatpush1.bf16.msra.mxu0 0
        %3039 = vmatprep.subr.bf16.mxu0 0
        %3040 = vmatpush1.bf16.msra.mxu0 0
        %3041 = vmatprep.subr.bf16.mxu0 0
        %3042 = vmatpush1.bf16.msra.mxu0 0
        %3043 = vmatprep.subr.bf16.mxu0 0
        %3044 = vmatpush1.bf16.msra.mxu0 0
        %3045 = vmatprep.subr.bf16.mxu0 0
        %3046 = vmatpush1.bf16.msra.mxu0 0
        %3047 = vmatprep.subr.bf16.mxu0 0
        %3048 = vmatpush1.bf16.msra.mxu0 0
        %3049 = vmatprep.subr.bf16.mxu0 0
        %3050 = vmatpush1.bf16.msra.mxu0 0
        %3051 = vmatprep.subr.bf16.mxu0 0
        %3052 = vmatpush1.bf16.msra.mxu0 0
        %3053 = vmatprep.subr.bf16.mxu0 0
        %3054 = vmatpush1.bf16.msra.mxu0 0
        %3055 = vmatprep.mubr.bf16.mxu0 0
        %3056 = vmatmul.mubr.bf16.gmra.mrb[0].mxu0 %v2876
        %v3057 = vpop.f32.mrb[0].mxu0
        %v3058 = vadd.f32 %v3010, %v3057
        %v3059 = vpop.f32.mrb[0].mxu0
        %v3060 = vpop.f32.mrb[0].mxu0
        %v3061 = vadd.f32 %v3010, %v3060
        %v3062 = vpop.f32.mrb[0].mxu0
        %3063 = vmatprep.mubr.bf16.mxu0 0
        %3064 = vmatmul.mubr.bf16.gmra.mrb[0].mxu0 %v2879
        %v3065 = vpop.f32.mrb[0].mxu0
        %v3066 = vadd.f32 %v3010, %v3065
        %v3067 = vpop.f32.mrb[0].mxu0
        %v3068 = vpop.f32.mrb[0].mxu0
        %v3069 = vadd.f32 %v3010, %v3068
        %v3070 = vpop.f32.mrb[0].mxu0
        %3071 = vdwg.mxu0
        %3072 = vxpose.xlu0.b32.start [1/16] %v2987, 128
        %3073 = vxpose.xlu0.b32.cont [2/16] %v2990, 128
        %3074 = vxpose.xlu0.b32.cont [3/16] %v2995, 128
        %3075 = vxpose.xlu0.b32.cont [4/16] %v2998, 128
        %3076 = vxpose.xlu0.b32.cont [5/16] 0.0, 128
        %3077 = vxpose.xlu0.b32.cont [6/16] 0.0, 128
        %3078 = vxpose.xlu0.b32.cont [7/16] 0.0, 128
        %3079 = vxpose.xlu0.b32.cont [8/16] 0.0, 128
        %3080 = vxpose.xlu0.b32.cont [9/16] 0.0, 128
        %3081 = vxpose.xlu0.b32.cont [10/16] 0.0, 128
        %3082 = vxpose.xlu0.b32.cont [11/16] 0.0, 128
        %3083 = vxpose.xlu0.b32.cont [12/16] 0.0, 128
        %3084 = vxpose.xlu0.b32.cont [13/16] 0.0, 128
        %3085 = vxpose.xlu0.b32.cont [14/16] 0.0, 128
        %3086 = vxpose.xlu0.b32.cont [15/16] 0.0, 128
        %3087 = vxpose.xlu0.b32.end [16/16] 0.0, 128
        %v3088 = vpop.trf.xlu0
        %v3089 = vpop.trf.xlu0
        %v3090 = vpop.trf.xlu0
        %v3091 = vpop.trf.xlu0
        %v3092 = vpop.trf.xlu0
        %v3093 = vpop.trf.xlu0
        %v3094 = vpop.trf.xlu0
        %v3095 = vpop.trf.xlu0
        %v3096 = vpop.trf.xlu0
        %v3097 = vpop.trf.xlu0
        %v3098 = vpop.trf.xlu0
        %v3099 = vpop.trf.xlu0
        %v3100 = vpop.trf.xlu0
        %v3101 = vpop.trf.xlu0
        %v3102 = vpop.trf.xlu0
        %v3103 = vpop.trf.xlu0
        %v3104 = vpack.c.bf16 %v2919, %v2916
        %v3105 = vpack.c.bf16 %v2927, %v2924
        %v3106 = vpack.c.bf16 %v3088, %v3088
        %v3107 = vpack.c.bf16 %v3061, %v3058
        %v3108 = vpack.c.bf16 %v3069, %v3066
        %v3110 = vsel %vm1523, %v3104, 0
        %v3113 = vsel %vm1523, %v3105, 0
        %v3116 = vsel %vm1530, %v3106, 0
        %3118 = vmatprep.subr.bf16.mxu0 0
        %3119 = vmatpush1.bf16.msra.mxu0 %v3116
        %3120 = vmatprep.subr.bf16.mxu0 0
        %3121 = vmatpush1.bf16.msra.mxu0 0
        %3122 = vmatprep.subr.bf16.mxu0 0
        %3123 = vmatpush1.bf16.msra.mxu0 0
        %3124 = vmatprep.subr.bf16.mxu0 0
        %3125 = vmatpush1.bf16.msra.mxu0 0
        %3126 = vmatprep.subr.bf16.mxu0 0
        %3127 = vmatpush1.bf16.msra.mxu0 0
        %3128 = vmatprep.subr.bf16.mxu0 0
        %3129 = vmatpush1.bf16.msra.mxu0 0
        %3130 = vmatprep.subr.bf16.mxu0 0
        %3131 = vmatpush1.bf16.msra.mxu0 0
        %3132 = vmatprep.subr.bf16.mxu0 0
        %3133 = vmatpush1.bf16.msra.mxu0 0
        %3134 = vmatprep.subr.bf16.mxu0 0
        %3135 = vmatpush1.bf16.msra.mxu0 0
        %3136 = vmatprep.subr.bf16.mxu0 0
        %3137 = vmatpush1.bf16.msra.mxu0 0
        %3138 = vmatprep.subr.bf16.mxu0 0
        %3139 = vmatpush1.bf16.msra.mxu0 0
        %3140 = vmatprep.subr.bf16.mxu0 0
        %3141 = vmatpush1.bf16.msra.mxu0 0
        %3142 = vmatprep.subr.bf16.mxu0 0
        %3143 = vmatpush1.bf16.msra.mxu0 0
        %3144 = vmatprep.subr.bf16.mxu0 0
        %3145 = vmatpush1.bf16.msra.mxu0 0
        %3146 = vmatprep.subr.bf16.mxu0 0
        %3147 = vmatpush1.bf16.msra.mxu0 0
        %3148 = vmatprep.subr.bf16.mxu0 0
        %3149 = vmatpush1.bf16.msra.mxu0 0
        %3150 = vmatprep.mubr.bf16.mxu0 0
        %3151 = vmatmul.mubr.bf16.gmra.mrb[0].mxu0 %v3110
        %v3152 = vpop.f32.mrb[0].mxu0
        %v3153 = vadd.f32 0.0, %v3152
        %v3154 = vpop.f32.mrb[0].mxu0
        %v3155 = vpop.f32.mrb[0].mxu0
        %v3156 = vadd.f32 0.0, %v3155
        %v3157 = vpop.f32.mrb[0].mxu0
        %3158 = vmatprep.mubr.bf16.mxu0 0
        %3159 = vmatmul.mubr.bf16.gmra.mrb[0].mxu0 %v3113
        %v3160 = vpop.f32.mrb[0].mxu0
        %v3161 = vadd.f32 0.0, %v3160
        %v3162 = vpop.f32.mrb[0].mxu0
        %v3163 = vpop.f32.mrb[0].mxu0
        %v3164 = vadd.f32 0.0, %v3163
        %v3165 = vpop.f32.mrb[0].mxu0
        %3166 = vdwg.mxu0
        %v3167 = vmul.f32 %v3153, 0.35355338
        %v3168 = vmul.f32 %v3156, 0.35355338
        %v3169 = vmul.f32 %v3161, 0.35355338
        %v3170 = vmul.f32 %v3164, 0.35355338
        %v3171 = vadd.f32 %v3167, %v1192
        %v3172 = vadd.f32 %v3168, %v1193
        %v3173 = vadd.f32 %v3169, %v1194
        %v3174 = vadd.f32 %v3170, %v1195
        %v3175 = vsel %vm1198, %v3171, -inf
        %3176 = vmax.xlane.f32.xlu0 %v3175
        %v3177 = vpop.xlane.xlu0 %3176
        %v3178 = vsel %vm1198, %v3172, -inf
        %3179 = vmax.xlane.f32.xlu0 %v3178
        %v3180 = vpop.xlane.xlu0 %3179
        %v3181 = vsel %vm1198, %v3173, -inf
        %3182 = vmax.xlane.f32.xlu0 %v3181
        %v3183 = vpop.xlane.xlu0 %3182
        %v3184 = vsel %vm1198, %v3174, -inf
        %3185 = vmax.xlane.f32.xlu0 %v3184
        %v3186 = vpop.xlane.xlu0 %3185
        %v3187 = vsub.f32 %v3171, %v3177
        %v3188 = vsub.f32 %v3172, %v3180
        %v3189 = vsub.f32 %v3173, %v3183
        %v3190 = vsub.f32 %v3174, %v3186
        %v3191 = vmul.f32 %v3187, 1.442695
        %v3192 = vpow.pop %v3191
        %v3193 = vmul.f32 %v3188, 1.442695
        %v3194 = vpow.pop %v3193
        %v3195 = vmul.f32 %v3189, 1.442695
        %v3196 = vpow.pop %v3195
        %v3197 = vmul.f32 %v3190, 1.442695
        %v3198 = vpow.pop %v3197
        %v3199 = vsel %vm1198, %v3192, 0.0
        %3200 = vadd.xlane.f32.xlu0 %v3199
        %v3201 = vpop.xlane.xlu0 %3200
        %v3202 = vsel %vm1198, %v3194, 0.0
        %3203 = vadd.xlane.f32.xlu0 %v3202
        %v3204 = vpop.xlane.xlu0 %3203
        %v3205 = vsel %vm1198, %v3196, 0.0
        %3206 = vadd.xlane.f32.xlu0 %v3205
        %v3207 = vpop.xlane.xlu0 %3206
        %v3208 = vsel %vm1198, %v3198, 0.0
        %3209 = vadd.xlane.f32.xlu0 %v3208
        %v3210 = vpop.xlane.xlu0 %3209
        %v3211 = vrcp.pop %v3201
        %v3212 = vrcp.pop %v3204
        %v3213 = vrcp.pop %v3207
        %v3214 = vrcp.pop %v3210
        %v3215 = vmul.f32 %v3192, %v3211
        %v3216 = vmul.f32 %v3194, %v3212
        %v3217 = vmul.f32 %v3196, %v3213
        %v3218 = vmul.f32 %v3198, %v3214
        %v3219 = vpack.c.bf16 %v3216, %v3215
        %v3220 = vpack.c.bf16 %v3218, %v3217
        %v3222 = vsel %vm1198, %v3219, 0
        %v3225 = vsel %vm1198, %v3220, 0
        %3227 = vmatprep.subr.bf16.mxu0 0
        %3228 = vmatpush1.bf16.msra.mxu0 %v3107
        %3229 = vmatprep.subr.bf16.mxu0 0
        %3230 = vmatpush1.bf16.msra.mxu0 %v3108
        %3231 = vmatprep.subr.bf16.mxu0 0
        %3232 = vmatpush1.bf16.msra.mxu0 0
        %3233 = vmatprep.subr.bf16.mxu0 0
        %3234 = vmatpush1.bf16.msra.mxu0 0
        %3235 = vmatprep.subr.bf16.mxu0 0
        %3236 = vmatpush1.bf16.msra.mxu0 0
        %3237 = vmatprep.subr.bf16.mxu0 0
        %3238 = vmatpush1.bf16.msra.mxu0 0
        %3239 = vmatprep.subr.bf16.mxu0 0
        %3240 = vmatpush1.bf16.msra.mxu0 0
        %3241 = vmatprep.subr.bf16.mxu0 0
        %3242 = vmatpush1.bf16.msra.mxu0 0
        %3243 = vmatprep.subr.bf16.mxu0 0
        %3244 = vmatpush1.bf16.msra.mxu0 0
        %3245 = vmatprep.subr.bf16.mxu0 0
        %3246 = vmatpush1.bf16.msra.mxu0 0
        %3247 = vmatprep.subr.bf16.mxu0 0
        %3248 = vmatpush1.bf16.msra.mxu0 0
        %3249 = vmatprep.subr.bf16.mxu0 0
        %3250 = vmatpush1.bf16.msra.mxu0 0
        %3251 = vmatprep.subr.bf16.mxu0 0
        %3252 = vmatpush1.bf16.msra.mxu0 0
        %3253 = vmatprep.subr.bf16.mxu0 0
        %3254 = vmatpush1.bf16.msra.mxu0 0
        %3255 = vmatprep.subr.bf16.mxu0 0
        %3256 = vmatpush1.bf16.msra.mxu0 0
        %3257 = vmatprep.subr.bf16.mxu0 0
        %3258 = vmatpush1.bf16.msra.mxu0 0
        %3259 = vmatprep.mubr.bf16.mxu0 0
        %3260 = vmatmul.mubr.bf16.gmra.mrb[0].mxu0 %v3222
        %v3261 = vpop.f32.mrb[0].mxu0
        %v3262 = vadd.f32 0.0, %v3261
        %v3263 = vpop.f32.mrb[0].mxu0
        %v3264 = vpop.f32.mrb[0].mxu0
        %v3265 = vadd.f32 0.0, %v3264
        %v3266 = vpop.f32.mrb[0].mxu0
        %3267 = vmatprep.mubr.bf16.mxu0 0
        %3268 = vmatmul.mubr.bf16.gmra.mrb[0].mxu0 %v3225
        %v3269 = vpop.f32.mrb[0].mxu0
        %v3270 = vadd.f32 0.0, %v3269
        %v3271 = vpop.f32.mrb[0].mxu0
        %v3272 = vpop.f32.mrb[0].mxu0
        %v3273 = vadd.f32 0.0, %v3272
        %v3274 = vpop.f32.mrb[0].mxu0
        %3275 = vdwg.mxu0
        %v3276 = vpack.c.bf16 %v3265, %v3262
        %v3277 = vpack.c.bf16 %v3273, %v3270
        %s3278 = scalar_lea.vmem %s972, 16 [#allocation13]
        %v3279 = vld [vmem:[%s3278] sm:$0xf]
        %v3280 = vpack.c.bf16 %v3089, %v3089
        %3283 = vrot.lane.b32.xlu0 %v3104, 120
        %v3284 = vpop.permute.xlu0 %3283
        %3285 = vrot.lane.b32.xlu0 %v3105, 120
        %v3286 = vpop.permute.xlu0 %3285
        %v3288 = vsel %vm1523, %v3284, 0
        %v3291 = vsel %vm1523, %v3286, 0
        %v3294 = vsel %vm1530, %v3280, 0
        %3296 = vmatprep.subr.bf16.mxu0 0
        %3297 = vmatpush1.bf16.msra.mxu0 %v3294
        %3298 = vmatprep.subr.bf16.mxu0 0
        %3299 = vmatpush1.bf16.msra.mxu0 0
        %3300 = vmatprep.subr.bf16.mxu0 0
        %3301 = vmatpush1.bf16.msra.mxu0 0
        %3302 = vmatprep.subr.bf16.mxu0 0
        %3303 = vmatpush1.bf16.msra.mxu0 0
        %3304 = vmatprep.subr.bf16.mxu0 0
        %3305 = vmatpush1.bf16.msra.mxu0 0
        %3306 = vmatprep.subr.bf16.mxu0 0
        %3307 = vmatpush1.bf16.msra.mxu0 0
        %3308 = vmatprep.subr.bf16.mxu0 0
        %3309 = vmatpush1.bf16.msra.mxu0 0
        %3310 = vmatprep.subr.bf16.mxu0 0
        %3311 = vmatpush1.bf16.msra.mxu0 0
        %3312 = vmatprep.subr.bf16.mxu0 0
        %3313 = vmatpush1.bf16.msra.mxu0 0
        %3314 = vmatprep.subr.bf16.mxu0 0
        %3315 = vmatpush1.bf16.msra.mxu0 0
        %3316 = vmatprep.subr.bf16.mxu0 0
        %3317 = vmatpush1.bf16.msra.mxu0 0
        %3318 = vmatprep.subr.bf16.mxu0 0
        %3319 = vmatpush1.bf16.msra.mxu0 0
        %3320 = vmatprep.subr.bf16.mxu0 0
        %3321 = vmatpush1.bf16.msra.mxu0 0
        %3322 = vmatprep.subr.bf16.mxu0 0
        %3323 = vmatpush1.bf16.msra.mxu0 0
        %3324 = vmatprep.subr.bf16.mxu0 0
        %3325 = vmatpush1.bf16.msra.mxu0 0
        %3326 = vmatprep.subr.bf16.mxu0 0
        %3327 = vmatpush1.bf16.msra.mxu0 0
        %3328 = vmatprep.mubr.bf16.mxu0 0
        %3329 = vmatmul.mubr.bf16.gmra.mrb[0].mxu0 %v3288
        %v3330 = vpop.f32.mrb[0].mxu0
        %v3331 = vadd.f32 0.0, %v3330
        %v3332 = vpop.f32.mrb[0].mxu0
        %v3333 = vpop.f32.mrb[0].mxu0
        %v3334 = vadd.f32 0.0, %v3333
        %v3335 = vpop.f32.mrb[0].mxu0
        %3336 = vmatprep.mubr.bf16.mxu0 0
        %3337 = vmatmul.mubr.bf16.gmra.mrb[0].mxu0 %v3291
        %v3338 = vpop.f32.mrb[0].mxu0
        %v3339 = vadd.f32 0.0, %v3338
        %v3340 = vpop.f32.mrb[0].mxu0
        %v3341 = vpop.f32.mrb[0].mxu0
        %v3342 = vadd.f32 0.0, %v3341
        %v3343 = vpop.f32.mrb[0].mxu0
        %3344 = vdwg.mxu0
        %v3345 = vmul.f32 %v3331, 0.35355338
        %v3346 = vmul.f32 %v3334, 0.35355338
        %v3347 = vmul.f32 %v3339, 0.35355338
        %v3348 = vmul.f32 %v3342, 0.35355338
        %v3349 = vadd.f32 %v3345, %v1192
        %v3350 = vadd.f32 %v3346, %v1193
        %v3351 = vadd.f32 %v3347, %v1194
        %v3352 = vadd.f32 %v3348, %v1195
        %v3353 = vsel %vm1198, %v3349, -inf
        %3354 = vmax.xlane.f32.xlu0 %v3353
        %v3355 = vpop.xlane.xlu0 %3354
        %v3356 = vsel %vm1198, %v3350, -inf
        %3357 = vmax.xlane.f32.xlu0 %v3356
        %v3358 = vpop.xlane.xlu0 %3357
        %v3359 = vsel %vm1198, %v3351, -inf
        %3360 = vmax.xlane.f32.xlu0 %v3359
        %v3361 = vpop.xlane.xlu0 %3360
        %v3362 = vsel %vm1198, %v3352, -inf
        %3363 = vmax.xlane.f32.xlu0 %v3362
        %v3364 = vpop.xlane.xlu0 %3363
        %v3365 = vsub.f32 %v3349, %v3355
        %v3366 = vsub.f32 %v3350, %v3358
        %v3367 = vsub.f32 %v3351, %v3361
        %v3368 = vsub.f32 %v3352, %v3364
        %v3369 = vmul.f32 %v3365, 1.442695
        %v3370 = vpow.pop %v3369
        %v3371 = vmul.f32 %v3366, 1.442695
        %v3372 = vpow.pop %v3371
        %v3373 = vmul.f32 %v3367, 1.442695
        %v3374 = vpow.pop %v3373
        %v3375 = vmul.f32 %v3368, 1.442695
        %v3376 = vpow.pop %v3375
        %v3377 = vsel %vm1198, %v3370, 0.0
        %3378 = vadd.xlane.f32.xlu0 %v3377
        %v3379 = vpop.xlane.xlu0 %3378
        %v3380 = vsel %vm1198, %v3372, 0.0
        %3381 = vadd.xlane.f32.xlu0 %v3380
        %v3382 = vpop.xlane.xlu0 %3381
        %v3383 = vsel %vm1198, %v3374, 0.0
        %3384 = vadd.xlane.f32.xlu0 %v3383
        %v3385 = vpop.xlane.xlu0 %3384
        %v3386 = vsel %vm1198, %v3376, 0.0
        %3387 = vadd.xlane.f32.xlu0 %v3386
        %v3388 = vpop.xlane.xlu0 %3387
        %v3389 = vrcp.pop %v3379
        %v3390 = vrcp.pop %v3382
        %v3391 = vrcp.pop %v3385
        %v3392 = vrcp.pop %v3388
        %v3393 = vmul.f32 %v3370, %v3389
        %v3394 = vmul.f32 %v3372, %v3390
        %v3395 = vmul.f32 %v3374, %v3391
        %v3396 = vmul.f32 %v3376, %v3392
        %v3397 = vpack.c.bf16 %v3394, %v3393
        %v3398 = vpack.c.bf16 %v3396, %v3395
        %3401 = vrot.lane.b32.xlu0 %v3107, 120
        %v3402 = vpop.permute.xlu0 %3401
        %3403 = vrot.lane.b32.xlu0 %v3108, 120
        %v3404 = vpop.permute.xlu0 %3403
        %v3408 = vsel %vm1198, %v3397, 0
        %v3411 = vsel %vm1198, %v3398, 0
        %3413 = vmatprep.subr.bf16.mxu0 0
        %3414 = vmatpush1.bf16.msra.mxu0 %v3402
        %3415 = vmatprep.subr.bf16.mxu0 0
        %3416 = vmatpush1.bf16.msra.mxu0 %v3404
        %3417 = vmatprep.subr.bf16.mxu0 0
        %3418 = vmatpush1.bf16.msra.mxu0 0
        %3419 = vmatprep.subr.bf16.mxu0 0
        %3420 = vmatpush1.bf16.msra.mxu0 0
        %3421 = vmatprep.subr.bf16.mxu0 0
        %3422 = vmatpush1.bf16.msra.mxu0 0
        %3423 = vmatprep.subr.bf16.mxu0 0
        %3424 = vmatpush1.bf16.msra.mxu0 0
        %3425 = vmatprep.subr.bf16.mxu0 0
        %3426 = vmatpush1.bf16.msra.mxu0 0
        %3427 = vmatprep.subr.bf16.mxu0 0
        %3428 = vmatpush1.bf16.msra.mxu0 0
        %3429 = vmatprep.subr.bf16.mxu0 0
        %3430 = vmatpush1.bf16.msra.mxu0 0
        %3431 = vmatprep.subr.bf16.mxu0 0
        %3432 = vmatpush1.bf16.msra.mxu0 0
        %3433 = vmatprep.subr.bf16.mxu0 0
        %3434 = vmatpush1.bf16.msra.mxu0 0
        %3435 = vmatprep.subr.bf16.mxu0 0
        %3436 = vmatpush1.bf16.msra.mxu0 0
        %3437 = vmatprep.subr.bf16.mxu0 0
        %3438 = vmatpush1.bf16.msra.mxu0 0
        %3439 = vmatprep.subr.bf16.mxu0 0
        %3440 = vmatpush1.bf16.msra.mxu0 0
        %3441 = vmatprep.subr.bf16.mxu0 0
        %3442 = vmatpush1.bf16.msra.mxu0 0
        %3443 = vmatprep.subr.bf16.mxu0 0
        %3444 = vmatpush1.bf16.msra.mxu0 0
        %3445 = vmatprep.mubr.bf16.mxu0 0
        %3446 = vmatmul.mubr.bf16.gmra.mrb[0].mxu0 %v3408
        %v3447 = vpop.f32.mrb[0].mxu0
        %v3448 = vadd.f32 0.0, %v3447
        %v3449 = vpop.f32.mrb[0].mxu0
        %v3450 = vpop.f32.mrb[0].mxu0
        %v3451 = vadd.f32 0.0, %v3450
        %v3452 = vpop.f32.mrb[0].mxu0
        %3453 = vmatprep.mubr.bf16.mxu0 0
        %3454 = vmatmul.mubr.bf16.gmra.mrb[0].mxu0 %v3411
        %v3455 = vpop.f32.mrb[0].mxu0
        %v3456 = vadd.f32 0.0, %v3455
        %v3457 = vpop.f32.mrb[0].mxu0
        %v3458 = vpop.f32.mrb[0].mxu0
        %v3459 = vadd.f32 0.0, %v3458
        %v3460 = vpop.f32.mrb[0].mxu0
        %3461 = vdwg.mxu0
        %v3462 = vpack.c.bf16 %v3451, %v3448
        %v3463 = vpack.c.bf16 %v3459, %v3456
        %s3464 = scalar_lea.vmem %s972, 20 [#allocation13]
        %v3465 = vld [vmem:[%s3464] sm:$0xf]
        %v3467 = vsel %vm1523, %v3462, 0
        %v3470 = vsel %vm1523, %v3463, 0
        %v3473 = vsel %vm1530, %v3465, 0
        %3475 = vmatprep.subr.bf16.mxu0 0
        %3476 = vmatpush1.bf16.msra.mxu0 %v3473
        %3477 = vmatprep.subr.bf16.mxu0 0
        %3478 = vmatpush1.bf16.msra.mxu0 0
        %3479 = vmatprep.subr.bf16.mxu0 0
        %3480 = vmatpush1.bf16.msra.mxu0 0
        %3481 = vmatprep.subr.bf16.mxu0 0
        %3482 = vmatpush1.bf16.msra.mxu0 0
        %3483 = vmatprep.subr.bf16.mxu0 0
        %3484 = vmatpush1.bf16.msra.mxu0 0
        %3485 = vmatprep.subr.bf16.mxu0 0
        %3486 = vmatpush1.bf16.msra.mxu0 0
        %3487 = vmatprep.subr.bf16.mxu0 0
        %3488 = vmatpush1.bf16.msra.mxu0 0
        %3489 = vmatprep.subr.bf16.mxu0 0
        %3490 = vmatpush1.bf16.msra.mxu0 0
        %3491 = vmatprep.subr.bf16.mxu0 0
        %3492 = vmatpush1.bf16.msra.mxu0 0
        %3493 = vmatprep.subr.bf16.mxu0 0
        %3494 = vmatpush1.bf16.msra.mxu0 0
        %3495 = vmatprep.subr.bf16.mxu0 0
        %3496 = vmatpush1.bf16.msra.mxu0 0
        %3497 = vmatprep.subr.bf16.mxu0 0
        %3498 = vmatpush1.bf16.msra.mxu0 0
        %3499 = vmatprep.subr.bf16.mxu0 0
        %3500 = vmatpush1.bf16.msra.mxu0 0
        %3501 = vmatprep.subr.bf16.mxu0 0
        %3502 = vmatpush1.bf16.msra.mxu0 0
        %3503 = vmatprep.subr.bf16.mxu0 0
        %3504 = vmatpush1.bf16.msra.mxu0 0
        %3505 = vmatprep.subr.bf16.mxu0 0
        %3506 = vmatpush1.bf16.msra.mxu0 0
        %3507 = vmatprep.mubr.bf16.mxu0 0
        %3508 = vmatmul.mubr.bf16.gmra.mrb[0].mxu0 %v3467
        %v3509 = vpop.f32.mrb[0].mxu0
        %v3510 = vadd.f32 0.0, %v3509
        %v3511 = vpop.f32.mrb[0].mxu0
        %v3512 = vpop.f32.mrb[0].mxu0
        %v3513 = vadd.f32 0.0, %v3512
        %v3514 = vpop.f32.mrb[0].mxu0
        %3515 = vmatprep.mubr.bf16.mxu0 0
        %3516 = vmatmul.mubr.bf16.gmra.mrb[0].mxu0 %v3470
        %v3517 = vpop.f32.mrb[0].mxu0
        %v3518 = vadd.f32 0.0, %v3517
        %v3519 = vpop.f32.mrb[0].mxu0
        %v3520 = vpop.f32.mrb[0].mxu0
        %v3521 = vadd.f32 0.0, %v3520
        %v3522 = vpop.f32.mrb[0].mxu0
        %3523 = vdwg.mxu0
        %v3525 = vsel %vm1523, %v3276, 0
        %v3528 = vsel %vm1523, %v3277, 0
        %v3531 = vsel %vm1530, %v3279, 0
        %3533 = vmatprep.subr.bf16.mxu0 0
        %3534 = vmatpush1.bf16.msra.mxu0 %v3531
        %3535 = vmatprep.subr.bf16.mxu0 0
        %3536 = vmatpush1.bf16.msra.mxu0 0
        %3537 = vmatprep.subr.bf16.mxu0 0
        %3538 = vmatpush1.bf16.msra.mxu0 0
        %3539 = vmatprep.subr.bf16.mxu0 0
        %3540 = vmatpush1.bf16.msra.mxu0 0
        %3541 = vmatprep.subr.bf16.mxu0 0
        %3542 = vmatpush1.bf16.msra.mxu0 0
        %3543 = vmatprep.subr.bf16.mxu0 0
        %3544 = vmatpush1.bf16.msra.mxu0 0
        %3545 = vmatprep.subr.bf16.mxu0 0
        %3546 = vmatpush1.bf16.msra.mxu0 0
        %3547 = vmatprep.subr.bf16.mxu0 0
        %3548 = vmatpush1.bf16.msra.mxu0 0
        %3549 = vmatprep.subr.bf16.mxu0 0
        %3550 = vmatpush1.bf16.msra.mxu0 0
        %3551 = vmatprep.subr.bf16.mxu0 0
        %3552 = vmatpush1.bf16.msra.mxu0 0
        %3553 = vmatprep.subr.bf16.mxu0 0
        %3554 = vmatpush1.bf16.msra.mxu0 0
        %3555 = vmatprep.subr.bf16.mxu0 0
        %3556 = vmatpush1.bf16.msra.mxu0 0
        %3557 = vmatprep.subr.bf16.mxu0 0
        %3558 = vmatpush1.bf16.msra.mxu0 0
        %3559 = vmatprep.subr.bf16.mxu0 0
        %3560 = vmatpush1.bf16.msra.mxu0 0
        %3561 = vmatprep.subr.bf16.mxu0 0
        %3562 = vmatpush1.bf16.msra.mxu0 0
        %3563 = vmatprep.subr.bf16.mxu0 0
        %3564 = vmatpush1.bf16.msra.mxu0 0
        %3565 = vmatprep.mubr.bf16.mxu0 0
        %3566 = vmatmul.mubr.bf16.gmra.mrb[0].mxu0 %v3525
        %v3567 = vpop.f32.mrb[0].mxu0
        %v3568 = vadd.f32 %v3510, %v3567
        %v3569 = vpop.f32.mrb[0].mxu0
        %v3570 = vpop.f32.mrb[0].mxu0
        %v3571 = vadd.f32 %v3513, %v3570
        %v3572 = vpop.f32.mrb[0].mxu0
        %3573 = vmatprep.mubr.bf16.mxu0 0
        %3574 = vmatmul.mubr.bf16.gmra.mrb[0].mxu0 %v3528
        %v3575 = vpop.f32.mrb[0].mxu0
        %v3576 = vadd.f32 %v3518, %v3575
        %v3577 = vpop.f32.mrb[0].mxu0
        %v3578 = vpop.f32.mrb[0].mxu0
        %v3579 = vadd.f32 %v3521, %v3578
        %v3580 = vpop.f32.mrb[0].mxu0
        %3581 = vdwg.mxu0
        %v3582 = vpack.c.bf16 %v3090, %v3090
        %3583 = vrot.lane.b32.xlu0 %v3104, 112
        %v3584 = vpop.permute.xlu0 %3583
        %3585 = vrot.lane.b32.xlu0 %v3105, 112
        %v3586 = vpop.permute.xlu0 %3585
        %v3588 = vsel %vm1523, %v3584, 0
        %v3591 = vsel %vm1523, %v3586, 0
        %v3594 = vsel %vm1530, %v3582, 0
        %3596 = vmatprep.subr.bf16.mxu0 0
        %3597 = vmatpush1.bf16.msra.mxu0 %v3594
        %3598 = vmatprep.subr.bf16.mxu0 0
        %3599 = vmatpush1.bf16.msra.mxu0 0
        %3600 = vmatprep.subr.bf16.mxu0 0
        %3601 = vmatpush1.bf16.msra.mxu0 0
        %3602 = vmatprep.subr.bf16.mxu0 0
        %3603 = vmatpush1.bf16.msra.mxu0 0
        %3604 = vmatprep.subr.bf16.mxu0 0
        %3605 = vmatpush1.bf16.msra.mxu0 0
        %3606 = vmatprep.subr.bf16.mxu0 0
        %3607 = vmatpush1.bf16.msra.mxu0 0
        %3608 = vmatprep.subr.bf16.mxu0 0
        %3609 = vmatpush1.bf16.msra.mxu0 0
        %3610 = vmatprep.subr.bf16.mxu0 0
        %3611 = vmatpush1.bf16.msra.mxu0 0
        %3612 = vmatprep.subr.bf16.mxu0 0
        %3613 = vmatpush1.bf16.msra.mxu0 0
        %3614 = vmatprep.subr.bf16.mxu0 0
        %3615 = vmatpush1.bf16.msra.mxu0 0
        %3616 = vmatprep.subr.bf16.mxu0 0
        %3617 = vmatpush1.bf16.msra.mxu0 0
        %3618 = vmatprep.subr.bf16.mxu0 0
        %3619 = vmatpush1.bf16.msra.mxu0 0
        %3620 = vmatprep.subr.bf16.mxu0 0
        %3621 = vmatpush1.bf16.msra.mxu0 0
        %3622 = vmatprep.subr.bf16.mxu0 0
        %3623 = vmatpush1.bf16.msra.mxu0 0
        %3624 = vmatprep.subr.bf16.mxu0 0
        %3625 = vmatpush1.bf16.msra.mxu0 0
        %3626 = vmatprep.subr.bf16.mxu0 0
        %3627 = vmatpush1.bf16.msra.mxu0 0
        %3628 = vmatprep.mubr.bf16.mxu0 0
        %3629 = vmatmul.mubr.bf16.gmra.mrb[0].mxu0 %v3588
        %v3630 = vpop.f32.mrb[0].mxu0
        %v3631 = vadd.f32 0.0, %v3630
        %v3632 = vpop.f32.mrb[0].mxu0
        %v3633 = vpop.f32.mrb[0].mxu0
        %v3634 = vadd.f32 0.0, %v3633
        %v3635 = vpop.f32.mrb[0].mxu0
        %3636 = vmatprep.mubr.bf16.mxu0 0
        %3637 = vmatmul.mubr.bf16.gmra.mrb[0].mxu0 %v3591
        %v3638 = vpop.f32.mrb[0].mxu0
        %v3639 = vadd.f32 0.0, %v3638
        %v3640 = vpop.f32.mrb[0].mxu0
        %v3641 = vpop.f32.mrb[0].mxu0
        %v3642 = vadd.f32 0.0, %v3641
        %v3643 = vpop.f32.mrb[0].mxu0
        %3644 = vdwg.mxu0
        %v3645 = vmul.f32 %v3631, 0.35355338
        %v3646 = vmul.f32 %v3634, 0.35355338
        %v3647 = vmul.f32 %v3639, 0.35355338
        %v3648 = vmul.f32 %v3642, 0.35355338
        %v3649 = vadd.f32 %v3645, %v1192
        %v3650 = vadd.f32 %v3646, %v1193
        %v3651 = vadd.f32 %v3647, %v1194
        %v3652 = vadd.f32 %v3648, %v1195
        %v3653 = vsel %vm1198, %v3649, -inf
        %3654 = vmax.xlane.f32.xlu0 %v3653
        %v3655 = vpop.xlane.xlu0 %3654
        %v3656 = vsel %vm1198, %v3650, -inf
        %3657 = vmax.xlane.f32.xlu0 %v3656
        %v3658 = vpop.xlane.xlu0 %3657
        %v3659 = vsel %vm1198, %v3651, -inf
        %3660 = vmax.xlane.f32.xlu0 %v3659
        %v3661 = vpop.xlane.xlu0 %3660
        %v3662 = vsel %vm1198, %v3652, -inf
        %3663 = vmax.xlane.f32.xlu0 %v3662
        %v3664 = vpop.xlane.xlu0 %3663
        %v3665 = vsub.f32 %v3649, %v3655
        %v3666 = vsub.f32 %v3650, %v3658
        %v3667 = vsub.f32 %v3651, %v3661
        %v3668 = vsub.f32 %v3652, %v3664
        %v3669 = vmul.f32 %v3665, 1.442695
        %v3670 = vpow.pop %v3669
        %v3671 = vmul.f32 %v3666, 1.442695
        %v3672 = vpow.pop %v3671
        %v3673 = vmul.f32 %v3667, 1.442695
        %v3674 = vpow.pop %v3673
        %v3675 = vmul.f32 %v3668, 1.442695
        %v3676 = vpow.pop %v3675
        %v3677 = vsel %vm1198, %v3670, 0.0
        %3678 = vadd.xlane.f32.xlu0 %v3677
        %v3679 = vpop.xlane.xlu0 %3678
        %v3680 = vsel %vm1198, %v3672, 0.0
        %3681 = vadd.xlane.f32.xlu0 %v3680
        %v3682 = vpop.xlane.xlu0 %3681
        %v3683 = vsel %vm1198, %v3674, 0.0
        %3684 = vadd.xlane.f32.xlu0 %v3683
        %v3685 = vpop.xlane.xlu0 %3684
        %v3686 = vsel %vm1198, %v3676, 0.0
        %3687 = vadd.xlane.f32.xlu0 %v3686
        %v3688 = vpop.xlane.xlu0 %3687
        %v3689 = vrcp.pop %v3679
        %v3690 = vrcp.pop %v3682
        %v3691 = vrcp.pop %v3685
        %v3692 = vrcp.pop %v3688
        %v3693 = vmul.f32 %v3670, %v3689
        %v3694 = vmul.f32 %v3672, %v3690
        %v3695 = vmul.f32 %v3674, %v3691
        %v3696 = vmul.f32 %v3676, %v3692
        %v3697 = vpack.c.bf16 %v3694, %v3693
        %v3698 = vpack.c.bf16 %v3696, %v3695
        %3699 = vrot.lane.b32.xlu0 %v3107, 112
        %v3700 = vpop.permute.xlu0 %3699
        %3701 = vrot.lane.b32.xlu0 %v3108, 112
        %v3702 = vpop.permute.xlu0 %3701
        %v3706 = vsel %vm1198, %v3697, 0
        %v3709 = vsel %vm1198, %v3698, 0
        %3711 = vmatprep.subr.bf16.mxu0 0
        %3712 = vmatpush1.bf16.msra.mxu0 %v3700
        %3713 = vmatprep.subr.bf16.mxu0 0
        %3714 = vmatpush1.bf16.msra.mxu0 %v3702
        %3715 = vmatprep.subr.bf16.mxu0 0
        %3716 = vmatpush1.bf16.msra.mxu0 0
        %3717 = vmatprep.subr.bf16.mxu0 0
        %3718 = vmatpush1.bf16.msra.mxu0 0
        %3719 = vmatprep.subr.bf16.mxu0 0
        %3720 = vmatpush1.bf16.msra.mxu0 0
        %3721 = vmatprep.subr.bf16.mxu0 0
        %3722 = vmatpush1.bf16.msra.mxu0 0
        %3723 = vmatprep.subr.bf16.mxu0 0
        %3724 = vmatpush1.bf16.msra.mxu0 0
        %3725 = vmatprep.subr.bf16.mxu0 0
        %3726 = vmatpush1.bf16.msra.mxu0 0
        %3727 = vmatprep.subr.bf16.mxu0 0
        %3728 = vmatpush1.bf16.msra.mxu0 0
        %3729 = vmatprep.subr.bf16.mxu0 0
        %3730 = vmatpush1.bf16.msra.mxu0 0
        %3731 = vmatprep.subr.bf16.mxu0 0
        %3732 = vmatpush1.bf16.msra.mxu0 0
        %3733 = vmatprep.subr.bf16.mxu0 0
        %3734 = vmatpush1.bf16.msra.mxu0 0
        %3735 = vmatprep.subr.bf16.mxu0 0
        %3736 = vmatpush1.bf16.msra.mxu0 0
        %3737 = vmatprep.subr.bf16.mxu0 0
        %3738 = vmatpush1.bf16.msra.mxu0 0
        %3739 = vmatprep.subr.bf16.mxu0 0
        %3740 = vmatpush1.bf16.msra.mxu0 0
        %3741 = vmatprep.subr.bf16.mxu0 0
        %3742 = vmatpush1.bf16.msra.mxu0 0
        %3743 = vmatprep.mubr.bf16.mxu0 0
        %3744 = vmatmul.mubr.bf16.gmra.mrb[0].mxu0 %v3706
        %v3745 = vpop.f32.mrb[0].mxu0
        %v3746 = vadd.f32 0.0, %v3745
        %v3747 = vpop.f32.mrb[0].mxu0
        %v3748 = vpop.f32.mrb[0].mxu0
        %v3749 = vadd.f32 0.0, %v3748
        %v3750 = vpop.f32.mrb[0].mxu0
        %3751 = vmatprep.mubr.bf16.mxu0 0
        %3752 = vmatmul.mubr.bf16.gmra.mrb[0].mxu0 %v3709
        %v3753 = vpop.f32.mrb[0].mxu0
        %v3754 = vadd.f32 0.0, %v3753
        %v3755 = vpop.f32.mrb[0].mxu0
        %v3756 = vpop.f32.mrb[0].mxu0
        %v3757 = vadd.f32 0.0, %v3756
        %v3758 = vpop.f32.mrb[0].mxu0
        %3759 = vdwg.mxu0
        %v3760 = vpack.c.bf16 %v3749, %v3746
        %v3761 = vpack.c.bf16 %v3757, %v3754
        %s3762 = scalar_lea.vmem %s972, 24 [#allocation13]
        %v3763 = vld [vmem:[%s3762] sm:$0xf]
        %v3765 = vsel %vm1523, %v3760, 0
        %v3768 = vsel %vm1523, %v3761, 0
        %v3771 = vsel %vm1530, %v3763, 0
        %3773 = vmatprep.subr.bf16.mxu0 0
        %3774 = vmatpush1.bf16.msra.mxu0 %v3771
        %3775 = vmatprep.subr.bf16.mxu0 0
        %3776 = vmatpush1.bf16.msra.mxu0 0
        %3777 = vmatprep.subr.bf16.mxu0 0
        %3778 = vmatpush1.bf16.msra.mxu0 0
        %3779 = vmatprep.subr.bf16.mxu0 0
        %3780 = vmatpush1.bf16.msra.mxu0 0
        %3781 = vmatprep.subr.bf16.mxu0 0
        %3782 = vmatpush1.bf16.msra.mxu0 0
        %3783 = vmatprep.subr.bf16.mxu0 0
        %3784 = vmatpush1.bf16.msra.mxu0 0
        %3785 = vmatprep.subr.bf16.mxu0 0
        %3786 = vmatpush1.bf16.msra.mxu0 0
        %3787 = vmatprep.subr.bf16.mxu0 0
        %3788 = vmatpush1.bf16.msra.mxu0 0
        %3789 = vmatprep.subr.bf16.mxu0 0
        %3790 = vmatpush1.bf16.msra.mxu0 0
        %3791 = vmatprep.subr.bf16.mxu0 0
        %3792 = vmatpush1.bf16.msra.mxu0 0
        %3793 = vmatprep.subr.bf16.mxu0 0
        %3794 = vmatpush1.bf16.msra.mxu0 0
        %3795 = vmatprep.subr.bf16.mxu0 0
        %3796 = vmatpush1.bf16.msra.mxu0 0
        %3797 = vmatprep.subr.bf16.mxu0 0
        %3798 = vmatpush1.bf16.msra.mxu0 0
        %3799 = vmatprep.subr.bf16.mxu0 0
        %3800 = vmatpush1.bf16.msra.mxu0 0
        %3801 = vmatprep.subr.bf16.mxu0 0
        %3802 = vmatpush1.bf16.msra.mxu0 0
        %3803 = vmatprep.subr.bf16.mxu0 0
        %3804 = vmatpush1.bf16.msra.mxu0 0
        %3805 = vmatprep.mubr.bf16.mxu0 0
        %3806 = vmatmul.mubr.bf16.gmra.mrb[0].mxu0 %v3765
        %v3807 = vpop.f32.mrb[0].mxu0
        %v3808 = vadd.f32 0.0, %v3807
        %v3809 = vpop.f32.mrb[0].mxu0
        %v3810 = vpop.f32.mrb[0].mxu0
        %v3811 = vadd.f32 0.0, %v3810
        %v3812 = vpop.f32.mrb[0].mxu0
        %3813 = vmatprep.mubr.bf16.mxu0 0
        %3814 = vmatmul.mubr.bf16.gmra.mrb[0].mxu0 %v3768
        %v3815 = vpop.f32.mrb[0].mxu0
        %v3816 = vadd.f32 0.0, %v3815
        %v3817 = vpop.f32.mrb[0].mxu0
        %v3818 = vpop.f32.mrb[0].mxu0
        %v3819 = vadd.f32 0.0, %v3818
        %v3820 = vpop.f32.mrb[0].mxu0
        %3821 = vdwg.mxu0
        %v3822 = vadd.f32 %v3568, %v3808
        %v3823 = vadd.f32 %v3571, %v3811
        %v3824 = vadd.f32 %v3576, %v3816
        %v3825 = vadd.f32 %v3579, %v3819
        %v3826 = vpack.c.bf16 %v3091, %v3091
        %3827 = vrot.lane.b32.xlu0 %v3104, 104
        %v3828 = vpop.permute.xlu0 %3827
        %3829 = vrot.lane.b32.xlu0 %v3105, 104
        %v3830 = vpop.permute.xlu0 %3829
        %v3832 = vsel %vm1523, %v3828, 0
        %v3835 = vsel %vm1523, %v3830, 0
        %v3838 = vsel %vm1530, %v3826, 0
        %3840 = vmatprep.subr.bf16.mxu0 0
        %3841 = vmatpush1.bf16.msra.mxu0 %v3838
        %3842 = vmatprep.subr.bf16.mxu0 0
        %3843 = vmatpush1.bf16.msra.mxu0 0
        %3844 = vmatprep.subr.bf16.mxu0 0
        %3845 = vmatpush1.bf16.msra.mxu0 0
        %3846 = vmatprep.subr.bf16.mxu0 0
        %3847 = vmatpush1.bf16.msra.mxu0 0
        %3848 = vmatprep.subr.bf16.mxu0 0
        %3849 = vmatpush1.bf16.msra.mxu0 0
        %3850 = vmatprep.subr.bf16.mxu0 0
        %3851 = vmatpush1.bf16.msra.mxu0 0
        %3852 = vmatprep.subr.bf16.mxu0 0
        %3853 = vmatpush1.bf16.msra.mxu0 0
        %3854 = vmatprep.subr.bf16.mxu0 0
        %3855 = vmatpush1.bf16.msra.mxu0 0
        %3856 = vmatprep.subr.bf16.mxu0 0
        %3857 = vmatpush1.bf16.msra.mxu0 0
        %3858 = vmatprep.subr.bf16.mxu0 0
        %3859 = vmatpush1.bf16.msra.mxu0 0
        %3860 = vmatprep.subr.bf16.mxu0 0
        %3861 = vmatpush1.bf16.msra.mxu0 0
        %3862 = vmatprep.subr.bf16.mxu0 0
        %3863 = vmatpush1.bf16.msra.mxu0 0
        %3864 = vmatprep.subr.bf16.mxu0 0
        %3865 = vmatpush1.bf16.msra.mxu0 0
        %3866 = vmatprep.subr.bf16.mxu0 0
        %3867 = vmatpush1.bf16.msra.mxu0 0
        %3868 = vmatprep.subr.bf16.mxu0 0
        %3869 = vmatpush1.bf16.msra.mxu0 0
        %3870 = vmatprep.subr.bf16.mxu0 0
        %3871 = vmatpush1.bf16.msra.mxu0 0
        %3872 = vmatprep.mubr.bf16.mxu0 0
        %3873 = vmatmul.mubr.bf16.gmra.mrb[0].mxu0 %v3832
        %v3874 = vpop.f32.mrb[0].mxu0
        %v3875 = vadd.f32 0.0, %v3874
        %v3876 = vpop.f32.mrb[0].mxu0
        %v3877 = vpop.f32.mrb[0].mxu0
        %v3878 = vadd.f32 0.0, %v3877
        %v3879 = vpop.f32.mrb[0].mxu0
        %3880 = vmatprep.mubr.bf16.mxu0 0
        %3881 = vmatmul.mubr.bf16.gmra.mrb[0].mxu0 %v3835
        %v3882 = vpop.f32.mrb[0].mxu0
        %v3883 = vadd.f32 0.0, %v3882
        %v3884 = vpop.f32.mrb[0].mxu0
        %v3885 = vpop.f32.mrb[0].mxu0
        %v3886 = vadd.f32 0.0, %v3885
        %v3887 = vpop.f32.mrb[0].mxu0
        %3888 = vdwg.mxu0
        %v3889 = vmul.f32 %v3875, 0.35355338
        %v3890 = vmul.f32 %v3878, 0.35355338
        %v3891 = vmul.f32 %v3883, 0.35355338
        %v3892 = vmul.f32 %v3886, 0.35355338
        %v3893 = vadd.f32 %v3889, %v1192
        %v3894 = vadd.f32 %v3890, %v1193
        %v3895 = vadd.f32 %v3891, %v1194
        %v3896 = vadd.f32 %v3892, %v1195
        %v3897 = vsel %vm1198, %v3893, -inf
        %3898 = vmax.xlane.f32.xlu0 %v3897
        %v3899 = vpop.xlane.xlu0 %3898
        %v3900 = vsel %vm1198, %v3894, -inf
        %3901 = vmax.xlane.f32.xlu0 %v3900
        %v3902 = vpop.xlane.xlu0 %3901
        %v3903 = vsel %vm1198, %v3895, -inf
        %3904 = vmax.xlane.f32.xlu0 %v3903
        %v3905 = vpop.xlane.xlu0 %3904
        %v3906 = vsel %vm1198, %v3896, -inf
        %3907 = vmax.xlane.f32.xlu0 %v3906
        %v3908 = vpop.xlane.xlu0 %3907
        %v3909 = vsub.f32 %v3893, %v3899
        %v3910 = vsub.f32 %v3894, %v3902
        %v3911 = vsub.f32 %v3895, %v3905
        %v3912 = vsub.f32 %v3896, %v3908
        %v3913 = vmul.f32 %v3909, 1.442695
        %v3914 = vpow.pop %v3913
        %v3915 = vmul.f32 %v3910, 1.442695
        %v3916 = vpow.pop %v3915
        %v3917 = vmul.f32 %v3911, 1.442695
        %v3918 = vpow.pop %v3917
        %v3919 = vmul.f32 %v3912, 1.442695
        %v3920 = vpow.pop %v3919
        %v3921 = vsel %vm1198, %v3914, 0.0
        %3922 = vadd.xlane.f32.xlu0 %v3921
        %v3923 = vpop.xlane.xlu0 %3922
        %v3924 = vsel %vm1198, %v3916, 0.0
        %3925 = vadd.xlane.f32.xlu0 %v3924
        %v3926 = vpop.xlane.xlu0 %3925
        %v3927 = vsel %vm1198, %v3918, 0.0
        %3928 = vadd.xlane.f32.xlu0 %v3927
        %v3929 = vpop.xlane.xlu0 %3928
        %v3930 = vsel %vm1198, %v3920, 0.0
        %3931 = vadd.xlane.f32.xlu0 %v3930
        %v3932 = vpop.xlane.xlu0 %3931
        %v3933 = vrcp.pop %v3923
        %v3934 = vrcp.pop %v3926
        %v3935 = vrcp.pop %v3929
        %v3936 = vrcp.pop %v3932
        %v3937 = vmul.f32 %v3914, %v3933
        %v3938 = vmul.f32 %v3916, %v3934
        %v3939 = vmul.f32 %v3918, %v3935
        %v3940 = vmul.f32 %v3920, %v3936
        %v3941 = vpack.c.bf16 %v3938, %v3937
        %v3942 = vpack.c.bf16 %v3940, %v3939
        %3943 = vrot.lane.b32.xlu0 %v3107, 104
        %v3944 = vpop.permute.xlu0 %3943
        %3945 = vrot.lane.b32.xlu0 %v3108, 104
        %v3946 = vpop.permute.xlu0 %3945
        %v3950 = vsel %vm1198, %v3941, 0
        %v3953 = vsel %vm1198, %v3942, 0
        %3955 = vmatprep.subr.bf16.mxu0 0
        %3956 = vmatpush1.bf16.msra.mxu0 %v3944
        %3957 = vmatprep.subr.bf16.mxu0 0
        %3958 = vmatpush1.bf16.msra.mxu0 %v3946
        %3959 = vmatprep.subr.bf16.mxu0 0
        %3960 = vmatpush1.bf16.msra.mxu0 0
        %3961 = vmatprep.subr.bf16.mxu0 0
        %3962 = vmatpush1.bf16.msra.mxu0 0
        %3963 = vmatprep.subr.bf16.mxu0 0
        %3964 = vmatpush1.bf16.msra.mxu0 0
        %3965 = vmatprep.subr.bf16.mxu0 0
        %3966 = vmatpush1.bf16.msra.mxu0 0
        %3967 = vmatprep.subr.bf16.mxu0 0
        %3968 = vmatpush1.bf16.msra.mxu0 0
        %3969 = vmatprep.subr.bf16.mxu0 0
        %3970 = vmatpush1.bf16.msra.mxu0 0
        %3971 = vmatprep.subr.bf16.mxu0 0
        %3972 = vmatpush1.bf16.msra.mxu0 0
        %3973 = vmatprep.subr.bf16.mxu0 0
        %3974 = vmatpush1.bf16.msra.mxu0 0
        %3975 = vmatprep.subr.bf16.mxu0 0
        %3976 = vmatpush1.bf16.msra.mxu0 0
        %3977 = vmatprep.subr.bf16.mxu0 0
        %3978 = vmatpush1.bf16.msra.mxu0 0
        %3979 = vmatprep.subr.bf16.mxu0 0
        %3980 = vmatpush1.bf16.msra.mxu0 0
        %3981 = vmatprep.subr.bf16.mxu0 0
        %3982 = vmatpush1.bf16.msra.mxu0 0
        %3983 = vmatprep.subr.bf16.mxu0 0
        %3984 = vmatpush1.bf16.msra.mxu0 0
        %3985 = vmatprep.subr.bf16.mxu0 0
        %3986 = vmatpush1.bf16.msra.mxu0 0
        %3987 = vmatprep.mubr.bf16.mxu0 0
        %3988 = vmatmul.mubr.bf16.gmra.mrb[0].mxu0 %v3950
        %v3989 = vpop.f32.mrb[0].mxu0
        %v3990 = vadd.f32 0.0, %v3989
        %v3991 = vpop.f32.mrb[0].mxu0
        %v3992 = vpop.f32.mrb[0].mxu0
        %v3993 = vadd.f32 0.0, %v3992
        %v3994 = vpop.f32.mrb[0].mxu0
        %3995 = vmatprep.mubr.bf16.mxu0 0
        %3996 = vmatmul.mubr.bf16.gmra.mrb[0].mxu0 %v3953
        %v3997 = vpop.f32.mrb[0].mxu0
        %v3998 = vadd.f32 0.0, %v3997
        %v3999 = vpop.f32.mrb[0].mxu0
        %v4000 = vpop.f32.mrb[0].mxu0
        %v4001 = vadd.f32 0.0, %v4000
        %v4002 = vpop.f32.mrb[0].mxu0
        %4003 = vdwg.mxu0
        %v4004 = vpack.c.bf16 %v3993, %v3990
        %v4005 = vpack.c.bf16 %v4001, %v3998
        %s4006 = scalar_lea.vmem %s972, 28 [#allocation13]
        %v4007 = vld [vmem:[%s4006] sm:$0xf]
        %v4009 = vsel %vm1523, %v4004, 0
        %v4012 = vsel %vm1523, %v4005, 0
        %v4015 = vsel %vm1530, %v4007, 0
        %4017 = vmatprep.subr.bf16.mxu0 0
        %4018 = vmatpush1.bf16.msra.mxu0 %v4015
        %4019 = vmatprep.subr.bf16.mxu0 0
        %4020 = vmatpush1.bf16.msra.mxu0 0
        %4021 = vmatprep.subr.bf16.mxu0 0
        %4022 = vmatpush1.bf16.msra.mxu0 0
        %4023 = vmatprep.subr.bf16.mxu0 0
        %4024 = vmatpush1.bf16.msra.mxu0 0
        %4025 = vmatprep.subr.bf16.mxu0 0
        %4026 = vmatpush1.bf16.msra.mxu0 0
        %4027 = vmatprep.subr.bf16.mxu0 0
        %4028 = vmatpush1.bf16.msra.mxu0 0
        %4029 = vmatprep.subr.bf16.mxu0 0
        %4030 = vmatpush1.bf16.msra.mxu0 0
        %4031 = vmatprep.subr.bf16.mxu0 0
        %4032 = vmatpush1.bf16.msra.mxu0 0
        %4033 = vmatprep.subr.bf16.mxu0 0
        %4034 = vmatpush1.bf16.msra.mxu0 0
        %4035 = vmatprep.subr.bf16.mxu0 0
        %4036 = vmatpush1.bf16.msra.mxu0 0
        %4037 = vmatprep.subr.bf16.mxu0 0
        %4038 = vmatpush1.bf16.msra.mxu0 0
        %4039 = vmatprep.subr.bf16.mxu0 0
        %4040 = vmatpush1.bf16.msra.mxu0 0
        %4041 = vmatprep.subr.bf16.mxu0 0
        %4042 = vmatpush1.bf16.msra.mxu0 0
        %4043 = vmatprep.subr.bf16.mxu0 0
        %4044 = vmatpush1.bf16.msra.mxu0 0
        %4045 = vmatprep.subr.bf16.mxu0 0
        %4046 = vmatpush1.bf16.msra.mxu0 0
        %4047 = vmatprep.subr.bf16.mxu0 0
        %4048 = vmatpush1.bf16.msra.mxu0 0
        %4049 = vmatprep.mubr.bf16.mxu0 0
        %4050 = vmatmul.mubr.bf16.gmra.mrb[0].mxu0 %v4009
        %v4051 = vpop.f32.mrb[0].mxu0
        %v4052 = vadd.f32 0.0, %v4051
        %v4053 = vpop.f32.mrb[0].mxu0
        %v4054 = vpop.f32.mrb[0].mxu0
        %v4055 = vadd.f32 0.0, %v4054
        %v4056 = vpop.f32.mrb[0].mxu0
        %4057 = vmatprep.mubr.bf16.mxu0 0
        %4058 = vmatmul.mubr.bf16.gmra.mrb[0].mxu0 %v4012
        %v4059 = vpop.f32.mrb[0].mxu0
        %v4060 = vadd.f32 0.0, %v4059
        %v4061 = vpop.f32.mrb[0].mxu0
        %v4062 = vpop.f32.mrb[0].mxu0
        %v4063 = vadd.f32 0.0, %v4062
        %v4064 = vpop.f32.mrb[0].mxu0
        %4065 = vdwg.mxu0
        %v4066 = vadd.f32 %v3822, %v4052
        %v4067 = vadd.f32 %v3823, %v4055
        %v4068 = vadd.f32 %v3824, %v4060
        %v4069 = vadd.f32 %v3825, %v4063
        %v4070 = vadd.f32 %v2777, %v4066
        %v4071 = vadd.f32 %v2778, %v4067
        %v4072 = vadd.f32 %v2779, %v4068
        %v4073 = vadd.f32 %v2780, %v4069
        %v4074 = vld [vmem:[%s981 + $0x1] sm:$0x1]
        %v4075 = vlaneseq
        %v4076 = vshrl.u32 %v4075, 7
        %v4077 = vsub.s32 0, %v4076
        %v4078 = vrot.slane %v4074, %v4077
        %v4079 = vadd.f32 %v4070, %v4078
        %v4080 = vadd.f32 %v4071, %v4078
        %v4081 = vadd.f32 %v4072, %v4078
        %v4082 = vadd.f32 %v4073, %v4078
        %v4083 = vld [vmem:[%s990 + $0x1] sm:$0x1]
        %v4084 = vld [vmem:[%s999 + $0x1] sm:$0x1]
        %v4085 = vsel %vm1198, %v4079, 0.0
        %4086 = vadd.xlane.f32.xlu0 %v4085
        %v4087 = vpop.xlane.xlu0 %4086
        %v4088 = vsel %vm1198, %v4080, 0.0
        %4089 = vadd.xlane.f32.xlu0 %v4088
        %v4090 = vpop.xlane.xlu0 %4089
        %v4091 = vsel %vm1198, %v4081, 0.0
        %4092 = vadd.xlane.f32.xlu0 %v4091
        %v4093 = vpop.xlane.xlu0 %4092
        %v4094 = vsel %vm1198, %v4082, 0.0
        %4095 = vadd.xlane.f32.xlu0 %v4094
        %v4096 = vpop.xlane.xlu0 %4095
        %v4097 = vmul.f32 %v4087, %v1211
        %v4098 = vmul.f32 %v4090, %v1211
        %v4099 = vmul.f32 %v4093, %v1211
        %v4100 = vmul.f32 %v4096, %v1211
        %v4101 = vsub.f32 %v4079, %v4097
        %v4102 = vsub.f32 %v4080, %v4098
        %v4103 = vsub.f32 %v4081, %v4099
        %v4104 = vsub.f32 %v4082, %v4100
        %v4105 = vmul.f32 %v4101, %v4101
        %v4106 = vmul.f32 %v4102, %v4102
        %v4107 = vmul.f32 %v4103, %v4103
        %v4108 = vmul.f32 %v4104, %v4104
        %v4109 = vsel %vm1198, %v4105, 0.0
        %4110 = vadd.xlane.f32.xlu0 %v4109
        %v4111 = vpop.xlane.xlu0 %4110
        %v4112 = vsel %vm1198, %v4106, 0.0
        %4113 = vadd.xlane.f32.xlu0 %v4112
        %v4114 = vpop.xlane.xlu0 %4113
        %v4115 = vsel %vm1198, %v4107, 0.0
        %4116 = vadd.xlane.f32.xlu0 %v4115
        %v4117 = vpop.xlane.xlu0 %4116
        %v4118 = vsel %vm1198, %v4108, 0.0
        %4119 = vadd.xlane.f32.xlu0 %v4118
        %v4120 = vpop.xlane.xlu0 %4119
        %v4121 = vmul.f32 %v4111, %v1211
        %v4122 = vmul.f32 %v4114, %v1211
        %v4123 = vmul.f32 %v4117, %v1211
        %v4124 = vmul.f32 %v4120, %v1211
        %v4125 = vadd.f32 %v4121, 1e-05
        %v4126 = vadd.f32 %v4122, 1e-05
        %v4127 = vadd.f32 %v4123, 1e-05
        %v4128 = vadd.f32 %v4124, 1e-05
        %v4129 = vrsqrt.pop %v4125
        %v4130 = vrsqrt.pop %v4126
        %v4131 = vrsqrt.pop %v4127
        %v4132 = vrsqrt.pop %v4128
        %v4133 = vmul.f32 %v4101, %v4129
        %v4134 = vmul.f32 %v4102, %v4130
        %v4135 = vmul.f32 %v4103, %v4131
        %v4136 = vmul.f32 %v4104, %v4132
        %v4137 = vlaneseq
        %v4138 = vshrl.u32 %v4137, 7
        %v4139 = vsub.s32 0, %v4138
        %v4140 = vrot.slane %v4083, %v4139
        %v4141 = vmul.f32 %v4133, %v4140
        %v4142 = vmul.f32 %v4134, %v4140
        %v4143 = vmul.f32 %v4135, %v4140
        %v4144 = vmul.f32 %v4136, %v4140
        %v4145 = vlaneseq
        %v4146 = vshrl.u32 %v4145, 7
        %v4147 = vsub.s32 0, %v4146
        %v4148 = vrot.slane %v4084, %v4147
        %v4149 = vadd.f32 %v4141, %v4148
        %v4150 = vadd.f32 %v4142, %v4148
        %v4151 = vadd.f32 %v4143, %v4148
        %v4152 = vadd.f32 %v4144, %v4148
        %v4153 = vpack.c.bf16 %v4150, %v4149
        %v4154 = vpack.c.bf16 %v4152, %v4151
        %s4155 = scalar_lea.vmem %s1008, 16 [#allocation17]
        %v4156 = vld [vmem:[%s4155] sm:$0xf]
        %v4157 = vld [vmem:[%s4155 + $0x4] sm:$0xf]
        %v4158 = vld [vmem:[%s4155 + $0x8] sm:$0xf]
        %v4159 = vld [vmem:[%s4155 + $0xc] sm:$0xf]
        %v4160 = vld [vmem:[%s1017 + $0x1] sm:$0x1]
        %v4161 = vlaneseq
        %v4162 = vshrl.u32 %v4161, 7
        %v4163 = vsub.s32 0, %v4162
        %v4164 = vrot.slane %v4160, %v4163
        %v4169 = vunpack.c.l.b16 %v4156
        %v4170 = vunpack.c.l.b16 %v4157
        %v4171 = vunpack.c.l.b16 %v4158
        %v4172 = vunpack.c.l.b16 %v4159
        %v4173 = vpack.c.b16 %v4170, %v4169
        %v4174 = vpack.c.b16 %v4172, %v4171
        %v4178 = vsel %vm1198, %v4153, 0
        %v4181 = vsel %vm1198, %v4154, 0
        %4183 = vmatprep.subr.bf16.mxu0 0
        %4184 = vmatpush1.bf16.msra.mxu0 %v4173
        %4185 = vmatprep.subr.bf16.mxu0 0
        %4186 = vmatpush1.bf16.msra.mxu0 %v4174
        %4187 = vmatprep.subr.bf16.mxu0 0
        %4188 = vmatpush1.bf16.msra.mxu0 0
        %4189 = vmatprep.subr.bf16.mxu0 0
        %4190 = vmatpush1.bf16.msra.mxu0 0
        %4191 = vmatprep.subr.bf16.mxu0 0
        %4192 = vmatpush1.bf16.msra.mxu0 0
        %4193 = vmatprep.subr.bf16.mxu0 0
        %4194 = vmatpush1.bf16.msra.mxu0 0
        %4195 = vmatprep.subr.bf16.mxu0 0
        %4196 = vmatpush1.bf16.msra.mxu0 0
        %4197 = vmatprep.subr.bf16.mxu0 0
        %4198 = vmatpush1.bf16.msra.mxu0 0
        %4199 = vmatprep.subr.bf16.mxu0 0
        %4200 = vmatpush1.bf16.msra.mxu0 0
        %4201 = vmatprep.subr.bf16.mxu0 0
        %4202 = vmatpush1.bf16.msra.mxu0 0
        %4203 = vmatprep.subr.bf16.mxu0 0
        %4204 = vmatpush1.bf16.msra.mxu0 0
        %4205 = vmatprep.subr.bf16.mxu0 0
        %4206 = vmatpush1.bf16.msra.mxu0 0
        %4207 = vmatprep.subr.bf16.mxu0 0
        %4208 = vmatpush1.bf16.msra.mxu0 0
        %4209 = vmatprep.subr.bf16.mxu0 0
        %4210 = vmatpush1.bf16.msra.mxu0 0
        %4211 = vmatprep.subr.bf16.mxu0 0
        %4212 = vmatpush1.bf16.msra.mxu0 0
        %4213 = vmatprep.subr.bf16.mxu0 0
        %4214 = vmatpush1.bf16.msra.mxu0 0
        %4215 = vmatprep.mubr.bf16.mxu0 0
        %4216 = vmatmul.mubr.bf16.gmra.mrb[0].mxu0 %v4178
        %v4217 = vpop.f32.mrb[0].mxu0
        %v4218 = vadd.f32 %v4164, %v4217
        %v4219 = vpop.f32.mrb[0].mxu0
        %v4220 = vpop.f32.mrb[0].mxu0
        %v4221 = vadd.f32 %v4164, %v4220
        %v4222 = vpop.f32.mrb[0].mxu0
        %4223 = vmatprep.mubr.bf16.mxu0 0
        %4224 = vmatmul.mubr.bf16.gmra.mrb[0].mxu0 %v4181
        %v4225 = vpop.f32.mrb[0].mxu0
        %v4226 = vadd.f32 %v4164, %v4225
        %v4227 = vpop.f32.mrb[0].mxu0
        %v4228 = vpop.f32.mrb[0].mxu0
        %v4229 = vadd.f32 %v4164, %v4228
        %v4230 = vpop.f32.mrb[0].mxu0
        %4231 = vdwg.mxu0
        %v4232 = vmul.f32 %v4218, 0.5
        %v4233 = vmul.f32 %v4221, 0.5
        %v4234 = vmul.f32 %v4226, 0.5
        %v4235 = vmul.f32 %v4229, 0.5
        %v4236 = vmul.f32 %v4218, 0.044715
        %v4237 = vmul.f32 %v4221, 0.044715
        %v4238 = vmul.f32 %v4226, 0.044715
        %v4239 = vmul.f32 %v4229, 0.044715
        %v4240 = vmul.f32 %v4236, %v4218
        %v4241 = vmul.f32 %v4237, %v4221
        %v4242 = vmul.f32 %v4238, %v4226
        %v4243 = vmul.f32 %v4239, %v4229
        %v4244 = vmul.f32 %v4240, %v4218
        %v4245 = vmul.f32 %v4241, %v4221
        %v4246 = vmul.f32 %v4242, %v4226
        %v4247 = vmul.f32 %v4243, %v4229
        %v4248 = vadd.f32 %v4218, %v4244
        %v4249 = vadd.f32 %v4221, %v4245
        %v4250 = vadd.f32 %v4226, %v4246
        %v4251 = vadd.f32 %v4229, %v4247
        %v4252 = vmul.f32 %v4248, 0.7978846
        %v4253 = vmul.f32 %v4249, 0.7978846
        %v4254 = vmul.f32 %v4250, 0.7978846
        %v4255 = vmul.f32 %v4251, 0.7978846
        %v4256 = vtanh.pop %v4252
        %v4257 = vtanh.pop %v4253
        %v4258 = vtanh.pop %v4254
        %v4259 = vtanh.pop %v4255
        %v4260 = vadd.f32 %v4256, 1.0
        %v4261 = vadd.f32 %v4257, 1.0
        %v4262 = vadd.f32 %v4258, 1.0
        %v4263 = vadd.f32 %v4259, 1.0
        %v4264 = vmul.f32 %v4232, %v4260
        %v4265 = vmul.f32 %v4233, %v4261
        %v4266 = vmul.f32 %v4234, %v4262
        %v4267 = vmul.f32 %v4235, %v4263
        %v4268 = vpack.c.bf16 %v4265, %v4264
        %v4269 = vpack.c.bf16 %v4267, %v4266
        %s4270 = scalar_lea.vmem %s1174, 32
        %v4271 = vld [vmem:[%s4270] sm:$0xf]
        %v4272 = vld [vmem:[%s4270 + $0x4] sm:$0xf]
        %v4273 = vld [vmem:[%s4270 + $0x8] sm:$0xf]
        %v4274 = vld [vmem:[%s4270 + $0xc] sm:$0xf]
        %v4275 = vld [vmem:[%s4270 + $0x10] sm:$0xf]
        %v4276 = vld [vmem:[%s4270 + $0x14] sm:$0xf]
        %v4277 = vld [vmem:[%s4270 + $0x18] sm:$0xf]
        %v4278 = vld [vmem:[%s4270 + $0x1c] sm:$0xf]
        %v4279 = vld [vmem:[%s1178 + $0x1] sm:$0x1]
        %v4280 = vlaneseq
        %v4281 = vshrl.u32 %v4280, 7
        %v4282 = vsub.s32 0, %v4281
        %v4283 = vrot.slane %v4279, %v4282
        %v4292 = vunpack.c.l.b16 %v4271
        %v4293 = vunpack.c.l.b16 %v4272
        %v4294 = vunpack.c.l.b16 %v4273
        %v4295 = vunpack.c.l.b16 %v4274
        %v4296 = vunpack.c.l.b16 %v4275
        %v4297 = vunpack.c.l.b16 %v4276
        %v4298 = vunpack.c.l.b16 %v4277
        %v4299 = vunpack.c.l.b16 %v4278
        %v4300 = vpack.c.b16 %v4293, %v4292
        %v4301 = vpack.c.b16 %v4295, %v4294
        %v4302 = vpack.c.b16 %v4297, %v4296
        %v4303 = vpack.c.b16 %v4299, %v4298
        %v4309 = vsel %vm2721, %v4268, 0
        %v4312 = vsel %vm2721, %v4269, 0
        %4314 = vmatprep.subr.bf16.mxu0 0
        %4315 = vmatpush1.bf16.msra.mxu0 %v4300
        %4316 = vmatprep.subr.bf16.mxu0 0
        %4317 = vmatpush1.bf16.msra.mxu0 %v4301
        %4318 = vmatprep.subr.bf16.mxu0 0
        %4319 = vmatpush1.bf16.msra.mxu0 %v4302
        %4320 = vmatprep.subr.bf16.mxu0 0
        %4321 = vmatpush1.bf16.msra.mxu0 %v4303
        %4322 = vmatprep.subr.bf16.mxu0 0
        %4323 = vmatpush1.bf16.msra.mxu0 0
        %4324 = vmatprep.subr.bf16.mxu0 0
        %4325 = vmatpush1.bf16.msra.mxu0 0
        %4326 = vmatprep.subr.bf16.mxu0 0
        %4327 = vmatpush1.bf16.msra.mxu0 0
        %4328 = vmatprep.subr.bf16.mxu0 0
        %4329 = vmatpush1.bf16.msra.mxu0 0
        %4330 = vmatprep.subr.bf16.mxu0 0
        %4331 = vmatpush1.bf16.msra.mxu0 0
        %4332 = vmatprep.subr.bf16.mxu0 0
        %4333 = vmatpush1.bf16.msra.mxu0 0
        %4334 = vmatprep.subr.bf16.mxu0 0
        %4335 = vmatpush1.bf16.msra.mxu0 0
        %4336 = vmatprep.subr.bf16.mxu0 0
        %4337 = vmatpush1.bf16.msra.mxu0 0
        %4338 = vmatprep.subr.bf16.mxu0 0
        %4339 = vmatpush1.bf16.msra.mxu0 0
        %4340 = vmatprep.subr.bf16.mxu0 0
        %4341 = vmatpush1.bf16.msra.mxu0 0
        %4342 = vmatprep.subr.bf16.mxu0 0
        %4343 = vmatpush1.bf16.msra.mxu0 0
        %4344 = vmatprep.subr.bf16.mxu0 0
        %4345 = vmatpush1.bf16.msra.mxu0 0
        %4346 = vmatprep.mubr.bf16.mxu0 0
        %4347 = vmatmul.mubr.bf16.gmra.mrb[0].mxu0 %v4309
        %v4348 = vpop.f32.mrb[0].mxu0
        %v4349 = vadd.f32 %v4283, %v4348
        %v4350 = vpop.f32.mrb[0].mxu0
        %v4351 = vpop.f32.mrb[0].mxu0
        %v4352 = vadd.f32 %v4283, %v4351
        %v4353 = vpop.f32.mrb[0].mxu0
        %4354 = vmatprep.mubr.bf16.mxu0 0
        %4355 = vmatmul.mubr.bf16.gmra.mrb[0].mxu0 %v4312
        %v4356 = vpop.f32.mrb[0].mxu0
        %v4357 = vadd.f32 %v4283, %v4356
        %v4358 = vpop.f32.mrb[0].mxu0
        %v4359 = vpop.f32.mrb[0].mxu0
        %v4360 = vadd.f32 %v4283, %v4359
        %v4361 = vpop.f32.mrb[0].mxu0
        %4362 = vdwg.mxu0
        %v4363 = vadd.f32 %v4079, %v4349
        %v4364 = vadd.f32 %v4080, %v4352
        %v4365 = vadd.f32 %v4081, %v4357
        %v4366 = vadd.f32 %v4082, %v4360
        %v4367 = vld [vmem:[%s19] sm:$0x1]
        %v4368 = vld [vmem:[%s20] sm:$0x1]
        %v4369 = vsel %vm1198, %v4363, 0.0
        %4370 = vadd.xlane.f32.xlu0 %v4369
        %v4371 = vpop.xlane.xlu0 %4370
        %v4372 = vsel %vm1198, %v4364, 0.0
        %4373 = vadd.xlane.f32.xlu0 %v4372
        %v4374 = vpop.xlane.xlu0 %4373
        %v4375 = vsel %vm1198, %v4365, 0.0
        %4376 = vadd.xlane.f32.xlu0 %v4375
        %v4377 = vpop.xlane.xlu0 %4376
        %v4378 = vsel %vm1198, %v4366, 0.0
        %4379 = vadd.xlane.f32.xlu0 %v4378
        %v4380 = vpop.xlane.xlu0 %4379
        %v4381 = vmul.f32 %v4371, %v1211
        %v4382 = vmul.f32 %v4374, %v1211
        %v4383 = vmul.f32 %v4377, %v1211
        %v4384 = vmul.f32 %v4380, %v1211
        %v4385 = vsub.f32 %v4363, %v4381
        %v4386 = vsub.f32 %v4364, %v4382
        %v4387 = vsub.f32 %v4365, %v4383
        %v4388 = vsub.f32 %v4366, %v4384
        %v4389 = vmul.f32 %v4385, %v4385
        %v4390 = vmul.f32 %v4386, %v4386
        %v4391 = vmul.f32 %v4387, %v4387
        %v4392 = vmul.f32 %v4388, %v4388
        %v4393 = vsel %vm1198, %v4389, 0.0
        %4394 = vadd.xlane.f32.xlu0 %v4393
        %v4395 = vpop.xlane.xlu0 %4394
        %v4396 = vsel %vm1198, %v4390, 0.0
        %4397 = vadd.xlane.f32.xlu0 %v4396
        %v4398 = vpop.xlane.xlu0 %4397
        %v4399 = vsel %vm1198, %v4391, 0.0
        %4400 = vadd.xlane.f32.xlu0 %v4399
        %v4401 = vpop.xlane.xlu0 %4400
        %v4402 = vsel %vm1198, %v4392, 0.0
        %4403 = vadd.xlane.f32.xlu0 %v4402
        %v4404 = vpop.xlane.xlu0 %4403
        %v4405 = vmul.f32 %v4395, %v1211
        %v4406 = vmul.f32 %v4398, %v1211
        %v4407 = vmul.f32 %v4401, %v1211
        %v4408 = vmul.f32 %v4404, %v1211
        %v4409 = vadd.f32 %v4405, 1e-05
        %v4410 = vadd.f32 %v4406, 1e-05
        %v4411 = vadd.f32 %v4407, 1e-05
        %v4412 = vadd.f32 %v4408, 1e-05
        %v4413 = vrsqrt.pop %v4409
        %v4414 = vrsqrt.pop %v4410
        %v4415 = vrsqrt.pop %v4411
        %v4416 = vrsqrt.pop %v4412
        %v4417 = vmul.f32 %v4385, %v4413
        %v4418 = vmul.f32 %v4386, %v4414
        %v4419 = vmul.f32 %v4387, %v4415
        %v4420 = vmul.f32 %v4388, %v4416
        %v4422 = vlaneseq
        %v4423 = vshrl.u32 %v4422, 7
        %v4424 = vsub.s32 0, %v4423
        %v4425 = vrot.slane %v4367, %v4424
        %v4427 = vmul.f32 %v4417, %v4425
        %v4428 = vmul.f32 %v4418, %v4425
        %v4429 = vmul.f32 %v4419, %v4425
        %v4430 = vmul.f32 %v4420, %v4425
        %v4432 = vlaneseq
        %v4433 = vshrl.u32 %v4432, 7
        %v4434 = vsub.s32 0, %v4433
        %v4435 = vrot.slane %v4368, %v4434
        %v4437 = vadd.f32 %v4427, %v4435
        %v4438 = vadd.f32 %v4428, %v4435
        %v4439 = vadd.f32 %v4429, %v4435
        %v4440 = vadd.f32 %v4430, %v4435
        %4441 = vst.msk [vmem:[%s1154] sm:$0xff] %vm1198, %v4437
        %4442 = vst.msk [vmem:[%s1154 + $0x8] sm:$0xff] %vm1198, %v4438
        %4443 = vst.msk [vmem:[%s1154 + $0x10] sm:$0xff] %vm1198, %v4439
        %4444 = vst.msk [vmem:[%s1154 + $0x18] sm:$0xff] %vm1198, %v4440
        %s4445 = sand.u32 %s571, 1
        %s4446 = scalar_lea.sflag [#allocation4], %s4445
        %s4447 = sand.u32 %s571, 1
        %s4448 = smul.addr %s4447, 32
        %s4449 = scalar_lea.vmem [#allocation19], %s4448
        // Predicated region
        $region161: #{tpu_custom_call.1} parent=103 // pred_check
          %p4450 = pneg %p581
        $region162: #{tpu_custom_call.1} parent=103 // pred_check_branch
          %4452 = sbr.rel (%p4450) target = $region164
        $region163: #{tpu_custom_call.1} parent=103 // pred_region
          %s4454 = ssub.s32 512, 512
          %4455 = vsyncadd %s4446, %s4454
          %s4456 = smul.addr %s37, 4
          %s4457 = smul.addr %s4456, 128
          %s4458 = scalar_lea.hbm %s21, %s4457
          %s4459 = sshll.u32 %s4449, 4
          %s4460 = int_to_ptr.vmem [resolvable:$true] %s4459
          %4465 = dma.vmem_to_hbm [thread:$0]  %s4460, 512, %s4458, %s4446, 128, 128, 8
        $region164: #{tpu_custom_call.1} parent=103 // pred_fallthru
          _
      $region104: #{tpu_custom_call.1} parent=5 // pred_fallthru
        _
      %p4466 = scmp.le.s32.totalorder 2, %s32
      // Predicated region
      $region165: #{tpu_custom_call.1} parent=5 // pred_check
        %p4467 = pneg %p4466
      $region166: #{tpu_custom_call.1} parent=5 // pred_check_branch
        %4469 = sbr.rel (%p4467) target = $region168
      $region167: #{tpu_custom_call.1} parent=5 // pred_region
        %s4470 = ssub.s32 %s32, 2
        // Predicated region
        $region169: #{tpu_custom_call.1} parent=167 // pred_check
          %p4471 = pneg %p587
        $region170: #{tpu_custom_call.1} parent=167 // pred_check_branch
          %4473 = sbr.rel (%p4471) target = $region172
        $region171: #{tpu_custom_call.1} parent=167 // pred_region
          %s4474 = sand.u32 %s572, 1
          %s4475 = scalar_lea.sflag [#allocation4], %s4474
          %s4476 = sand.u32 %s572, 1
          %s4477 = smul.addr %s4476, 32
          %s4478 = scalar_lea.vmem [#allocation19], %s4477
          %4479 = dma.done %s4475, 512
        $region172: #{tpu_custom_call.1} parent=167 // pred_fallthru
          _
      $region168: #{tpu_custom_call.1} parent=5 // pred_fallthru
        _
    $region6: #{tpu_custom_call.1} parent=1 // loop_footer
      %s36 = sadd.s32 1, %s32
    $region7: #{tpu_custom_call.1} parent=1 // loop_footer_branch
      %31 = sbr.rel target = $region3
    $region8: #{tpu_custom_call.1} parent=1 // loop_exit
      _
    %4480 = vsyncpa [#allocation3], 1
    %s4481 = scalar_lea.sflag [#allocation3], 1
    %4482 = vsyncpa %s4481, 1
    %4483 = vsyncpa [#allocation6], 1
    %4484 = vsyncpa [#allocation4], 1
    %s4485 = scalar_lea.sflag [#allocation4], 1
    %4486 = vsyncpa %s4485, 1

</llo_original>
